<compile_context>
chip_gen: v5e
topology: v5e:2x2
jax: 0.10.0
libtpu: 0.0.40
codegen_flags: <defaults>
</compile_context>

<pallas_src>
import functools

import jax
import jax.numpy as jnp
from jax.experimental import pallas as pl
from jax.experimental.pallas import tpu as pltpu


TB = 16  # images per grid step (multiple of 16 so bf16 sublane tiles stay aligned)


# ------------------------------ fused Pallas kernel ------------------------- #

def _lenet_fused_kernel(x_ref, m1_ref, b1_ref, m2_ref, b2_ref,
                        wf1_ref, bf1_ref, wf2_ref, bf2_ref, wf3_ref, bf3_ref,
                        out_ref):
    """One grid step = TB images; all intermediates stay in VMEM/vregs.

    x_ref  : [2(p), 2(par), 8(r), TB, 480]  conv1 row-im2col, rows ordered (par,r,b)
    m1_ref : [480, 256]  conv1 Toeplitz weights, cols = (j, pw, cout), 84 used/half
    m2_ref : [640, 256]  conv2 weights (5 kernel rows folded into K), 80 used/half
    wf1_ref: [5, 128, 128] fc1 weights split by pooled row qh (80x120 used)
    out_ref: [TB, 10]
    """
    f32 = jnp.float32
    cdt = m1_ref.dtype
    tb = x_ref.shape[3]

    m1 = m1_ref[...]
    m2 = m2_ref[...]

    # ---- conv1 + bias + ReLU + 2x2 max-pool: one matmul per output-row parity ----
    x0 = x_ref[0].reshape(16 * tb, 480)          # tile-aligned leading-dim collapse
    x1 = x_ref[1].reshape(16 * tb, 480)
    y0 = jnp.dot(x0, m1, preferred_element_type=f32)          # [16*tb, 256]
    y1 = jnp.dot(x1, m1, preferred_element_type=f32)
    v = jnp.maximum(jnp.maximum(y0, y1) + b1_ref[...], 0.0)   # row pool + bias + ReLU
    p1 = jnp.maximum(v[:, 0:128], v[:, 128:256]).astype(cdt)  # col pool -> [16*tb, 128]
    p1r = p1.reshape(2, 8, tb, 128)              # (ph%2, ph//2 [7 used], b, (pw,cin))

    # ---- conv2 im2col: leading-dim slices (free) + lane-concat over kernel rows ----
    s = [p1r[t % 2, t // 2: t // 2 + 5] for t in range(6)]     # each [5, tb, 128]
    x2 = jnp.concatenate(
        [jnp.concatenate([s[dh] for dh in range(5)], axis=-1),      # even output rows
         jnp.concatenate([s[dh + 1] for dh in range(5)], axis=-1)], # odd output rows
        axis=0)                                                     # [10, tb, 640]
    x2 = x2.reshape(10 * tb, 640)

    # ---- conv2 + bias + ReLU + 2x2 max-pool: a single matmul ----
    r2 = jnp.dot(x2, m2, preferred_element_type=f32) + b2_ref[...]  # [10*tb, 256]
    r2 = jnp.maximum(r2, 0.0)
    r2 = jnp.maximum(r2[:, 0:128], r2[:, 128:256])                  # col pool
    r2 = r2.reshape(2, 5, tb, 128)
    h = jnp.maximum(r2[0], r2[1]).astype(cdt)    # row pool -> [5(qh), tb, 128]

    # ---- FC 400 -> 120 -> 84 -> 10 (fc1 = 5 lane-aligned matmuls, no flatten) ----
    a1 = jnp.dot(h[0], wf1_ref[0], preferred_element_type=f32)
    for q in range(1, 5):
        a1 = a1 + jnp.dot(h[q], wf1_ref[q], preferred_element_type=f32)
    h1 = jnp.maximum(a1 + bf1_ref[...], 0.0).astype(cdt)            # [tb, 128]
    h2 = jnp.maximum(jnp.dot(h1, wf2_ref[...], preferred_element_type=f32)
                     + bf2_ref[...], 0.0).astype(cdt)               # [tb, 128]
    out = jnp.dot(h2, wf3_ref[...], preferred_element_type=f32) + bf3_ref[...]
    out_ref[...] = out.astype(out_ref.dtype)


# ------------------------------ one-time weight prep ------------------------ #

def _conv_matmul_weight(w_oihw, in_w, in_lanes, out_lanes):
    """Banded conv weights for activations laid out as [rows=h, lanes=(w, cin)].

    Returns M: [K*in_lanes, 2*out_lanes] with
      row = dh*in_lanes + (w*Cin + cin)                (lanes padded to in_lanes)
      col = j*out_lanes + (pw*Cout + cout),  ow = 2*pw + j   (padded to out_lanes)
    so a 2x2 max-pool over output columns is max of two 128-lane-aligned halves.
    """
    Cout, Cin, K, _ = w_oihw.shape
    out_w = in_w - K + 1
    pw_n = out_w // 2
    w_khwio = jnp.transpose(w_oihw, (2, 3, 1, 0))        # [dh, dw, Cin, Cout]
    dw = jnp.arange(in_w)[:, None] - jnp.arange(out_w)[None, :]     # [in_w, out_w]
    valid = (dw >= 0) & (dw < K)
    dw_c = jnp.clip(dw, 0, K - 1)
    M = w_khwio[:, dw_c]                                 # [K, in_w, out_w, Cin, Cout]
    M = jnp.where(valid[None, :, :, None, None], M, 0.0)
    M = jnp.transpose(M, (0, 1, 3, 2, 4))                # [K, in_w, Cin, out_w, Cout]
    M = M.reshape(K, in_w * Cin, pw_n, 2, Cout)          # ow = 2*pw + j
    M = jnp.transpose(M, (0, 1, 3, 2, 4))                # [K, in_w*Cin, j, pw, Cout]
    M = M.reshape(K, in_w * Cin, 2, pw_n * Cout)
    M = jnp.pad(M, ((0, 0), (0, in_lanes - in_w * Cin),
                    (0, 0), (0, out_lanes - pw_n * Cout)))
    return M.reshape(K * in_lanes, 2 * out_lanes)


def prepare_params(params, compute_dtype=jnp.bfloat16):
    """Toeplitz expansion, 128-lane pool-aligned padding, fc1 split by pooled row,
    and PyTorch's (C,H,W) flatten permutation folded into fc1's rows."""
    cdt = compute_dtype
    f32 = jnp.float32

    def tiled_bias(b, reps):                              # [1, 256], pad lanes zero
        bb = jnp.pad(jnp.tile(b, reps), (0, 128 - reps * b.shape[0]))
        return jnp.tile(bb, 2)[None, :]

    w1 = params["fc1_w"].reshape(16, 5, 5, 120)           # rows were (cout, qh, pw)
    w1 = jnp.transpose(w1, (1, 2, 0, 3)).reshape(5, 80, 120)   # -> (qh, pw*16+cout)
    w1 = jnp.pad(w1, ((0, 0), (0, 48), (0, 8)))           # [5, 128, 128]

    return {
        "m1": _conv_matmul_weight(params["conv1_w"], 32, 96, 128).astype(cdt),
        "b1": tiled_bias(params["conv1_b"], 14).astype(f32),            # [1, 256]
        "m2": _conv_matmul_weight(params["conv2_w"], 14, 128, 128).astype(cdt),
        "b2": tiled_bias(params["conv2_b"], 5).astype(f32),             # [1, 256]
        "wf1": w1.astype(cdt),                                          # [5,128,128]
        "bf1": jnp.pad(params["fc1_b"], (0, 8))[None, :].astype(f32),   # [1, 128]
        "wf2": jnp.pad(params["fc2_w"], ((0, 8), (0, 44))).astype(cdt), # [128, 128]
        "bf2": jnp.pad(params["fc2_b"], (0, 44))[None, :].astype(f32),  # [1, 128]
        "wf3": jnp.pad(params["fc3_w"], ((0, 44), (0, 0))).astype(cdt), # [128, 10]
        "bf3": params["fc3_b"][None, :].astype(f32),                    # [1, 10]
    }


# ------------------------------------ forward -------------------------------- #

def _prep_input(x_nchw, tb, dtype):
    """Row-only im2col for conv1, pool-parity split, batch on the sublane dim.

    Returns [2(p), 2(par), 8(r; 7 used), Bp, 480] where row (p, par, r) is conv1
    output row oh = 4*r + 2*par + p and 480 = concat over dh of input row (oh+dh)
    flattened as (w, cin)."""
    B = x_nchw.shape[0]
    Bp = ((B + tb - 1) // tb) * tb
    x = jnp.transpose(x_nchw, (0, 2, 3, 1)).reshape(B, 32, 96)
    if Bp != B:
        x = jnp.pad(x, ((0, Bp - B), (0, 0), (0, 0)))
    p = jnp.arange(2)[:, None, None, None]
    par = jnp.arange(2)[None, :, None, None]
    r = jnp.arange(7)[None, None, :, None]
    dh = jnp.arange(5)[None, None, None, :]
    ih = p + 2 * par + 4 * r + dh                         # [2, 2, 7, 5]
    xg = x[:, ih, :]                                      # [Bp, 2, 2, 7, 5, 96]
    xg = jnp.pad(xg, ((0, 0), (0, 0), (0, 0), (0, 1), (0, 0), (0, 0)))
    xg = jnp.transpose(xg, (1, 2, 3, 0, 4, 5))            # [2, 2, 8, Bp, 5, 96]
    return xg.reshape(2, 2, 8, Bp, 480).astype(dtype), Bp


def _const_spec(arr):
    n = arr.ndim
    return pl.BlockSpec(arr.shape, lambda i, _n=n: (0,) * _n)


@functools.partial(jax.jit, static_argnames=("tb",))
def lenet_forward(x_nchw, prepped, tb=TB):
    """x_nchw: [B, 3, 32, 32] float32 (PyTorch layout) -> logits [B, 10]."""
    B = x_nchw.shape[0]
    cdt = prepped["m1"].dtype
    xg, Bp = _prep_input(x_nchw, tb, cdt)

    weight_names = ["m1", "b1", "m2", "b2", "wf1", "bf1", "wf2", "bf2", "wf3", "bf3"]
    weights = [prepped[k] for k in weight_names]

    out = pl.pallas_call(
        _lenet_fused_kernel,
        out_shape=jax.ShapeDtypeStruct((Bp, 10), jnp.float32),
        grid=(Bp // tb,),
        in_specs=[pl.BlockSpec((2, 2, 8, tb, 480), lambda i: (0, 0, 0, i, 0))]
                 + [_const_spec(w) for w in weights],
        out_specs=pl.BlockSpec((tb, 10), lambda i: (i, 0)),
        compiler_params=pltpu.CompilerParams(dimension_semantics=("parallel",)),
    )(xg, *weights)
    return out[:B]


# ------------------------------- init / reference ---------------------------- #

def init_params(key):
    # Deterministic PyTorch-like init: U(-1/sqrt(fan_in), 1/sqrt(fan_in)).
    def uniform(k, shape, fan_in):
        bound = 1.0 / jnp.sqrt(float(fan_in))
        return jax.random.uniform(k, shape, jnp.float32, -bound, bound)

    ks = jax.random.split(key, 10)
    return {
        "conv1_w": uniform(ks[0], (6, 3, 5, 5), 3 * 5 * 5),
        "conv1_b": uniform(ks[1], (6,), 3 * 5 * 5),
        "conv2_w": uniform(ks[2], (16, 6, 5, 5), 6 * 5 * 5),
        "conv2_b": uniform(ks[3], (16,), 6 * 5 * 5),
        "fc1_w": uniform(ks[4], (400, 120), 400),
        "fc1_b": uniform(ks[5], (120,), 400),
        "fc2_w": uniform(ks[6], (120, 84), 120),
        "fc2_b": uniform(ks[7], (84,), 120),
        "fc3_w": uniform(ks[8], (84, 10), 84),
        "fc3_b": uniform(ks[9], (10,), 84),
    }


def _reference_forward(x_nchw, p):
    # Pure-JAX reference (mirrors the PyTorch forward) for correctness check.
    def conv(x, w, b):
        y = jax.lax.conv_general_dilated(
            x, w, (1, 1), "VALID", dimension_numbers=("NCHW", "OIHW", "NCHW"))
        return y + b[None, :, None, None]

    def pool(x):
        return jax.lax.reduce_window(x, -jnp.inf, jax.lax.max,
                                     (1, 1, 2, 2), (1, 1, 2, 2), "VALID")

    x = pool(jax.nn.relu(conv(x_nchw, p["conv1_w"], p["conv1_b"])))
    x = pool(jax.nn.relu(conv(x, p["conv2_w"], p["conv2_b"])))
    x = x.reshape(x.shape[0], -1)
    x = jax.nn.relu(x @ p["fc1_w"] + p["fc1_b"])
    x = jax.nn.relu(x @ p["fc2_w"] + p["fc2_b"])
    return x @ p["fc3_w"] + p["fc3_b"]


if __name__ == "__main__":
    key = jax.random.PRNGKey(0)
    k_x, k_p = jax.random.split(key)
    # Smallest shape consistent with the module (view(-1, 16*5*5) forces 32x32 input).
    x = jax.random.normal(k_x, (2, 3, 32, 32), jnp.float32)
    params = init_params(k_p)
    ref = _reference_forward(x, params)

    # Exact float32-operand path: matches the PyTorch module numerics.
    out_f32 = jax.block_until_ready(lenet_forward(x, prepare_params(params, jnp.float32)))
    assert out_f32.shape == (2, 10), out_f32.shape
    assert jnp.allclose(out_f32, ref, atol=1e-4, rtol=1e-4), \
        float(jnp.max(jnp.abs(out_f32 - ref)))

    # Default bf16-operand / f32-accumulation path (native MXU rate on v5e/v6e/v7x).
    out_bf16 = jax.block_until_ready(lenet_forward(x, prepare_params(params)))
    assert out_bf16.shape == (2, 10), out_bf16.shape
    assert jnp.allclose(out_bf16, ref, atol=1e-1, rtol=1e-1), \
        float(jnp.max(jnp.abs(out_bf16 - ref)))

    print("KERNEL_OK")
</pallas_src>

<mosaic_0001>
module attributes {stable_mosaic.version = 11 : i64} {
  func.func @_lenet_fused_kernel(%arg0: i32, %arg1: memref<2x2x8x16x480xf32, #tpu.memory_space<vmem>>, %arg2: memref<480x256xf32, #tpu.memory_space<vmem>>, %arg3: memref<1x256xf32, #tpu.memory_space<vmem>>, %arg4: memref<640x256xf32, #tpu.memory_space<vmem>>, %arg5: memref<1x256xf32, #tpu.memory_space<vmem>>, %arg6: memref<5x128x128xf32, #tpu.memory_space<vmem>>, %arg7: memref<1x128xf32, #tpu.memory_space<vmem>>, %arg8: memref<128x128xf32, #tpu.memory_space<vmem>>, %arg9: memref<1x128xf32, #tpu.memory_space<vmem>>, %arg10: memref<128x10xf32, #tpu.memory_space<vmem>>, %arg11: memref<1x10xf32, #tpu.memory_space<vmem>>, %arg12: memref<16x10xf32, #tpu.memory_space<vmem>>) attributes {dimension_semantics = [#tpu.dimension_semantics<parallel>], iteration_bounds = array<i64: 1>, scalar_prefetch = 0 : i64, scratch_operands = 0 : i64, tpu.core_type = #tpu.core_type<tc>, window_params = [{transform_indices = @transform_0, window_bounds = array<i64: 2, 2, 8, 16, 480>}, {pipeline_mode = #tpu.pipeline_mode<synchronous>, transform_indices = @transform_1, window_bounds = array<i64: 480, 256>}, {pipeline_mode = #tpu.pipeline_mode<synchronous>, transform_indices = @transform_2, window_bounds = array<i64: 1, 256>}, {pipeline_mode = #tpu.pipeline_mode<synchronous>, transform_indices = @transform_3, window_bounds = array<i64: 640, 256>}, {pipeline_mode = #tpu.pipeline_mode<synchronous>, transform_indices = @transform_4, window_bounds = array<i64: 1, 256>}, {pipeline_mode = #tpu.pipeline_mode<synchronous>, transform_indices = @transform_5, window_bounds = array<i64: 5, 128, 128>}, {pipeline_mode = #tpu.pipeline_mode<synchronous>, transform_indices = @transform_6, window_bounds = array<i64: 1, 128>}, {pipeline_mode = #tpu.pipeline_mode<synchronous>, transform_indices = @transform_7, window_bounds = array<i64: 128, 128>}, {pipeline_mode = #tpu.pipeline_mode<synchronous>, transform_indices = @transform_8, window_bounds = array<i64: 1, 128>}, {pipeline_mode = #tpu.pipeline_mode<synchronous>, transform_indices = @transform_9, window_bounds = array<i64: 128, 10>}, {pipeline_mode = #tpu.pipeline_mode<synchronous>, transform_indices = @transform_10, window_bounds = array<i64: 1, 10>}, {transform_indices = @transform_11, window_bounds = array<i64: 16, 10>}]} {
    %c0 = arith.constant 0 : index
    %c0_0 = arith.constant 0 : index
    %0 = vector.load %arg2[%c0, %c0_0] : memref<480x256xf32, #tpu.memory_space<vmem>>, vector<480x256xf32>
    %c0_1 = arith.constant 0 : index
    %c0_2 = arith.constant 0 : index
    %1 = vector.load %arg4[%c0_1, %c0_2] : memref<640x256xf32, #tpu.memory_space<vmem>>, vector<640x256xf32>
    %c0_3 = arith.constant 0 : index
    %c0_4 = arith.constant 0 : index
    %c0_5 = arith.constant 0 : index
    %c0_6 = arith.constant 0 : index
    %c0_7 = arith.constant 0 : index
    %2 = vector.load %arg1[%c0_3, %c0_4, %c0_5, %c0_6, %c0_7] : memref<2x2x8x16x480xf32, #tpu.memory_space<vmem>>, vector<1x2x8x16x480xf32>
    %3 = vector.shape_cast %2 : vector<1x2x8x16x480xf32> to vector<2x8x16x480xf32>
    %4 = vector.shape_cast %3 : vector<2x8x16x480xf32> to vector<256x480xf32>
    %c1 = arith.constant 1 : index
    %c0_8 = arith.constant 0 : index
    %c0_9 = arith.constant 0 : index
    %c0_10 = arith.constant 0 : index
    %c0_11 = arith.constant 0 : index
    %5 = vector.load %arg1[%c1, %c0_8, %c0_9, %c0_10, %c0_11] : memref<2x2x8x16x480xf32, #tpu.memory_space<vmem>>, vector<1x2x8x16x480xf32>
    %6 = vector.shape_cast %5 : vector<1x2x8x16x480xf32> to vector<2x8x16x480xf32>
    %7 = vector.shape_cast %6 : vector<2x8x16x480xf32> to vector<256x480xf32>
    %cst = arith.constant dense<0.000000e+00> : vector<256x256xf32>
    %8 = tpu.matmul %4, %0, %cst {dimension_numbers = #tpu.dot_dimension_numbers<[1], [0], [0], [1], [0, 0, 1, 1], [], []>} : vector<256x480xf32>, vector<480x256xf32>, vector<256x256xf32> -> vector<256x256xf32>
    %cst_12 = arith.constant dense<0.000000e+00> : vector<256x256xf32>
    %9 = tpu.matmul %7, %0, %cst_12 {dimension_numbers = #tpu.dot_dimension_numbers<[1], [0], [0], [1], [0, 0, 1, 1], [], []>} : vector<256x480xf32>, vector<480x256xf32>, vector<256x256xf32> -> vector<256x256xf32>
    %10 = arith.maximumf %8, %9 : vector<256x256xf32>
    %c0_13 = arith.constant 0 : index
    %c0_14 = arith.constant 0 : index
    %11 = vector.load %arg3[%c0_13, %c0_14] : memref<1x256xf32, #tpu.memory_space<vmem>>, vector<1x256xf32>
    %12 = vector.broadcast %11 : vector<1x256xf32> to vector<256x256xf32>
    %13 = arith.addf %10, %12 : vector<256x256xf32>
    %cst_15 = arith.constant 0.000000e+00 : f32
    %14 = vector.broadcast %cst_15 : f32 to vector<256x256xf32>
    %15 = arith.maximumf %13, %14 : vector<256x256xf32>
    %16 = vector.extract_strided_slice %15 {offsets = [0, 0], sizes = [256, 128], strides = [1, 1]} : vector<256x256xf32> to vector<256x128xf32>
    %17 = vector.extract_strided_slice %15 {offsets = [0, 128], sizes = [256, 128], strides = [1, 1]} : vector<256x256xf32> to vector<256x128xf32>
    %18 = arith.maximumf %16, %17 : vector<256x128xf32>
    %19 = vector.shape_cast %18 : vector<256x128xf32> to vector<2x8x16x128xf32>
    %20 = vector.extract_strided_slice %19 {offsets = [0, 0, 0, 0], sizes = [1, 5, 16, 128], strides = [1, 1, 1, 1]} : vector<2x8x16x128xf32> to vector<1x5x16x128xf32>
    %21 = vector.shape_cast %20 : vector<1x5x16x128xf32> to vector<5x16x128xf32>
    %22 = vector.extract_strided_slice %19 {offsets = [1, 0, 0, 0], sizes = [1, 5, 16, 128], strides = [1, 1, 1, 1]} : vector<2x8x16x128xf32> to vector<1x5x16x128xf32>
    %23 = vector.shape_cast %22 : vector<1x5x16x128xf32> to vector<5x16x128xf32>
    %24 = vector.extract_strided_slice %19 {offsets = [0, 1, 0, 0], sizes = [1, 5, 16, 128], strides = [1, 1, 1, 1]} : vector<2x8x16x128xf32> to vector<1x5x16x128xf32>
    %25 = vector.shape_cast %24 : vector<1x5x16x128xf32> to vector<5x16x128xf32>
    %26 = vector.extract_strided_slice %19 {offsets = [1, 1, 0, 0], sizes = [1, 5, 16, 128], strides = [1, 1, 1, 1]} : vector<2x8x16x128xf32> to vector<1x5x16x128xf32>
    %27 = vector.shape_cast %26 : vector<1x5x16x128xf32> to vector<5x16x128xf32>
    %28 = vector.extract_strided_slice %19 {offsets = [0, 2, 0, 0], sizes = [1, 5, 16, 128], strides = [1, 1, 1, 1]} : vector<2x8x16x128xf32> to vector<1x5x16x128xf32>
    %29 = vector.shape_cast %28 : vector<1x5x16x128xf32> to vector<5x16x128xf32>
    %30 = vector.extract_strided_slice %19 {offsets = [1, 2, 0, 0], sizes = [1, 5, 16, 128], strides = [1, 1, 1, 1]} : vector<2x8x16x128xf32> to vector<1x5x16x128xf32>
    %31 = vector.shape_cast %30 : vector<1x5x16x128xf32> to vector<5x16x128xf32>
    %32 = tpu.concatenate %21, %23, %25, %27, %29 in 2 : vector<5x16x128xf32>, vector<5x16x128xf32>, vector<5x16x128xf32>, vector<5x16x128xf32>, vector<5x16x128xf32> -> vector<5x16x640xf32>
    %33 = tpu.concatenate %23, %25, %27, %29, %31 in 2 : vector<5x16x128xf32>, vector<5x16x128xf32>, vector<5x16x128xf32>, vector<5x16x128xf32>, vector<5x16x128xf32> -> vector<5x16x640xf32>
    %34 = tpu.concatenate %32, %33 in 0 : vector<5x16x640xf32>, vector<5x16x640xf32> -> vector<10x16x640xf32>
    %35 = vector.shape_cast %34 : vector<10x16x640xf32> to vector<160x640xf32>
    %cst_16 = arith.constant dense<0.000000e+00> : vector<160x256xf32>
    %36 = tpu.matmul %35, %1, %cst_16 {dimension_numbers = #tpu.dot_dimension_numbers<[1], [0], [0], [1], [0, 0, 1, 1], [], []>} : vector<160x640xf32>, vector<640x256xf32>, vector<160x256xf32> -> vector<160x256xf32>
    %c0_17 = arith.constant 0 : index
    %c0_18 = arith.constant 0 : index
    %37 = vector.load %arg5[%c0_17, %c0_18] : memref<1x256xf32, #tpu.memory_space<vmem>>, vector<1x256xf32>
    %38 = vector.broadcast %37 : vector<1x256xf32> to vector<160x256xf32>
    %39 = arith.addf %36, %38 : vector<160x256xf32>
    %cst_19 = arith.constant 0.000000e+00 : f32
    %40 = vector.broadcast %cst_19 : f32 to vector<160x256xf32>
    %41 = arith.maximumf %39, %40 : vector<160x256xf32>
    %42 = vector.extract_strided_slice %41 {offsets = [0, 0], sizes = [160, 128], strides = [1, 1]} : vector<160x256xf32> to vector<160x128xf32>
    %43 = vector.extract_strided_slice %41 {offsets = [0, 128], sizes = [160, 128], strides = [1, 1]} : vector<160x256xf32> to vector<160x128xf32>
    %44 = arith.maximumf %42, %43 : vector<160x128xf32>
    %45 = vector.shape_cast %44 : vector<160x128xf32> to vector<2x5x16x128xf32>
    %46 = vector.extract_strided_slice %45 {offsets = [0, 0, 0, 0], sizes = [1, 5, 16, 128], strides = [1, 1, 1, 1]} : vector<2x5x16x128xf32> to vector<1x5x16x128xf32>
    %47 = vector.shape_cast %46 : vector<1x5x16x128xf32> to vector<5x16x128xf32>
    %48 = vector.extract_strided_slice %45 {offsets = [1, 0, 0, 0], sizes = [1, 5, 16, 128], strides = [1, 1, 1, 1]} : vector<2x5x16x128xf32> to vector<1x5x16x128xf32>
    %49 = vector.shape_cast %48 : vector<1x5x16x128xf32> to vector<5x16x128xf32>
    %50 = arith.maximumf %47, %49 : vector<5x16x128xf32>
    %51 = vector.extract_strided_slice %50 {offsets = [0, 0, 0], sizes = [1, 16, 128], strides = [1, 1, 1]} : vector<5x16x128xf32> to vector<1x16x128xf32>
    %52 = vector.shape_cast %51 : vector<1x16x128xf32> to vector<16x128xf32>
    %c0_20 = arith.constant 0 : index
    %c0_21 = arith.constant 0 : index
    %c0_22 = arith.constant 0 : index
    %53 = vector.load %arg6[%c0_20, %c0_21, %c0_22] : memref<5x128x128xf32, #tpu.memory_space<vmem>>, vector<1x128x128xf32>
    %54 = vector.shape_cast %53 : vector<1x128x128xf32> to vector<128x128xf32>
    %cst_23 = arith.constant dense<0.000000e+00> : vector<16x128xf32>
    %55 = tpu.matmul %52, %54, %cst_23 {dimension_numbers = #tpu.dot_dimension_numbers<[1], [0], [0], [1], [0, 0, 1, 1], [], []>} : vector<16x128xf32>, vector<128x128xf32>, vector<16x128xf32> -> vector<16x128xf32>
    %56 = vector.extract_strided_slice %50 {offsets = [1, 0, 0], sizes = [1, 16, 128], strides = [1, 1, 1]} : vector<5x16x128xf32> to vector<1x16x128xf32>
    %57 = vector.shape_cast %56 : vector<1x16x128xf32> to vector<16x128xf32>
    %c1_24 = arith.constant 1 : index
    %c0_25 = arith.constant 0 : index
    %c0_26 = arith.constant 0 : index
    %58 = vector.load %arg6[%c1_24, %c0_25, %c0_26] : memref<5x128x128xf32, #tpu.memory_space<vmem>>, vector<1x128x128xf32>
    %59 = vector.shape_cast %58 : vector<1x128x128xf32> to vector<128x128xf32>
    %cst_27 = arith.constant dense<0.000000e+00> : vector<16x128xf32>
    %60 = tpu.matmul %57, %59, %cst_27 {dimension_numbers = #tpu.dot_dimension_numbers<[1], [0], [0], [1], [0, 0, 1, 1], [], []>} : vector<16x128xf32>, vector<128x128xf32>, vector<16x128xf32> -> vector<16x128xf32>
    %61 = arith.addf %55, %60 : vector<16x128xf32>
    %62 = vector.extract_strided_slice %50 {offsets = [2, 0, 0], sizes = [1, 16, 128], strides = [1, 1, 1]} : vector<5x16x128xf32> to vector<1x16x128xf32>
    %63 = vector.shape_cast %62 : vector<1x16x128xf32> to vector<16x128xf32>
    %c2 = arith.constant 2 : index
    %c0_28 = arith.constant 0 : index
    %c0_29 = arith.constant 0 : index
    %64 = vector.load %arg6[%c2, %c0_28, %c0_29] : memref<5x128x128xf32, #tpu.memory_space<vmem>>, vector<1x128x128xf32>
    %65 = vector.shape_cast %64 : vector<1x128x128xf32> to vector<128x128xf32>
    %cst_30 = arith.constant dense<0.000000e+00> : vector<16x128xf32>
    %66 = tpu.matmul %63, %65, %cst_30 {dimension_numbers = #tpu.dot_dimension_numbers<[1], [0], [0], [1], [0, 0, 1, 1], [], []>} : vector<16x128xf32>, vector<128x128xf32>, vector<16x128xf32> -> vector<16x128xf32>
    %67 = arith.addf %61, %66 : vector<16x128xf32>
    %68 = vector.extract_strided_slice %50 {offsets = [3, 0, 0], sizes = [1, 16, 128], strides = [1, 1, 1]} : vector<5x16x128xf32> to vector<1x16x128xf32>
    %69 = vector.shape_cast %68 : vector<1x16x128xf32> to vector<16x128xf32>
    %c3 = arith.constant 3 : index
    %c0_31 = arith.constant 0 : index
    %c0_32 = arith.constant 0 : index
    %70 = vector.load %arg6[%c3, %c0_31, %c0_32] : memref<5x128x128xf32, #tpu.memory_space<vmem>>, vector<1x128x128xf32>
    %71 = vector.shape_cast %70 : vector<1x128x128xf32> to vector<128x128xf32>
    %cst_33 = arith.constant dense<0.000000e+00> : vector<16x128xf32>
    %72 = tpu.matmul %69, %71, %cst_33 {dimension_numbers = #tpu.dot_dimension_numbers<[1], [0], [0], [1], [0, 0, 1, 1], [], []>} : vector<16x128xf32>, vector<128x128xf32>, vector<16x128xf32> -> vector<16x128xf32>
    %73 = arith.addf %67, %72 : vector<16x128xf32>
    %74 = vector.extract_strided_slice %50 {offsets = [4, 0, 0], sizes = [1, 16, 128], strides = [1, 1, 1]} : vector<5x16x128xf32> to vector<1x16x128xf32>
    %75 = vector.shape_cast %74 : vector<1x16x128xf32> to vector<16x128xf32>
    %c4 = arith.constant 4 : index
    %c0_34 = arith.constant 0 : index
    %c0_35 = arith.constant 0 : index
    %76 = vector.load %arg6[%c4, %c0_34, %c0_35] : memref<5x128x128xf32, #tpu.memory_space<vmem>>, vector<1x128x128xf32>
    %77 = vector.shape_cast %76 : vector<1x128x128xf32> to vector<128x128xf32>
    %cst_36 = arith.constant dense<0.000000e+00> : vector<16x128xf32>
    %78 = tpu.matmul %75, %77, %cst_36 {dimension_numbers = #tpu.dot_dimension_numbers<[1], [0], [0], [1], [0, 0, 1, 1], [], []>} : vector<16x128xf32>, vector<128x128xf32>, vector<16x128xf32> -> vector<16x128xf32>
    %79 = arith.addf %73, %78 : vector<16x128xf32>
    %c0_37 = arith.constant 0 : index
    %c0_38 = arith.constant 0 : index
    %80 = vector.load %arg7[%c0_37, %c0_38] : memref<1x128xf32, #tpu.memory_space<vmem>>, vector<1x128xf32>
    %81 = vector.broadcast %80 : vector<1x128xf32> to vector<16x128xf32>
    %82 = arith.addf %79, %81 : vector<16x128xf32>
    %cst_39 = arith.constant 0.000000e+00 : f32
    %83 = vector.broadcast %cst_39 : f32 to vector<16x128xf32>
    %84 = arith.maximumf %82, %83 : vector<16x128xf32>
    %c0_40 = arith.constant 0 : index
    %c0_41 = arith.constant 0 : index
    %85 = vector.load %arg8[%c0_40, %c0_41] : memref<128x128xf32, #tpu.memory_space<vmem>>, vector<128x128xf32>
    %cst_42 = arith.constant dense<0.000000e+00> : vector<16x128xf32>
    %86 = tpu.matmul %84, %85, %cst_42 {dimension_numbers = #tpu.dot_dimension_numbers<[1], [0], [0], [1], [0, 0, 1, 1], [], []>} : vector<16x128xf32>, vector<128x128xf32>, vector<16x128xf32> -> vector<16x128xf32>
    %c0_43 = arith.constant 0 : index
    %c0_44 = arith.constant 0 : index
    %87 = vector.load %arg9[%c0_43, %c0_44] : memref<1x128xf32, #tpu.memory_space<vmem>>, vector<1x128xf32>
    %88 = vector.broadcast %87 : vector<1x128xf32> to vector<16x128xf32>
    %89 = arith.addf %86, %88 : vector<16x128xf32>
    %cst_45 = arith.constant 0.000000e+00 : f32
    %90 = vector.broadcast %cst_45 : f32 to vector<16x128xf32>
    %91 = arith.maximumf %89, %90 : vector<16x128xf32>
    %c0_46 = arith.constant 0 : index
    %c0_47 = arith.constant 0 : index
    %92 = vector.load %arg10[%c0_46, %c0_47] : memref<128x10xf32, #tpu.memory_space<vmem>>, vector<128x10xf32>
    %cst_48 = arith.constant dense<0.000000e+00> : vector<16x10xf32>
    %93 = tpu.matmul %91, %92, %cst_48 {dimension_numbers = #tpu.dot_dimension_numbers<[1], [0], [0], [1], [0, 0, 1, 1], [], []>} : vector<16x128xf32>, vector<128x10xf32>, vector<16x10xf32> -> vector<16x10xf32>
    %c0_49 = arith.constant 0 : index
    %c0_50 = arith.constant 0 : index
    %94 = vector.load %arg11[%c0_49, %c0_50] : memref<1x10xf32, #tpu.memory_space<vmem>>, vector<1x10xf32>
    %95 = vector.broadcast %94 : vector<1x10xf32> to vector<16x10xf32>
    %96 = arith.addf %93, %95 : vector<16x10xf32>
    %c0_51 = arith.constant 0 : index
    %c0_52 = arith.constant 0 : index
    %97 = vector.load %arg12[%c0_51, %c0_52] : memref<16x10xf32, #tpu.memory_space<vmem>>, vector<16x10xf32>
    tpu.vector_store %arg12[%c0_51, %c0_52], %96 {strides = array<i32>} : memref<16x10xf32, #tpu.memory_space<vmem>>, vector<16x10xf32>,
    return
  }
  func.func @transform_0(%arg0: i32) -> (i32, i32, i32, i32, i32) {
    %c0_i32 = arith.constant 0 : i32
    %c0_i32_0 = arith.constant 0 : i32
    %c0_i32_1 = arith.constant 0 : i32
    %c0_i32_2 = arith.constant 0 : i32
    %c0_i32_3 = arith.constant 0 : i32
    return %c0_i32, %c0_i32_0, %c0_i32_1, %arg0, %c0_i32_2 : i32, i32, i32, i32, i32
  }
  func.func @transform_1(%arg0: i32) -> (i32, i32) {
    %c0_i32 = arith.constant 0 : i32
    %c0_i32_0 = arith.constant 0 : i32
    %c0_i32_1 = arith.constant 0 : i32
    return %c0_i32, %c0_i32_0 : i32, i32
  }
  func.func @transform_2(%arg0: i32) -> (i32, i32) {
    %c0_i32 = arith.constant 0 : i32
    %c0_i32_0 = arith.constant 0 : i32
    %c0_i32_1 = arith.constant 0 : i32
    return %c0_i32, %c0_i32_0 : i32, i32
  }
  func.func @transform_3(%arg0: i32) -> (i32, i32) {
    %c0_i32 = arith.constant 0 : i32
    %c0_i32_0 = arith.constant 0 : i32
    %c0_i32_1 = arith.constant 0 : i32
    return %c0_i32, %c0_i32_0 : i32, i32
  }
  func.func @transform_4(%arg0: i32) -> (i32, i32) {
    %c0_i32 = arith.constant 0 : i32
    %c0_i32_0 = arith.constant 0 : i32
    %c0_i32_1 = arith.constant 0 : i32
    return %c0_i32, %c0_i32_0 : i32, i32
  }
  func.func @transform_5(%arg0: i32) -> (i32, i32, i32) {
    %c0_i32 = arith.constant 0 : i32
    %c0_i32_0 = arith.constant 0 : i32
    %c0_i32_1 = arith.constant 0 : i32
    %c0_i32_2 = arith.constant 0 : i32
    return %c0_i32, %c0_i32_0, %c0_i32_1 : i32, i32, i32
  }
  func.func @transform_6(%arg0: i32) -> (i32, i32) {
    %c0_i32 = arith.constant 0 : i32
    %c0_i32_0 = arith.constant 0 : i32
    %c0_i32_1 = arith.constant 0 : i32
    return %c0_i32, %c0_i32_0 : i32, i32
  }
  func.func @transform_7(%arg0: i32) -> (i32, i32) {
    %c0_i32 = arith.constant 0 : i32
    %c0_i32_0 = arith.constant 0 : i32
    %c0_i32_1 = arith.constant 0 : i32
    return %c0_i32, %c0_i32_0 : i32, i32
  }
  func.func @transform_8(%arg0: i32) -> (i32, i32) {
    %c0_i32 = arith.constant 0 : i32
    %c0_i32_0 = arith.constant 0 : i32
    %c0_i32_1 = arith.constant 0 : i32
    return %c0_i32, %c0_i32_0 : i32, i32
  }
  func.func @transform_9(%arg0: i32) -> (i32, i32) {
    %c0_i32 = arith.constant 0 : i32
    %c0_i32_0 = arith.constant 0 : i32
    %c0_i32_1 = arith.constant 0 : i32
    return %c0_i32, %c0_i32_0 : i32, i32
  }
  func.func @transform_10(%arg0: i32) -> (i32, i32) {
    %c0_i32 = arith.constant 0 : i32
    %c0_i32_0 = arith.constant 0 : i32
    %c0_i32_1 = arith.constant 0 : i32
    return %c0_i32, %c0_i32_0 : i32, i32
  }
  func.func @transform_11(%arg0: i32) -> (i32, i32) {
    %c0_i32 = arith.constant 0 : i32
    %c0_i32_0 = arith.constant 0 : i32
    return %arg0, %c0_i32 : i32, i32
  }
}

</mosaic_0001>

<llo_original>
// kernel: lenet_forward.1
$region0: #{lenet_forward.1}
  #allocation0 [shape = 'u32[]', space=smem, size = 0x4, offset = 0x4, fixed_abs, tag = 'smem constant byte address 0x4 - core index']
  #allocation1 [shape = 'u32[72,128]{1,0:T(1,128)}', space=vmem, size = 0x9000, scoped, tag = 'internal scratch']
  %s0 = inlined_call_operand.vmem [shape: f32[2,2,8,16,480], index: 0, kind: input, shape index: {}]
  %s1 = inlined_call_operand.vmem [shape: f32[480,256], index: 1, kind: input, shape index: {}]
  %s2 = inlined_call_operand.vmem [shape: f32[1,256], index: 2, kind: input, shape index: {}]
  %s3 = inlined_call_operand.vmem [shape: f32[640,256], index: 3, kind: input, shape index: {}]
  %s4 = inlined_call_operand.vmem [shape: f32[1,256], index: 4, kind: input, shape index: {}]
  %s5 = inlined_call_operand.vmem [shape: f32[5,128,128], index: 5, kind: input, shape index: {}]
  %s6 = inlined_call_operand.vmem [shape: f32[1,128], index: 6, kind: input, shape index: {}]
  %s7 = inlined_call_operand.vmem [shape: f32[128,128], index: 7, kind: input, shape index: {}]
  %s8 = inlined_call_operand.vmem [shape: f32[1,128], index: 8, kind: input, shape index: {}]
  %s9 = inlined_call_operand.vmem [shape: f32[128,10], index: 9, kind: input, shape index: {}]
  %s10 = inlined_call_operand.vmem [shape: f32[1,10], index: 10, kind: input, shape index: {}]
  %s11 = inlined_call_operand.vmem [shape: f32[16,10], index: 11, kind: output, shape index: {}]
  %s12 = sld [smem:[#allocation0]]
  $region54: #{lenet_forward.1} parent=0
    _
  %s14 = ssub.s32 1, %s12
  %s15 = scalar_select 0, %s14, %s12
  // Predicated region
  $region2: #{lenet_forward.1} parent=0 // pred_check
    _
  $region3: #{lenet_forward.1} parent=0 // pred_check_branch
    %17 = sbr.rel (0) target = $region5
  $region4: #{lenet_forward.1} parent=0 // pred_region
    _
  $region5: #{lenet_forward.1} parent=0 // pred_fallthru
    _
  // Predicated region
  $region6: #{lenet_forward.1} parent=0 // pred_check
    _
  $region7: #{lenet_forward.1} parent=0 // pred_check_branch
    %19 = sbr.rel (0) target = $region9
  $region8: #{lenet_forward.1} parent=0 // pred_region
    _
  $region9: #{lenet_forward.1} parent=0 // pred_fallthru
    _
  // Predicated region
  $region10: #{lenet_forward.1} parent=0 // pred_check
    _
  $region11: #{lenet_forward.1} parent=0 // pred_check_branch
    %21 = sbr.rel (0) target = $region13
  $region12: #{lenet_forward.1} parent=0 // pred_region
    _
  $region13: #{lenet_forward.1} parent=0 // pred_fallthru
    _
  // Predicated region
  $region14: #{lenet_forward.1} parent=0 // pred_check
    _
  $region15: #{lenet_forward.1} parent=0 // pred_check_branch
    %23 = sbr.rel (0) target = $region17
  $region16: #{lenet_forward.1} parent=0 // pred_region
    _
  $region17: #{lenet_forward.1} parent=0 // pred_fallthru
    _
  // Predicated region
  $region18: #{lenet_forward.1} parent=0 // pred_check
    _
  $region19: #{lenet_forward.1} parent=0 // pred_check_branch
    %25 = sbr.rel (0) target = $region21
  $region20: #{lenet_forward.1} parent=0 // pred_region
    _
  $region21: #{lenet_forward.1} parent=0 // pred_fallthru
    _
  // Predicated region
  $region22: #{lenet_forward.1} parent=0 // pred_check
    _
  $region23: #{lenet_forward.1} parent=0 // pred_check_branch
    %27 = sbr.rel (0) target = $region25
  $region24: #{lenet_forward.1} parent=0 // pred_region
    _
  $region25: #{lenet_forward.1} parent=0 // pred_fallthru
    _
  // Predicated region
  $region26: #{lenet_forward.1} parent=0 // pred_check
    _
  $region27: #{lenet_forward.1} parent=0 // pred_check_branch
    %29 = sbr.rel (0) target = $region29
  $region28: #{lenet_forward.1} parent=0 // pred_region
    _
  $region29: #{lenet_forward.1} parent=0 // pred_fallthru
    _
  // Predicated region
  $region30: #{lenet_forward.1} parent=0 // pred_check
    _
  $region31: #{lenet_forward.1} parent=0 // pred_check_branch
    %31 = sbr.rel (0) target = $region33
  $region32: #{lenet_forward.1} parent=0 // pred_region
    _
  $region33: #{lenet_forward.1} parent=0 // pred_fallthru
    _
  // Predicated region
  $region34: #{lenet_forward.1} parent=0 // pred_check
    _
  $region35: #{lenet_forward.1} parent=0 // pred_check_branch
    %33 = sbr.rel (0) target = $region37
  $region36: #{lenet_forward.1} parent=0 // pred_region
    _
  $region37: #{lenet_forward.1} parent=0 // pred_fallthru
    _
  // Predicated region
  $region38: #{lenet_forward.1} parent=0 // pred_check
    _
  $region39: #{lenet_forward.1} parent=0 // pred_check_branch
    %35 = sbr.rel (0) target = $region41
  $region40: #{lenet_forward.1} parent=0 // pred_region
    _
  $region41: #{lenet_forward.1} parent=0 // pred_fallthru
    _
  // Predicated region
  $region42: #{lenet_forward.1} parent=0 // pred_check
    _
  $region43: #{lenet_forward.1} parent=0 // pred_check_branch
    %37 = sbr.rel (0) target = $region45
  $region44: #{lenet_forward.1} parent=0 // pred_region
    _
  $region45: #{lenet_forward.1} parent=0 // pred_fallthru
    _
  %v38 = vld [vmem:[%s1] sm:$0xff]
  %v39 = vld [vmem:[%s1 + $0x8] sm:$0xff]
  %v40 = vld [vmem:[%s1 + $0x10] sm:$0xff]
  %v41 = vld [vmem:[%s1 + $0x18] sm:$0xff]
  %v42 = vld [vmem:[%s1 + $0x20] sm:$0xff]
  %v43 = vld [vmem:[%s1 + $0x28] sm:$0xff]
  %v44 = vld [vmem:[%s1 + $0x30] sm:$0xff]
  %v45 = vld [vmem:[%s1 + $0x38] sm:$0xff]
  %v46 = vld [vmem:[%s1 + $0x40] sm:$0xff]
  %v47 = vld [vmem:[%s1 + $0x48] sm:$0xff]
  %v48 = vld [vmem:[%s1 + $0x50] sm:$0xff]
  %v49 = vld [vmem:[%s1 + $0x58] sm:$0xff]
  %v50 = vld [vmem:[%s1 + $0x60] sm:$0xff]
  %v51 = vld [vmem:[%s1 + $0x68] sm:$0xff]
  %v52 = vld [vmem:[%s1 + $0x70] sm:$0xff]
  %v53 = vld [vmem:[%s1 + $0x78] sm:$0xff]
  %v54 = vld [vmem:[%s1 + $0x80] sm:$0xff]
  %v55 = vld [vmem:[%s1 + $0x88] sm:$0xff]
  %v56 = vld [vmem:[%s1 + $0x90] sm:$0xff]
  %v57 = vld [vmem:[%s1 + $0x98] sm:$0xff]
  %v58 = vld [vmem:[%s1 + $0xa0] sm:$0xff]
  %v59 = vld [vmem:[%s1 + $0xa8] sm:$0xff]
  %v60 = vld [vmem:[%s1 + $0xb0] sm:$0xff]
  %v61 = vld [vmem:[%s1 + $0xb8] sm:$0xff]
  %v62 = vld [vmem:[%s1 + $0xc0] sm:$0xff]
  %v63 = vld [vmem:[%s1 + $0xc8] sm:$0xff]
  %v64 = vld [vmem:[%s1 + $0xd0] sm:$0xff]
  %v65 = vld [vmem:[%s1 + $0xd8] sm:$0xff]
  %v66 = vld [vmem:[%s1 + $0xe0] sm:$0xff]
  %v67 = vld [vmem:[%s1 + $0xe8] sm:$0xff]
  %v68 = vld [vmem:[%s1 + $0xf0] sm:$0xff]
  %v69 = vld [vmem:[%s1 + $0xf8] sm:$0xff]
  %v70 = vld [vmem:[%s1 + $0x100] sm:$0xff]
  %v71 = vld [vmem:[%s1 + $0x108] sm:$0xff]
  %v72 = vld [vmem:[%s1 + $0x110] sm:$0xff]
  %v73 = vld [vmem:[%s1 + $0x118] sm:$0xff]
  %v74 = vld [vmem:[%s1 + $0x120] sm:$0xff]
  %v75 = vld [vmem:[%s1 + $0x128] sm:$0xff]
  %v76 = vld [vmem:[%s1 + $0x130] sm:$0xff]
  %v77 = vld [vmem:[%s1 + $0x138] sm:$0xff]
  %v78 = vld [vmem:[%s1 + $0x140] sm:$0xff]
  %v79 = vld [vmem:[%s1 + $0x148] sm:$0xff]
  %v80 = vld [vmem:[%s1 + $0x150] sm:$0xff]
  %v81 = vld [vmem:[%s1 + $0x158] sm:$0xff]
  %v82 = vld [vmem:[%s1 + $0x160] sm:$0xff]
  %v83 = vld [vmem:[%s1 + $0x168] sm:$0xff]
  %v84 = vld [vmem:[%s1 + $0x170] sm:$0xff]
  %v85 = vld [vmem:[%s1 + $0x178] sm:$0xff]
  %v86 = vld [vmem:[%s1 + $0x180] sm:$0xff]
  %v87 = vld [vmem:[%s1 + $0x188] sm:$0xff]
  %v88 = vld [vmem:[%s1 + $0x190] sm:$0xff]
  %v89 = vld [vmem:[%s1 + $0x198] sm:$0xff]
  %v90 = vld [vmem:[%s1 + $0x1a0] sm:$0xff]
  %v91 = vld [vmem:[%s1 + $0x1a8] sm:$0xff]
  %v92 = vld [vmem:[%s1 + $0x1b0] sm:$0xff]
  %v93 = vld [vmem:[%s1 + $0x1b8] sm:$0xff]
  %v94 = vld [vmem:[%s1 + $0x1c0] sm:$0xff]
  %v95 = vld [vmem:[%s1 + $0x1c8] sm:$0xff]
  %v96 = vld [vmem:[%s1 + $0x1d0] sm:$0xff]
  %v97 = vld [vmem:[%s1 + $0x1d8] sm:$0xff]
  %v98 = vld [vmem:[%s1 + $0x1e0] sm:$0xff]
  %v99 = vld [vmem:[%s1 + $0x1e8] sm:$0xff]
  %v100 = vld [vmem:[%s1 + $0x1f0] sm:$0xff]
  %v101 = vld [vmem:[%s1 + $0x1f8] sm:$0xff]
  %v102 = vld [vmem:[%s1 + $0x200] sm:$0xff]
  %v103 = vld [vmem:[%s1 + $0x208] sm:$0xff]
  %v104 = vld [vmem:[%s1 + $0x210] sm:$0xff]
  %v105 = vld [vmem:[%s1 + $0x218] sm:$0xff]
  %v106 = vld [vmem:[%s1 + $0x220] sm:$0xff]
  %v107 = vld [vmem:[%s1 + $0x228] sm:$0xff]
  %v108 = vld [vmem:[%s1 + $0x230] sm:$0xff]
  %v109 = vld [vmem:[%s1 + $0x238] sm:$0xff]
  %v110 = vld [vmem:[%s1 + $0x240] sm:$0xff]
  %v111 = vld [vmem:[%s1 + $0x248] sm:$0xff]
  %v112 = vld [vmem:[%s1 + $0x250] sm:$0xff]
  %v113 = vld [vmem:[%s1 + $0x258] sm:$0xff]
  %v114 = vld [vmem:[%s1 + $0x260] sm:$0xff]
  %v115 = vld [vmem:[%s1 + $0x268] sm:$0xff]
  %v116 = vld [vmem:[%s1 + $0x270] sm:$0xff]
  %v117 = vld [vmem:[%s1 + $0x278] sm:$0xff]
  %v118 = vld [vmem:[%s1 + $0x280] sm:$0xff]
  %v119 = vld [vmem:[%s1 + $0x288] sm:$0xff]
  %v120 = vld [vmem:[%s1 + $0x290] sm:$0xff]
  %v121 = vld [vmem:[%s1 + $0x298] sm:$0xff]
  %v122 = vld [vmem:[%s1 + $0x2a0] sm:$0xff]
  %v123 = vld [vmem:[%s1 + $0x2a8] sm:$0xff]
  %v124 = vld [vmem:[%s1 + $0x2b0] sm:$0xff]
  %v125 = vld [vmem:[%s1 + $0x2b8] sm:$0xff]
  %v126 = vld [vmem:[%s1 + $0x2c0] sm:$0xff]
  %v127 = vld [vmem:[%s1 + $0x2c8] sm:$0xff]
  %v128 = vld [vmem:[%s1 + $0x2d0] sm:$0xff]
  %v129 = vld [vmem:[%s1 + $0x2d8] sm:$0xff]
  %v130 = vld [vmem:[%s1 + $0x2e0] sm:$0xff]
  %v131 = vld [vmem:[%s1 + $0x2e8] sm:$0xff]
  %v132 = vld [vmem:[%s1 + $0x2f0] sm:$0xff]
  %v133 = vld [vmem:[%s1 + $0x2f8] sm:$0xff]
  %v134 = vld [vmem:[%s1 + $0x300] sm:$0xff]
  %v135 = vld [vmem:[%s1 + $0x308] sm:$0xff]
  %v136 = vld [vmem:[%s1 + $0x310] sm:$0xff]
  %v137 = vld [vmem:[%s1 + $0x318] sm:$0xff]
  %v138 = vld [vmem:[%s1 + $0x320] sm:$0xff]
  %v139 = vld [vmem:[%s1 + $0x328] sm:$0xff]
  %v140 = vld [vmem:[%s1 + $0x330] sm:$0xff]
  %v141 = vld [vmem:[%s1 + $0x338] sm:$0xff]
  %v142 = vld [vmem:[%s1 + $0x340] sm:$0xff]
  %v143 = vld [vmem:[%s1 + $0x348] sm:$0xff]
  %v144 = vld [vmem:[%s1 + $0x350] sm:$0xff]
  %v145 = vld [vmem:[%s1 + $0x358] sm:$0xff]
  %v146 = vld [vmem:[%s1 + $0x360] sm:$0xff]
  %v147 = vld [vmem:[%s1 + $0x368] sm:$0xff]
  %v148 = vld [vmem:[%s1 + $0x370] sm:$0xff]
  %v149 = vld [vmem:[%s1 + $0x378] sm:$0xff]
  %v150 = vld [vmem:[%s1 + $0x380] sm:$0xff]
  %v151 = vld [vmem:[%s1 + $0x388] sm:$0xff]
  %v152 = vld [vmem:[%s1 + $0x390] sm:$0xff]
  %v153 = vld [vmem:[%s1 + $0x398] sm:$0xff]
  %v154 = vld [vmem:[%s1 + $0x3a0] sm:$0xff]
  %v155 = vld [vmem:[%s1 + $0x3a8] sm:$0xff]
  %v156 = vld [vmem:[%s1 + $0x3b0] sm:$0xff]
  %v157 = vld [vmem:[%s1 + $0x3b8] sm:$0xff]
  %v158 = vld [vmem:[%s3] sm:$0xff]
  %v159 = vld [vmem:[%s3 + $0x8] sm:$0xff]
  %v160 = vld [vmem:[%s3 + $0x10] sm:$0xff]
  %v161 = vld [vmem:[%s3 + $0x18] sm:$0xff]
  %v162 = vld [vmem:[%s3 + $0x20] sm:$0xff]
  %v163 = vld [vmem:[%s3 + $0x28] sm:$0xff]
  %v164 = vld [vmem:[%s3 + $0x30] sm:$0xff]
  %v165 = vld [vmem:[%s3 + $0x38] sm:$0xff]
  %v166 = vld [vmem:[%s3 + $0x40] sm:$0xff]
  %v167 = vld [vmem:[%s3 + $0x48] sm:$0xff]
  %v168 = vld [vmem:[%s3 + $0x50] sm:$0xff]
  %v169 = vld [vmem:[%s3 + $0x58] sm:$0xff]
  %v170 = vld [vmem:[%s3 + $0x60] sm:$0xff]
  %v171 = vld [vmem:[%s3 + $0x68] sm:$0xff]
  %v172 = vld [vmem:[%s3 + $0x70] sm:$0xff]
  %v173 = vld [vmem:[%s3 + $0x78] sm:$0xff]
  %v174 = vld [vmem:[%s3 + $0x80] sm:$0xff]
  %v175 = vld [vmem:[%s3 + $0x88] sm:$0xff]
  %v176 = vld [vmem:[%s3 + $0x90] sm:$0xff]
  %v177 = vld [vmem:[%s3 + $0x98] sm:$0xff]
  %v178 = vld [vmem:[%s3 + $0xa0] sm:$0xff]
  %v179 = vld [vmem:[%s3 + $0xa8] sm:$0xff]
  %v180 = vld [vmem:[%s3 + $0xb0] sm:$0xff]
  %v181 = vld [vmem:[%s3 + $0xb8] sm:$0xff]
  %v182 = vld [vmem:[%s3 + $0xc0] sm:$0xff]
  %v183 = vld [vmem:[%s3 + $0xc8] sm:$0xff]
  %v184 = vld [vmem:[%s3 + $0xd0] sm:$0xff]
  %v185 = vld [vmem:[%s3 + $0xd8] sm:$0xff]
  %v186 = vld [vmem:[%s3 + $0xe0] sm:$0xff]
  %v187 = vld [vmem:[%s3 + $0xe8] sm:$0xff]
  %v188 = vld [vmem:[%s3 + $0xf0] sm:$0xff]
  %v189 = vld [vmem:[%s3 + $0xf8] sm:$0xff]
  %v190 = vld [vmem:[%s3 + $0x100] sm:$0xff]
  %v191 = vld [vmem:[%s3 + $0x108] sm:$0xff]
  %v192 = vld [vmem:[%s3 + $0x110] sm:$0xff]
  %v193 = vld [vmem:[%s3 + $0x118] sm:$0xff]
  %v194 = vld [vmem:[%s3 + $0x120] sm:$0xff]
  %v195 = vld [vmem:[%s3 + $0x128] sm:$0xff]
  %v196 = vld [vmem:[%s3 + $0x130] sm:$0xff]
  %v197 = vld [vmem:[%s3 + $0x138] sm:$0xff]
  %v198 = vld [vmem:[%s3 + $0x140] sm:$0xff]
  %v199 = vld [vmem:[%s3 + $0x148] sm:$0xff]
  %v200 = vld [vmem:[%s3 + $0x150] sm:$0xff]
  %v201 = vld [vmem:[%s3 + $0x158] sm:$0xff]
  %v202 = vld [vmem:[%s3 + $0x160] sm:$0xff]
  %v203 = vld [vmem:[%s3 + $0x168] sm:$0xff]
  %v204 = vld [vmem:[%s3 + $0x170] sm:$0xff]
  %v205 = vld [vmem:[%s3 + $0x178] sm:$0xff]
  %v206 = vld [vmem:[%s3 + $0x180] sm:$0xff]
  %v207 = vld [vmem:[%s3 + $0x188] sm:$0xff]
  %v208 = vld [vmem:[%s3 + $0x190] sm:$0xff]
  %v209 = vld [vmem:[%s3 + $0x198] sm:$0xff]
  %v210 = vld [vmem:[%s3 + $0x1a0] sm:$0xff]
  %v211 = vld [vmem:[%s3 + $0x1a8] sm:$0xff]
  %v212 = vld [vmem:[%s3 + $0x1b0] sm:$0xff]
  %v213 = vld [vmem:[%s3 + $0x1b8] sm:$0xff]
  %v214 = vld [vmem:[%s3 + $0x1c0] sm:$0xff]
  %v215 = vld [vmem:[%s3 + $0x1c8] sm:$0xff]
  %v216 = vld [vmem:[%s3 + $0x1d0] sm:$0xff]
  %v217 = vld [vmem:[%s3 + $0x1d8] sm:$0xff]
  %v218 = vld [vmem:[%s3 + $0x1e0] sm:$0xff]
  %v219 = vld [vmem:[%s3 + $0x1e8] sm:$0xff]
  %v220 = vld [vmem:[%s3 + $0x1f0] sm:$0xff]
  %v221 = vld [vmem:[%s3 + $0x1f8] sm:$0xff]
  %v222 = vld [vmem:[%s3 + $0x200] sm:$0xff]
  %v223 = vld [vmem:[%s3 + $0x208] sm:$0xff]
  %v224 = vld [vmem:[%s3 + $0x210] sm:$0xff]
  %v225 = vld [vmem:[%s3 + $0x218] sm:$0xff]
  %v226 = vld [vmem:[%s3 + $0x220] sm:$0xff]
  %v227 = vld [vmem:[%s3 + $0x228] sm:$0xff]
  %v228 = vld [vmem:[%s3 + $0x230] sm:$0xff]
  %v229 = vld [vmem:[%s3 + $0x238] sm:$0xff]
  %v230 = vld [vmem:[%s3 + $0x240] sm:$0xff]
  %v231 = vld [vmem:[%s3 + $0x248] sm:$0xff]
  %v232 = vld [vmem:[%s3 + $0x250] sm:$0xff]
  %v233 = vld [vmem:[%s3 + $0x258] sm:$0xff]
  %v234 = vld [vmem:[%s3 + $0x260] sm:$0xff]
  %v235 = vld [vmem:[%s3 + $0x268] sm:$0xff]
  %v236 = vld [vmem:[%s3 + $0x270] sm:$0xff]
  %v237 = vld [vmem:[%s3 + $0x278] sm:$0xff]
  %v238 = vld [vmem:[%s3 + $0x280] sm:$0xff]
  %v239 = vld [vmem:[%s3 + $0x288] sm:$0xff]
  %v240 = vld [vmem:[%s3 + $0x290] sm:$0xff]
  %v241 = vld [vmem:[%s3 + $0x298] sm:$0xff]
  %v242 = vld [vmem:[%s3 + $0x2a0] sm:$0xff]
  %v243 = vld [vmem:[%s3 + $0x2a8] sm:$0xff]
  %v244 = vld [vmem:[%s3 + $0x2b0] sm:$0xff]
  %v245 = vld [vmem:[%s3 + $0x2b8] sm:$0xff]
  %v246 = vld [vmem:[%s3 + $0x2c0] sm:$0xff]
  %v247 = vld [vmem:[%s3 + $0x2c8] sm:$0xff]
  %v248 = vld [vmem:[%s3 + $0x2d0] sm:$0xff]
  %v249 = vld [vmem:[%s3 + $0x2d8] sm:$0xff]
  %v250 = vld [vmem:[%s3 + $0x2e0] sm:$0xff]
  %v251 = vld [vmem:[%s3 + $0x2e8] sm:$0xff]
  %v252 = vld [vmem:[%s3 + $0x2f0] sm:$0xff]
  %v253 = vld [vmem:[%s3 + $0x2f8] sm:$0xff]
  %v254 = vld [vmem:[%s3 + $0x300] sm:$0xff]
  %v255 = vld [vmem:[%s3 + $0x308] sm:$0xff]
  %v256 = vld [vmem:[%s3 + $0x310] sm:$0xff]
  %v257 = vld [vmem:[%s3 + $0x318] sm:$0xff]
  %v258 = vld [vmem:[%s3 + $0x320] sm:$0xff]
  %v259 = vld [vmem:[%s3 + $0x328] sm:$0xff]
  %v260 = vld [vmem:[%s3 + $0x330] sm:$0xff]
  %v261 = vld [vmem:[%s3 + $0x338] sm:$0xff]
  %v262 = vld [vmem:[%s3 + $0x340] sm:$0xff]
  %v263 = vld [vmem:[%s3 + $0x348] sm:$0xff]
  %v264 = vld [vmem:[%s3 + $0x350] sm:$0xff]
  %v265 = vld [vmem:[%s3 + $0x358] sm:$0xff]
  %v266 = vld [vmem:[%s3 + $0x360] sm:$0xff]
  %v267 = vld [vmem:[%s3 + $0x368] sm:$0xff]
  %v268 = vld [vmem:[%s3 + $0x370] sm:$0xff]
  %v269 = vld [vmem:[%s3 + $0x378] sm:$0xff]
  %v270 = vld [vmem:[%s3 + $0x380] sm:$0xff]
  %v271 = vld [vmem:[%s3 + $0x388] sm:$0xff]
  %v272 = vld [vmem:[%s3 + $0x390] sm:$0xff]
  %v273 = vld [vmem:[%s3 + $0x398] sm:$0xff]
  %v274 = vld [vmem:[%s3 + $0x3a0] sm:$0xff]
  %v275 = vld [vmem:[%s3 + $0x3a8] sm:$0xff]
  %v276 = vld [vmem:[%s3 + $0x3b0] sm:$0xff]
  %v277 = vld [vmem:[%s3 + $0x3b8] sm:$0xff]
  %v278 = vld [vmem:[%s3 + $0x3c0] sm:$0xff]
  %v279 = vld [vmem:[%s3 + $0x3c8] sm:$0xff]
  %v280 = vld [vmem:[%s3 + $0x3d0] sm:$0xff]
  %v281 = vld [vmem:[%s3 + $0x3d8] sm:$0xff]
  %v282 = vld [vmem:[%s3 + $0x3e0] sm:$0xff]
  %v283 = vld [vmem:[%s3 + $0x3e8] sm:$0xff]
  %v284 = vld [vmem:[%s3 + $0x3f0] sm:$0xff]
  %v285 = vld [vmem:[%s3 + $0x3f8] sm:$0xff]
  %v286 = vld [vmem:[%s3 + $0x400] sm:$0xff]
  %v287 = vld [vmem:[%s3 + $0x408] sm:$0xff]
  %v288 = vld [vmem:[%s3 + $0x410] sm:$0xff]
  %v289 = vld [vmem:[%s3 + $0x418] sm:$0xff]
  %v290 = vld [vmem:[%s3 + $0x420] sm:$0xff]
  %v291 = vld [vmem:[%s3 + $0x428] sm:$0xff]
  %v292 = vld [vmem:[%s3 + $0x430] sm:$0xff]
  %v293 = vld [vmem:[%s3 + $0x438] sm:$0xff]
  %v294 = vld [vmem:[%s3 + $0x440] sm:$0xff]
  %v295 = vld [vmem:[%s3 + $0x448] sm:$0xff]
  %v296 = vld [vmem:[%s3 + $0x450] sm:$0xff]
  %v297 = vld [vmem:[%s3 + $0x458] sm:$0xff]
  %v298 = vld [vmem:[%s3 + $0x460] sm:$0xff]
  %v299 = vld [vmem:[%s3 + $0x468] sm:$0xff]
  %v300 = vld [vmem:[%s3 + $0x470] sm:$0xff]
  %v301 = vld [vmem:[%s3 + $0x478] sm:$0xff]
  %v302 = vld [vmem:[%s3 + $0x480] sm:$0xff]
  %v303 = vld [vmem:[%s3 + $0x488] sm:$0xff]
  %v304 = vld [vmem:[%s3 + $0x490] sm:$0xff]
  %v305 = vld [vmem:[%s3 + $0x498] sm:$0xff]
  %v306 = vld [vmem:[%s3 + $0x4a0] sm:$0xff]
  %v307 = vld [vmem:[%s3 + $0x4a8] sm:$0xff]
  %v308 = vld [vmem:[%s3 + $0x4b0] sm:$0xff]
  %v309 = vld [vmem:[%s3 + $0x4b8] sm:$0xff]
  %v310 = vld [vmem:[%s3 + $0x4c0] sm:$0xff]
  %v311 = vld [vmem:[%s3 + $0x4c8] sm:$0xff]
  %v312 = vld [vmem:[%s3 + $0x4d0] sm:$0xff]
  %v313 = vld [vmem:[%s3 + $0x4d8] sm:$0xff]
  %v314 = vld [vmem:[%s3 + $0x4e0] sm:$0xff]
  %v315 = vld [vmem:[%s3 + $0x4e8] sm:$0xff]
  %v316 = vld [vmem:[%s3 + $0x4f0] sm:$0xff]
  %v317 = vld [vmem:[%s3 + $0x4f8] sm:$0xff]
  %v318 = vld [vmem:[%s0] sm:$0xff]
  %v319 = vld [vmem:[%s0 + $0x8] sm:$0xff]
  %v320 = vld [vmem:[%s0 + $0x10] sm:$0xff]
  %v321 = vld [vmem:[%s0 + $0x18] sm:$0xff]
  %v322 = vld [vmem:[%s0 + $0x20] sm:$0xff]
  %v323 = vld [vmem:[%s0 + $0x28] sm:$0xff]
  %v324 = vld [vmem:[%s0 + $0x30] sm:$0xff]
  %v325 = vld [vmem:[%s0 + $0x38] sm:$0xff]
  %v326 = vld [vmem:[%s0 + $0x40] sm:$0xff]
  %v327 = vld [vmem:[%s0 + $0x48] sm:$0xff]
  %v328 = vld [vmem:[%s0 + $0x50] sm:$0xff]
  %v329 = vld [vmem:[%s0 + $0x58] sm:$0xff]
  %v330 = vld [vmem:[%s0 + $0x60] sm:$0xff]
  %v331 = vld [vmem:[%s0 + $0x68] sm:$0xff]
  %v332 = vld [vmem:[%s0 + $0x70] sm:$0xff]
  %v333 = vld [vmem:[%s0 + $0x78] sm:$0xff]
  %v334 = vld [vmem:[%s0 + $0x80] sm:$0xff]
  %v335 = vld [vmem:[%s0 + $0x88] sm:$0xff]
  %v336 = vld [vmem:[%s0 + $0x90] sm:$0xff]
  %v337 = vld [vmem:[%s0 + $0x98] sm:$0xff]
  %v338 = vld [vmem:[%s0 + $0xa0] sm:$0xff]
  %v339 = vld [vmem:[%s0 + $0xa8] sm:$0xff]
  %v340 = vld [vmem:[%s0 + $0xb0] sm:$0xff]
  %v341 = vld [vmem:[%s0 + $0xb8] sm:$0xff]
  %v342 = vld [vmem:[%s0 + $0xc0] sm:$0xff]
  %v343 = vld [vmem:[%s0 + $0xc8] sm:$0xff]
  %v344 = vld [vmem:[%s0 + $0xd0] sm:$0xff]
  %v345 = vld [vmem:[%s0 + $0xd8] sm:$0xff]
  %v346 = vld [vmem:[%s0 + $0xe0] sm:$0xff]
  %v347 = vld [vmem:[%s0 + $0xe8] sm:$0xff]
  %v348 = vld [vmem:[%s0 + $0xf0] sm:$0xff]
  %v349 = vld [vmem:[%s0 + $0xf8] sm:$0xff]
  %v350 = vld [vmem:[%s0 + $0x100] sm:$0xff]
  %v351 = vld [vmem:[%s0 + $0x108] sm:$0xff]
  %v352 = vld [vmem:[%s0 + $0x110] sm:$0xff]
  %v353 = vld [vmem:[%s0 + $0x118] sm:$0xff]
  %v354 = vld [vmem:[%s0 + $0x120] sm:$0xff]
  %v355 = vld [vmem:[%s0 + $0x128] sm:$0xff]
  %v356 = vld [vmem:[%s0 + $0x130] sm:$0xff]
  %v357 = vld [vmem:[%s0 + $0x138] sm:$0xff]
  %v358 = vld [vmem:[%s0 + $0x140] sm:$0xff]
  %v359 = vld [vmem:[%s0 + $0x148] sm:$0xff]
  %v360 = vld [vmem:[%s0 + $0x150] sm:$0xff]
  %v361 = vld [vmem:[%s0 + $0x158] sm:$0xff]
  %v362 = vld [vmem:[%s0 + $0x160] sm:$0xff]
  %v363 = vld [vmem:[%s0 + $0x168] sm:$0xff]
  %v364 = vld [vmem:[%s0 + $0x170] sm:$0xff]
  %v365 = vld [vmem:[%s0 + $0x178] sm:$0xff]
  %v366 = vld [vmem:[%s0 + $0x180] sm:$0xff]
  %v367 = vld [vmem:[%s0 + $0x188] sm:$0xff]
  %v368 = vld [vmem:[%s0 + $0x190] sm:$0xff]
  %v369 = vld [vmem:[%s0 + $0x198] sm:$0xff]
  %v370 = vld [vmem:[%s0 + $0x1a0] sm:$0xff]
  %v371 = vld [vmem:[%s0 + $0x1a8] sm:$0xff]
  %v372 = vld [vmem:[%s0 + $0x1b0] sm:$0xff]
  %v373 = vld [vmem:[%s0 + $0x1b8] sm:$0xff]
  %v374 = vld [vmem:[%s0 + $0x1c0] sm:$0xff]
  %v375 = vld [vmem:[%s0 + $0x1c8] sm:$0xff]
  %v376 = vld [vmem:[%s0 + $0x1d0] sm:$0xff]
  %v377 = vld [vmem:[%s0 + $0x1d8] sm:$0xff]
  %v378 = vld [vmem:[%s0 + $0x1e0] sm:$0xff]
  %v379 = vld [vmem:[%s0 + $0x1e8] sm:$0xff]
  %v380 = vld [vmem:[%s0 + $0x1f0] sm:$0xff]
  %v381 = vld [vmem:[%s0 + $0x1f8] sm:$0xff]
  %v382 = vld [vmem:[%s0 + $0x200] sm:$0xff]
  %v383 = vld [vmem:[%s0 + $0x208] sm:$0xff]
  %v384 = vld [vmem:[%s0 + $0x210] sm:$0xff]
  %v385 = vld [vmem:[%s0 + $0x218] sm:$0xff]
  %v386 = vld [vmem:[%s0 + $0x220] sm:$0xff]
  %v387 = vld [vmem:[%s0 + $0x228] sm:$0xff]
  %v388 = vld [vmem:[%s0 + $0x230] sm:$0xff]
  %v389 = vld [vmem:[%s0 + $0x238] sm:$0xff]
  %v390 = vld [vmem:[%s0 + $0x240] sm:$0xff]
  %v391 = vld [vmem:[%s0 + $0x248] sm:$0xff]
  %v392 = vld [vmem:[%s0 + $0x250] sm:$0xff]
  %v393 = vld [vmem:[%s0 + $0x258] sm:$0xff]
  %v394 = vld [vmem:[%s0 + $0x260] sm:$0xff]
  %v395 = vld [vmem:[%s0 + $0x268] sm:$0xff]
  %v396 = vld [vmem:[%s0 + $0x270] sm:$0xff]
  %v397 = vld [vmem:[%s0 + $0x278] sm:$0xff]
  %v398 = vld [vmem:[%s0 + $0x280] sm:$0xff]
  %v399 = vld [vmem:[%s0 + $0x288] sm:$0xff]
  %v400 = vld [vmem:[%s0 + $0x290] sm:$0xff]
  %v401 = vld [vmem:[%s0 + $0x298] sm:$0xff]
  %v402 = vld [vmem:[%s0 + $0x2a0] sm:$0xff]
  %v403 = vld [vmem:[%s0 + $0x2a8] sm:$0xff]
  %v404 = vld [vmem:[%s0 + $0x2b0] sm:$0xff]
  %v405 = vld [vmem:[%s0 + $0x2b8] sm:$0xff]
  %v406 = vld [vmem:[%s0 + $0x2c0] sm:$0xff]
  %v407 = vld [vmem:[%s0 + $0x2c8] sm:$0xff]
  %v408 = vld [vmem:[%s0 + $0x2d0] sm:$0xff]
  %v409 = vld [vmem:[%s0 + $0x2d8] sm:$0xff]
  %v410 = vld [vmem:[%s0 + $0x2e0] sm:$0xff]
  %v411 = vld [vmem:[%s0 + $0x2e8] sm:$0xff]
  %v412 = vld [vmem:[%s0 + $0x2f0] sm:$0xff]
  %v413 = vld [vmem:[%s0 + $0x2f8] sm:$0xff]
  %v414 = vld [vmem:[%s0 + $0x300] sm:$0xff]
  %v415 = vld [vmem:[%s0 + $0x308] sm:$0xff]
  %v416 = vld [vmem:[%s0 + $0x310] sm:$0xff]
  %v417 = vld [vmem:[%s0 + $0x318] sm:$0xff]
  %v418 = vld [vmem:[%s0 + $0x320] sm:$0xff]
  %v419 = vld [vmem:[%s0 + $0x328] sm:$0xff]
  %v420 = vld [vmem:[%s0 + $0x330] sm:$0xff]
  %v421 = vld [vmem:[%s0 + $0x338] sm:$0xff]
  %v422 = vld [vmem:[%s0 + $0x340] sm:$0xff]
  %v423 = vld [vmem:[%s0 + $0x348] sm:$0xff]
  %v424 = vld [vmem:[%s0 + $0x350] sm:$0xff]
  %v425 = vld [vmem:[%s0 + $0x358] sm:$0xff]
  %v426 = vld [vmem:[%s0 + $0x360] sm:$0xff]
  %v427 = vld [vmem:[%s0 + $0x368] sm:$0xff]
  %v428 = vld [vmem:[%s0 + $0x370] sm:$0xff]
  %v429 = vld [vmem:[%s0 + $0x378] sm:$0xff]
  %v430 = vld [vmem:[%s0 + $0x380] sm:$0xff]
  %v431 = vld [vmem:[%s0 + $0x388] sm:$0xff]
  %v432 = vld [vmem:[%s0 + $0x390] sm:$0xff]
  %v433 = vld [vmem:[%s0 + $0x398] sm:$0xff]
  %v434 = vld [vmem:[%s0 + $0x3a0] sm:$0xff]
  %v435 = vld [vmem:[%s0 + $0x3a8] sm:$0xff]
  %v436 = vld [vmem:[%s0 + $0x3b0] sm:$0xff]
  %v437 = vld [vmem:[%s0 + $0x3b8] sm:$0xff]
  %v438 = vld [vmem:[%s0 + $0x3c0] sm:$0xff]
  %v439 = vld [vmem:[%s0 + $0x3c8] sm:$0xff]
  %v440 = vld [vmem:[%s0 + $0x3d0] sm:$0xff]
  %v441 = vld [vmem:[%s0 + $0x3d8] sm:$0xff]
  %v442 = vld [vmem:[%s0 + $0x3e0] sm:$0xff]
  %v443 = vld [vmem:[%s0 + $0x3e8] sm:$0xff]
  %v444 = vld [vmem:[%s0 + $0x3f0] sm:$0xff]
  %v445 = vld [vmem:[%s0 + $0x3f8] sm:$0xff]
  %s446 = scalar_lea.vmem %s0, 1024
  %v447 = vld [vmem:[%s446] sm:$0xff]
  %v448 = vld [vmem:[%s446 + $0x8] sm:$0xff]
  %v449 = vld [vmem:[%s446 + $0x10] sm:$0xff]
  %v450 = vld [vmem:[%s446 + $0x18] sm:$0xff]
  %v451 = vld [vmem:[%s446 + $0x20] sm:$0xff]
  %v452 = vld [vmem:[%s446 + $0x28] sm:$0xff]
  %v453 = vld [vmem:[%s446 + $0x30] sm:$0xff]
  %v454 = vld [vmem:[%s446 + $0x38] sm:$0xff]
  %v455 = vld [vmem:[%s446 + $0x40] sm:$0xff]
  %v456 = vld [vmem:[%s446 + $0x48] sm:$0xff]
  %v457 = vld [vmem:[%s446 + $0x50] sm:$0xff]
  %v458 = vld [vmem:[%s446 + $0x58] sm:$0xff]
  %v459 = vld [vmem:[%s446 + $0x60] sm:$0xff]
  %v460 = vld [vmem:[%s446 + $0x68] sm:$0xff]
  %v461 = vld [vmem:[%s446 + $0x70] sm:$0xff]
  %v462 = vld [vmem:[%s446 + $0x78] sm:$0xff]
  %v463 = vld [vmem:[%s446 + $0x80] sm:$0xff]
  %v464 = vld [vmem:[%s446 + $0x88] sm:$0xff]
  %v465 = vld [vmem:[%s446 + $0x90] sm:$0xff]
  %v466 = vld [vmem:[%s446 + $0x98] sm:$0xff]
  %v467 = vld [vmem:[%s446 + $0xa0] sm:$0xff]
  %v468 = vld [vmem:[%s446 + $0xa8] sm:$0xff]
  %v469 = vld [vmem:[%s446 + $0xb0] sm:$0xff]
  %v470 = vld [vmem:[%s446 + $0xb8] sm:$0xff]
  %v471 = vld [vmem:[%s446 + $0xc0] sm:$0xff]
  %v472 = vld [vmem:[%s446 + $0xc8] sm:$0xff]
  %v473 = vld [vmem:[%s446 + $0xd0] sm:$0xff]
  %v474 = vld [vmem:[%s446 + $0xd8] sm:$0xff]
  %v475 = vld [vmem:[%s446 + $0xe0] sm:$0xff]
  %v476 = vld [vmem:[%s446 + $0xe8] sm:$0xff]
  %v477 = vld [vmem:[%s446 + $0xf0] sm:$0xff]
  %v478 = vld [vmem:[%s446 + $0xf8] sm:$0xff]
  %v479 = vld [vmem:[%s446 + $0x100] sm:$0xff]
  %v480 = vld [vmem:[%s446 + $0x108] sm:$0xff]
  %v481 = vld [vmem:[%s446 + $0x110] sm:$0xff]
  %v482 = vld [vmem:[%s446 + $0x118] sm:$0xff]
  %v483 = vld [vmem:[%s446 + $0x120] sm:$0xff]
  %v484 = vld [vmem:[%s446 + $0x128] sm:$0xff]
  %v485 = vld [vmem:[%s446 + $0x130] sm:$0xff]
  %v486 = vld [vmem:[%s446 + $0x138] sm:$0xff]
  %v487 = vld [vmem:[%s446 + $0x140] sm:$0xff]
  %v488 = vld [vmem:[%s446 + $0x148] sm:$0xff]
  %v489 = vld [vmem:[%s446 + $0x150] sm:$0xff]
  %v490 = vld [vmem:[%s446 + $0x158] sm:$0xff]
  %v491 = vld [vmem:[%s446 + $0x160] sm:$0xff]
  %v492 = vld [vmem:[%s446 + $0x168] sm:$0xff]
  %v493 = vld [vmem:[%s446 + $0x170] sm:$0xff]
  %v494 = vld [vmem:[%s446 + $0x178] sm:$0xff]
  %v495 = vld [vmem:[%s446 + $0x180] sm:$0xff]
  %v496 = vld [vmem:[%s446 + $0x188] sm:$0xff]
  %v497 = vld [vmem:[%s446 + $0x190] sm:$0xff]
  %v498 = vld [vmem:[%s446 + $0x198] sm:$0xff]
  %v499 = vld [vmem:[%s446 + $0x1a0] sm:$0xff]
  %v500 = vld [vmem:[%s446 + $0x1a8] sm:$0xff]
  %v501 = vld [vmem:[%s446 + $0x1b0] sm:$0xff]
  %v502 = vld [vmem:[%s446 + $0x1b8] sm:$0xff]
  %v503 = vld [vmem:[%s446 + $0x1c0] sm:$0xff]
  %v504 = vld [vmem:[%s446 + $0x1c8] sm:$0xff]
  %v505 = vld [vmem:[%s446 + $0x1d0] sm:$0xff]
  %v506 = vld [vmem:[%s446 + $0x1d8] sm:$0xff]
  %v507 = vld [vmem:[%s446 + $0x1e0] sm:$0xff]
  %v508 = vld [vmem:[%s446 + $0x1e8] sm:$0xff]
  %v509 = vld [vmem:[%s446 + $0x1f0] sm:$0xff]
  %v510 = vld [vmem:[%s446 + $0x1f8] sm:$0xff]
  %v511 = vld [vmem:[%s446 + $0x200] sm:$0xff]
  %v512 = vld [vmem:[%s446 + $0x208] sm:$0xff]
  %v513 = vld [vmem:[%s446 + $0x210] sm:$0xff]
  %v514 = vld [vmem:[%s446 + $0x218] sm:$0xff]
  %v515 = vld [vmem:[%s446 + $0x220] sm:$0xff]
  %v516 = vld [vmem:[%s446 + $0x228] sm:$0xff]
  %v517 = vld [vmem:[%s446 + $0x230] sm:$0xff]
  %v518 = vld [vmem:[%s446 + $0x238] sm:$0xff]
  %v519 = vld [vmem:[%s446 + $0x240] sm:$0xff]
  %v520 = vld [vmem:[%s446 + $0x248] sm:$0xff]
  %v521 = vld [vmem:[%s446 + $0x250] sm:$0xff]
  %v522 = vld [vmem:[%s446 + $0x258] sm:$0xff]
  %v523 = vld [vmem:[%s446 + $0x260] sm:$0xff]
  %v524 = vld [vmem:[%s446 + $0x268] sm:$0xff]
  %v525 = vld [vmem:[%s446 + $0x270] sm:$0xff]
  %v526 = vld [vmem:[%s446 + $0x278] sm:$0xff]
  %v527 = vld [vmem:[%s446 + $0x280] sm:$0xff]
  %v528 = vld [vmem:[%s446 + $0x288] sm:$0xff]
  %v529 = vld [vmem:[%s446 + $0x290] sm:$0xff]
  %v530 = vld [vmem:[%s446 + $0x298] sm:$0xff]
  %v531 = vld [vmem:[%s446 + $0x2a0] sm:$0xff]
  %v532 = vld [vmem:[%s446 + $0x2a8] sm:$0xff]
  %v533 = vld [vmem:[%s446 + $0x2b0] sm:$0xff]
  %v534 = vld [vmem:[%s446 + $0x2b8] sm:$0xff]
  %v535 = vld [vmem:[%s446 + $0x2c0] sm:$0xff]
  %v536 = vld [vmem:[%s446 + $0x2c8] sm:$0xff]
  %v537 = vld [vmem:[%s446 + $0x2d0] sm:$0xff]
  %v538 = vld [vmem:[%s446 + $0x2d8] sm:$0xff]
  %v539 = vld [vmem:[%s446 + $0x2e0] sm:$0xff]
  %v540 = vld [vmem:[%s446 + $0x2e8] sm:$0xff]
  %v541 = vld [vmem:[%s446 + $0x2f0] sm:$0xff]
  %v542 = vld [vmem:[%s446 + $0x2f8] sm:$0xff]
  %v543 = vld [vmem:[%s446 + $0x300] sm:$0xff]
  %v544 = vld [vmem:[%s446 + $0x308] sm:$0xff]
  %v545 = vld [vmem:[%s446 + $0x310] sm:$0xff]
  %v546 = vld [vmem:[%s446 + $0x318] sm:$0xff]
  %v547 = vld [vmem:[%s446 + $0x320] sm:$0xff]
  %v548 = vld [vmem:[%s446 + $0x328] sm:$0xff]
  %v549 = vld [vmem:[%s446 + $0x330] sm:$0xff]
  %v550 = vld [vmem:[%s446 + $0x338] sm:$0xff]
  %v551 = vld [vmem:[%s446 + $0x340] sm:$0xff]
  %v552 = vld [vmem:[%s446 + $0x348] sm:$0xff]
  %v553 = vld [vmem:[%s446 + $0x350] sm:$0xff]
  %v554 = vld [vmem:[%s446 + $0x358] sm:$0xff]
  %v555 = vld [vmem:[%s446 + $0x360] sm:$0xff]
  %v556 = vld [vmem:[%s446 + $0x368] sm:$0xff]
  %v557 = vld [vmem:[%s446 + $0x370] sm:$0xff]
  %v558 = vld [vmem:[%s446 + $0x378] sm:$0xff]
  %v559 = vld [vmem:[%s446 + $0x380] sm:$0xff]
  %v560 = vld [vmem:[%s446 + $0x388] sm:$0xff]
  %v561 = vld [vmem:[%s446 + $0x390] sm:$0xff]
  %v562 = vld [vmem:[%s446 + $0x398] sm:$0xff]
  %v563 = vld [vmem:[%s446 + $0x3a0] sm:$0xff]
  %v564 = vld [vmem:[%s446 + $0x3a8] sm:$0xff]
  %v565 = vld [vmem:[%s446 + $0x3b0] sm:$0xff]
  %v566 = vld [vmem:[%s446 + $0x3b8] sm:$0xff]
  %v567 = vld [vmem:[%s446 + $0x3c0] sm:$0xff]
  %v568 = vld [vmem:[%s446 + $0x3c8] sm:$0xff]
  %v569 = vld [vmem:[%s446 + $0x3d0] sm:$0xff]
  %v570 = vld [vmem:[%s446 + $0x3d8] sm:$0xff]
  %v571 = vld [vmem:[%s446 + $0x3e0] sm:$0xff]
  %v572 = vld [vmem:[%s446 + $0x3e8] sm:$0xff]
  %v573 = vld [vmem:[%s446 + $0x3f0] sm:$0xff]
  %v574 = vld [vmem:[%s446 + $0x3f8] sm:$0xff]
  %vm575 = vcmask 785408
  %v577 = vsel %vm575, %v321, 0
  %v580 = vsel %vm575, %v325, 0
  %v583 = vsel %vm575, %v329, 0
  %v586 = vsel %vm575, %v333, 0
  %v589 = vsel %vm575, %v337, 0
  %v592 = vsel %vm575, %v341, 0
  %v595 = vsel %vm575, %v345, 0
  %v598 = vsel %vm575, %v349, 0
  %v601 = vsel %vm575, %v353, 0
  %v604 = vsel %vm575, %v357, 0
  %v607 = vsel %vm575, %v361, 0
  %v610 = vsel %vm575, %v365, 0
  %v613 = vsel %vm575, %v369, 0
  %v616 = vsel %vm575, %v373, 0
  %v619 = vsel %vm575, %v377, 0
  %v622 = vsel %vm575, %v381, 0
  %v625 = vsel %vm575, %v385, 0
  %v628 = vsel %vm575, %v389, 0
  %v631 = vsel %vm575, %v393, 0
  %v634 = vsel %vm575, %v397, 0
  %v637 = vsel %vm575, %v401, 0
  %v640 = vsel %vm575, %v405, 0
  %v643 = vsel %vm575, %v409, 0
  %v646 = vsel %vm575, %v413, 0
  %v649 = vsel %vm575, %v417, 0
  %v652 = vsel %vm575, %v421, 0
  %v655 = vsel %vm575, %v425, 0
  %v658 = vsel %vm575, %v429, 0
  %v661 = vsel %vm575, %v433, 0
  %v664 = vsel %vm575, %v437, 0
  %v667 = vsel %vm575, %v441, 0
  %v670 = vsel %vm575, %v445, 0
  %672 = vmatpush.msra.mxu0 %v68
  %673 = vmatpush.msra.mxu0 %v66
  %674 = vmatpush.msra.mxu0 %v64
  %675 = vmatpush.msra.mxu0 %v62
  %676 = vmatpush.msra.mxu0 %v60
  %677 = vmatpush.msra.mxu0 %v58
  %678 = vmatpush.msra.mxu0 %v56
  %679 = vmatpush.msra.mxu0 %v54
  %680 = vmatpush.msra.mxu0 %v52
  %681 = vmatpush.msra.mxu0 %v50
  %682 = vmatpush.msra.mxu0 %v48
  %683 = vmatpush.msra.mxu0 %v46
  %684 = vmatpush.msra.mxu0 %v44
  %685 = vmatpush.msra.mxu0 %v42
  %686 = vmatpush.msra.mxu0 %v40
  %687 = vmatpush.msra.mxu0 %v38
  %688 = vmatmul.f32.gmra.mxu0 %v318
  %v689 = vpop.f32.mrf.mxu0
  %v690 = vadd.f32 0.0, %v689
  %691 = vmatmul.f32.gmra.mxu0 %v322
  %v692 = vpop.f32.mrf.mxu0
  %v693 = vadd.f32 0.0, %v692
  %694 = vmatmul.f32.gmra.mxu0 %v326
  %v695 = vpop.f32.mrf.mxu0
  %v696 = vadd.f32 0.0, %v695
  %697 = vmatmul.f32.gmra.mxu0 %v330
  %v698 = vpop.f32.mrf.mxu0
  %v699 = vadd.f32 0.0, %v698
  %700 = vmatmul.f32.gmra.mxu0 %v334
  %v701 = vpop.f32.mrf.mxu0
  %v702 = vadd.f32 0.0, %v701
  %703 = vmatmul.f32.gmra.mxu0 %v338
  %v704 = vpop.f32.mrf.mxu0
  %v705 = vadd.f32 0.0, %v704
  %706 = vmatmul.f32.gmra.mxu0 %v342
  %v707 = vpop.f32.mrf.mxu0
  %v708 = vadd.f32 0.0, %v707
  %709 = vmatmul.f32.gmra.mxu0 %v346
  %v710 = vpop.f32.mrf.mxu0
  %v711 = vadd.f32 0.0, %v710
  %712 = vmatmul.f32.gmra.mxu0 %v350
  %v713 = vpop.f32.mrf.mxu0
  %v714 = vadd.f32 0.0, %v713
  %715 = vmatmul.f32.gmra.mxu0 %v354
  %v716 = vpop.f32.mrf.mxu0
  %v717 = vadd.f32 0.0, %v716
  %718 = vmatmul.f32.gmra.mxu0 %v358
  %v719 = vpop.f32.mrf.mxu0
  %v720 = vadd.f32 0.0, %v719
  %721 = vmatmul.f32.gmra.mxu0 %v362
  %v722 = vpop.f32.mrf.mxu0
  %v723 = vadd.f32 0.0, %v722
  %724 = vmatmul.f32.gmra.mxu0 %v366
  %v725 = vpop.f32.mrf.mxu0
  %v726 = vadd.f32 0.0, %v725
  %727 = vmatmul.f32.gmra.mxu0 %v370
  %v728 = vpop.f32.mrf.mxu0
  %v729 = vadd.f32 0.0, %v728
  %730 = vmatmul.f32.gmra.mxu0 %v374
  %v731 = vpop.f32.mrf.mxu0
  %732 = vmatmul.f32.gmra.mxu0 %v378
  %v733 = vpop.f32.mrf.mxu0
  %734 = vmatmul.f32.gmra.mxu0 %v382
  %v735 = vpop.f32.mrf.mxu0
  %v736 = vadd.f32 0.0, %v735
  %737 = vmatmul.f32.gmra.mxu0 %v386
  %v738 = vpop.f32.mrf.mxu0
  %v739 = vadd.f32 0.0, %v738
  %740 = vmatmul.f32.gmra.mxu0 %v390
  %v741 = vpop.f32.mrf.mxu0
  %v742 = vadd.f32 0.0, %v741
  %743 = vmatmul.f32.gmra.mxu0 %v394
  %v744 = vpop.f32.mrf.mxu0
  %v745 = vadd.f32 0.0, %v744
  %746 = vmatmul.f32.gmra.mxu0 %v398
  %v747 = vpop.f32.mrf.mxu0
  %v748 = vadd.f32 0.0, %v747
  %749 = vmatmul.f32.gmra.mxu0 %v402
  %v750 = vpop.f32.mrf.mxu0
  %v751 = vadd.f32 0.0, %v750
  %752 = vmatmul.f32.gmra.mxu0 %v406
  %v753 = vpop.f32.mrf.mxu0
  %v754 = vadd.f32 0.0, %v753
  %755 = vmatmul.f32.gmra.mxu0 %v410
  %v756 = vpop.f32.mrf.mxu0
  %v757 = vadd.f32 0.0, %v756
  %758 = vmatmul.f32.gmra.mxu0 %v414
  %v759 = vpop.f32.mrf.mxu0
  %v760 = vadd.f32 0.0, %v759
  %761 = vmatmul.f32.gmra.mxu0 %v418
  %v762 = vpop.f32.mrf.mxu0
  %v763 = vadd.f32 0.0, %v762
  %764 = vmatmul.f32.gmra.mxu0 %v422
  %v765 = vpop.f32.mrf.mxu0
  %v766 = vadd.f32 0.0, %v765
  %767 = vmatmul.f32.gmra.mxu0 %v426
  %v768 = vpop.f32.mrf.mxu0
  %v769 = vadd.f32 0.0, %v768
  %770 = vmatmul.f32.gmra.mxu0 %v430
  %v771 = vpop.f32.mrf.mxu0
  %v772 = vadd.f32 0.0, %v771
  %773 = vmatmul.f32.gmra.mxu0 %v434
  %v774 = vpop.f32.mrf.mxu0
  %v775 = vadd.f32 0.0, %v774
  %776 = vmatmul.f32.gmra.mxu0 %v438
  %v777 = vpop.f32.mrf.mxu0
  %778 = vmatmul.f32.gmra.mxu0 %v442
  %v779 = vpop.f32.mrf.mxu0
  %780 = vdwg.mxu0
  %781 = vmatpush.msra.mxu0 %v100
  %782 = vmatpush.msra.mxu0 %v98
  %783 = vmatpush.msra.mxu0 %v96
  %784 = vmatpush.msra.mxu0 %v94
  %785 = vmatpush.msra.mxu0 %v92
  %786 = vmatpush.msra.mxu0 %v90
  %787 = vmatpush.msra.mxu0 %v88
  %788 = vmatpush.msra.mxu0 %v86
  %789 = vmatpush.msra.mxu0 %v84
  %790 = vmatpush.msra.mxu0 %v82
  %791 = vmatpush.msra.mxu0 %v80
  %792 = vmatpush.msra.mxu0 %v78
  %793 = vmatpush.msra.mxu0 %v76
  %794 = vmatpush.msra.mxu0 %v74
  %795 = vmatpush.msra.mxu0 %v72
  %796 = vmatpush.msra.mxu0 %v70
  %797 = vmatmul.f32.gmra.mxu0 %v319
  %v798 = vpop.f32.mrf.mxu0
  %v799 = vadd.f32 %v690, %v798
  %800 = vmatmul.f32.gmra.mxu0 %v323
  %v801 = vpop.f32.mrf.mxu0
  %v802 = vadd.f32 %v693, %v801
  %803 = vmatmul.f32.gmra.mxu0 %v327
  %v804 = vpop.f32.mrf.mxu0
  %v805 = vadd.f32 %v696, %v804
  %806 = vmatmul.f32.gmra.mxu0 %v331
  %v807 = vpop.f32.mrf.mxu0
  %v808 = vadd.f32 %v699, %v807
  %809 = vmatmul.f32.gmra.mxu0 %v335
  %v810 = vpop.f32.mrf.mxu0
  %v811 = vadd.f32 %v702, %v810
  %812 = vmatmul.f32.gmra.mxu0 %v339
  %v813 = vpop.f32.mrf.mxu0
  %v814 = vadd.f32 %v705, %v813
  %815 = vmatmul.f32.gmra.mxu0 %v343
  %v816 = vpop.f32.mrf.mxu0
  %v817 = vadd.f32 %v708, %v816
  %818 = vmatmul.f32.gmra.mxu0 %v347
  %v819 = vpop.f32.mrf.mxu0
  %v820 = vadd.f32 %v711, %v819
  %821 = vmatmul.f32.gmra.mxu0 %v351
  %v822 = vpop.f32.mrf.mxu0
  %v823 = vadd.f32 %v714, %v822
  %824 = vmatmul.f32.gmra.mxu0 %v355
  %v825 = vpop.f32.mrf.mxu0
  %v826 = vadd.f32 %v717, %v825
  %827 = vmatmul.f32.gmra.mxu0 %v359
  %v828 = vpop.f32.mrf.mxu0
  %v829 = vadd.f32 %v720, %v828
  %830 = vmatmul.f32.gmra.mxu0 %v363
  %v831 = vpop.f32.mrf.mxu0
  %v832 = vadd.f32 %v723, %v831
  %833 = vmatmul.f32.gmra.mxu0 %v367
  %v834 = vpop.f32.mrf.mxu0
  %v835 = vadd.f32 %v726, %v834
  %836 = vmatmul.f32.gmra.mxu0 %v371
  %v837 = vpop.f32.mrf.mxu0
  %v838 = vadd.f32 %v729, %v837
  %839 = vmatmul.f32.gmra.mxu0 %v375
  %v840 = vpop.f32.mrf.mxu0
  %841 = vmatmul.f32.gmra.mxu0 %v379
  %v842 = vpop.f32.mrf.mxu0
  %843 = vmatmul.f32.gmra.mxu0 %v383
  %v844 = vpop.f32.mrf.mxu0
  %v845 = vadd.f32 %v736, %v844
  %846 = vmatmul.f32.gmra.mxu0 %v387
  %v847 = vpop.f32.mrf.mxu0
  %v848 = vadd.f32 %v739, %v847
  %849 = vmatmul.f32.gmra.mxu0 %v391
  %v850 = vpop.f32.mrf.mxu0
  %v851 = vadd.f32 %v742, %v850
  %852 = vmatmul.f32.gmra.mxu0 %v395
  %v853 = vpop.f32.mrf.mxu0
  %v854 = vadd.f32 %v745, %v853
  %855 = vmatmul.f32.gmra.mxu0 %v399
  %v856 = vpop.f32.mrf.mxu0
  %v857 = vadd.f32 %v748, %v856
  %858 = vmatmul.f32.gmra.mxu0 %v403
  %v859 = vpop.f32.mrf.mxu0
  %v860 = vadd.f32 %v751, %v859
  %861 = vmatmul.f32.gmra.mxu0 %v407
  %v862 = vpop.f32.mrf.mxu0
  %v863 = vadd.f32 %v754, %v862
  %864 = vmatmul.f32.gmra.mxu0 %v411
  %v865 = vpop.f32.mrf.mxu0
  %v866 = vadd.f32 %v757, %v865
  %867 = vmatmul.f32.gmra.mxu0 %v415
  %v868 = vpop.f32.mrf.mxu0
  %v869 = vadd.f32 %v760, %v868
  %870 = vmatmul.f32.gmra.mxu0 %v419
  %v871 = vpop.f32.mrf.mxu0
  %v872 = vadd.f32 %v763, %v871
  %873 = vmatmul.f32.gmra.mxu0 %v423
  %v874 = vpop.f32.mrf.mxu0
  %v875 = vadd.f32 %v766, %v874
  %876 = vmatmul.f32.gmra.mxu0 %v427
  %v877 = vpop.f32.mrf.mxu0
  %v878 = vadd.f32 %v769, %v877
  %879 = vmatmul.f32.gmra.mxu0 %v431
  %v880 = vpop.f32.mrf.mxu0
  %v881 = vadd.f32 %v772, %v880
  %882 = vmatmul.f32.gmra.mxu0 %v435
  %v883 = vpop.f32.mrf.mxu0
  %v884 = vadd.f32 %v775, %v883
  %885 = vmatmul.f32.gmra.mxu0 %v439
  %v886 = vpop.f32.mrf.mxu0
  %887 = vmatmul.f32.gmra.mxu0 %v443
  %v888 = vpop.f32.mrf.mxu0
  %889 = vdwg.mxu0
  %890 = vmatpush.msra.mxu0 %v132
  %891 = vmatpush.msra.mxu0 %v130
  %892 = vmatpush.msra.mxu0 %v128
  %893 = vmatpush.msra.mxu0 %v126
  %894 = vmatpush.msra.mxu0 %v124
  %895 = vmatpush.msra.mxu0 %v122
  %896 = vmatpush.msra.mxu0 %v120
  %897 = vmatpush.msra.mxu0 %v118
  %898 = vmatpush.msra.mxu0 %v116
  %899 = vmatpush.msra.mxu0 %v114
  %900 = vmatpush.msra.mxu0 %v112
  %901 = vmatpush.msra.mxu0 %v110
  %902 = vmatpush.msra.mxu0 %v108
  %903 = vmatpush.msra.mxu0 %v106
  %904 = vmatpush.msra.mxu0 %v104
  %905 = vmatpush.msra.mxu0 %v102
  %906 = vmatmul.f32.gmra.mxu0 %v320
  %v907 = vpop.f32.mrf.mxu0
  %v908 = vadd.f32 %v799, %v907
  %909 = vmatmul.f32.gmra.mxu0 %v324
  %v910 = vpop.f32.mrf.mxu0
  %v911 = vadd.f32 %v802, %v910
  %912 = vmatmul.f32.gmra.mxu0 %v328
  %v913 = vpop.f32.mrf.mxu0
  %v914 = vadd.f32 %v805, %v913
  %915 = vmatmul.f32.gmra.mxu0 %v332
  %v916 = vpop.f32.mrf.mxu0
  %v917 = vadd.f32 %v808, %v916
  %918 = vmatmul.f32.gmra.mxu0 %v336
  %v919 = vpop.f32.mrf.mxu0
  %v920 = vadd.f32 %v811, %v919
  %921 = vmatmul.f32.gmra.mxu0 %v340
  %v922 = vpop.f32.mrf.mxu0
  %v923 = vadd.f32 %v814, %v922
  %924 = vmatmul.f32.gmra.mxu0 %v344
  %v925 = vpop.f32.mrf.mxu0
  %v926 = vadd.f32 %v817, %v925
  %927 = vmatmul.f32.gmra.mxu0 %v348
  %v928 = vpop.f32.mrf.mxu0
  %v929 = vadd.f32 %v820, %v928
  %930 = vmatmul.f32.gmra.mxu0 %v352
  %v931 = vpop.f32.mrf.mxu0
  %v932 = vadd.f32 %v823, %v931
  %933 = vmatmul.f32.gmra.mxu0 %v356
  %v934 = vpop.f32.mrf.mxu0
  %v935 = vadd.f32 %v826, %v934
  %936 = vmatmul.f32.gmra.mxu0 %v360
  %v937 = vpop.f32.mrf.mxu0
  %v938 = vadd.f32 %v829, %v937
  %939 = vmatmul.f32.gmra.mxu0 %v364
  %v940 = vpop.f32.mrf.mxu0
  %v941 = vadd.f32 %v832, %v940
  %942 = vmatmul.f32.gmra.mxu0 %v368
  %v943 = vpop.f32.mrf.mxu0
  %v944 = vadd.f32 %v835, %v943
  %945 = vmatmul.f32.gmra.mxu0 %v372
  %v946 = vpop.f32.mrf.mxu0
  %v947 = vadd.f32 %v838, %v946
  %948 = vmatmul.f32.gmra.mxu0 %v376
  %v949 = vpop.f32.mrf.mxu0
  %950 = vmatmul.f32.gmra.mxu0 %v380
  %v951 = vpop.f32.mrf.mxu0
  %952 = vmatmul.f32.gmra.mxu0 %v384
  %v953 = vpop.f32.mrf.mxu0
  %v954 = vadd.f32 %v845, %v953
  %955 = vmatmul.f32.gmra.mxu0 %v388
  %v956 = vpop.f32.mrf.mxu0
  %v957 = vadd.f32 %v848, %v956
  %958 = vmatmul.f32.gmra.mxu0 %v392
  %v959 = vpop.f32.mrf.mxu0
  %v960 = vadd.f32 %v851, %v959
  %961 = vmatmul.f32.gmra.mxu0 %v396
  %v962 = vpop.f32.mrf.mxu0
  %v963 = vadd.f32 %v854, %v962
  %964 = vmatmul.f32.gmra.mxu0 %v400
  %v965 = vpop.f32.mrf.mxu0
  %v966 = vadd.f32 %v857, %v965
  %967 = vmatmul.f32.gmra.mxu0 %v404
  %v968 = vpop.f32.mrf.mxu0
  %v969 = vadd.f32 %v860, %v968
  %970 = vmatmul.f32.gmra.mxu0 %v408
  %v971 = vpop.f32.mrf.mxu0
  %v972 = vadd.f32 %v863, %v971
  %973 = vmatmul.f32.gmra.mxu0 %v412
  %v974 = vpop.f32.mrf.mxu0
  %v975 = vadd.f32 %v866, %v974
  %976 = vmatmul.f32.gmra.mxu0 %v416
  %v977 = vpop.f32.mrf.mxu0
  %v978 = vadd.f32 %v869, %v977
  %979 = vmatmul.f32.gmra.mxu0 %v420
  %v980 = vpop.f32.mrf.mxu0
  %v981 = vadd.f32 %v872, %v980
  %982 = vmatmul.f32.gmra.mxu0 %v424
  %v983 = vpop.f32.mrf.mxu0
  %v984 = vadd.f32 %v875, %v983
  %985 = vmatmul.f32.gmra.mxu0 %v428
  %v986 = vpop.f32.mrf.mxu0
  %v987 = vadd.f32 %v878, %v986
  %988 = vmatmul.f32.gmra.mxu0 %v432
  %v989 = vpop.f32.mrf.mxu0
  %v990 = vadd.f32 %v881, %v989
  %991 = vmatmul.f32.gmra.mxu0 %v436
  %v992 = vpop.f32.mrf.mxu0
  %v993 = vadd.f32 %v884, %v992
  %994 = vmatmul.f32.gmra.mxu0 %v440
  %v995 = vpop.f32.mrf.mxu0
  %996 = vmatmul.f32.gmra.mxu0 %v444
  %v997 = vpop.f32.mrf.mxu0
  %998 = vdwg.mxu0
  %999 = vmatpush.msra.mxu0 0.0
  %1000 = vmatpush.msra.mxu0 0.0
  %1001 = vmatpush.msra.mxu0 0.0
  %1002 = vmatpush.msra.mxu0 0.0
  %1003 = vmatpush.msra.mxu0 %v156
  %1004 = vmatpush.msra.mxu0 %v154
  %1005 = vmatpush.msra.mxu0 %v152
  %1006 = vmatpush.msra.mxu0 %v150
  %1007 = vmatpush.msra.mxu0 %v148
  %1008 = vmatpush.msra.mxu0 %v146
  %1009 = vmatpush.msra.mxu0 %v144
  %1010 = vmatpush.msra.mxu0 %v142
  %1011 = vmatpush.msra.mxu0 %v140
  %1012 = vmatpush.msra.mxu0 %v138
  %1013 = vmatpush.msra.mxu0 %v136
  %1014 = vmatpush.msra.mxu0 %v134
  %1015 = vmatmul.f32.gmra.mxu0 %v577
  %v1016 = vpop.f32.mrf.mxu0
  %v1017 = vadd.f32 %v908, %v1016
  %1018 = vmatmul.f32.gmra.mxu0 %v580
  %v1019 = vpop.f32.mrf.mxu0
  %v1020 = vadd.f32 %v911, %v1019
  %1021 = vmatmul.f32.gmra.mxu0 %v583
  %v1022 = vpop.f32.mrf.mxu0
  %v1023 = vadd.f32 %v914, %v1022
  %1024 = vmatmul.f32.gmra.mxu0 %v586
  %v1025 = vpop.f32.mrf.mxu0
  %v1026 = vadd.f32 %v917, %v1025
  %1027 = vmatmul.f32.gmra.mxu0 %v589
  %v1028 = vpop.f32.mrf.mxu0
  %v1029 = vadd.f32 %v920, %v1028
  %1030 = vmatmul.f32.gmra.mxu0 %v592
  %v1031 = vpop.f32.mrf.mxu0
  %v1032 = vadd.f32 %v923, %v1031
  %1033 = vmatmul.f32.gmra.mxu0 %v595
  %v1034 = vpop.f32.mrf.mxu0
  %v1035 = vadd.f32 %v926, %v1034
  %1036 = vmatmul.f32.gmra.mxu0 %v598
  %v1037 = vpop.f32.mrf.mxu0
  %v1038 = vadd.f32 %v929, %v1037
  %1039 = vmatmul.f32.gmra.mxu0 %v601
  %v1040 = vpop.f32.mrf.mxu0
  %v1041 = vadd.f32 %v932, %v1040
  %1042 = vmatmul.f32.gmra.mxu0 %v604
  %v1043 = vpop.f32.mrf.mxu0
  %v1044 = vadd.f32 %v935, %v1043
  %1045 = vmatmul.f32.gmra.mxu0 %v607
  %v1046 = vpop.f32.mrf.mxu0
  %v1047 = vadd.f32 %v938, %v1046
  %1048 = vmatmul.f32.gmra.mxu0 %v610
  %v1049 = vpop.f32.mrf.mxu0
  %v1050 = vadd.f32 %v941, %v1049
  %1051 = vmatmul.f32.gmra.mxu0 %v613
  %v1052 = vpop.f32.mrf.mxu0
  %v1053 = vadd.f32 %v944, %v1052
  %1054 = vmatmul.f32.gmra.mxu0 %v616
  %v1055 = vpop.f32.mrf.mxu0
  %v1056 = vadd.f32 %v947, %v1055
  %1057 = vmatmul.f32.gmra.mxu0 %v619
  %v1058 = vpop.f32.mrf.mxu0
  %1059 = vmatmul.f32.gmra.mxu0 %v622
  %v1060 = vpop.f32.mrf.mxu0
  %1061 = vmatmul.f32.gmra.mxu0 %v625
  %v1062 = vpop.f32.mrf.mxu0
  %v1063 = vadd.f32 %v954, %v1062
  %1064 = vmatmul.f32.gmra.mxu0 %v628
  %v1065 = vpop.f32.mrf.mxu0
  %v1066 = vadd.f32 %v957, %v1065
  %1067 = vmatmul.f32.gmra.mxu0 %v631
  %v1068 = vpop.f32.mrf.mxu0
  %v1069 = vadd.f32 %v960, %v1068
  %1070 = vmatmul.f32.gmra.mxu0 %v634
  %v1071 = vpop.f32.mrf.mxu0
  %v1072 = vadd.f32 %v963, %v1071
  %1073 = vmatmul.f32.gmra.mxu0 %v637
  %v1074 = vpop.f32.mrf.mxu0
  %v1075 = vadd.f32 %v966, %v1074
  %1076 = vmatmul.f32.gmra.mxu0 %v640
  %v1077 = vpop.f32.mrf.mxu0
  %v1078 = vadd.f32 %v969, %v1077
  %1079 = vmatmul.f32.gmra.mxu0 %v643
  %v1080 = vpop.f32.mrf.mxu0
  %v1081 = vadd.f32 %v972, %v1080
  %1082 = vmatmul.f32.gmra.mxu0 %v646
  %v1083 = vpop.f32.mrf.mxu0
  %v1084 = vadd.f32 %v975, %v1083
  %1085 = vmatmul.f32.gmra.mxu0 %v649
  %v1086 = vpop.f32.mrf.mxu0
  %v1087 = vadd.f32 %v978, %v1086
  %1088 = vmatmul.f32.gmra.mxu0 %v652
  %v1089 = vpop.f32.mrf.mxu0
  %v1090 = vadd.f32 %v981, %v1089
  %1091 = vmatmul.f32.gmra.mxu0 %v655
  %v1092 = vpop.f32.mrf.mxu0
  %v1093 = vadd.f32 %v984, %v1092
  %1094 = vmatmul.f32.gmra.mxu0 %v658
  %v1095 = vpop.f32.mrf.mxu0
  %v1096 = vadd.f32 %v987, %v1095
  %1097 = vmatmul.f32.gmra.mxu0 %v661
  %v1098 = vpop.f32.mrf.mxu0
  %v1099 = vadd.f32 %v990, %v1098
  %1100 = vmatmul.f32.gmra.mxu0 %v664
  %v1101 = vpop.f32.mrf.mxu0
  %v1102 = vadd.f32 %v993, %v1101
  %1103 = vmatmul.f32.gmra.mxu0 %v667
  %v1104 = vpop.f32.mrf.mxu0
  %1105 = vmatmul.f32.gmra.mxu0 %v670
  %v1106 = vpop.f32.mrf.mxu0
  %1107 = vdwg.mxu0
  %1108 = vmatpush.msra.mxu0 %v69
  %1109 = vmatpush.msra.mxu0 %v67
  %1110 = vmatpush.msra.mxu0 %v65
  %1111 = vmatpush.msra.mxu0 %v63
  %1112 = vmatpush.msra.mxu0 %v61
  %1113 = vmatpush.msra.mxu0 %v59
  %1114 = vmatpush.msra.mxu0 %v57
  %1115 = vmatpush.msra.mxu0 %v55
  %1116 = vmatpush.msra.mxu0 %v53
  %1117 = vmatpush.msra.mxu0 %v51
  %1118 = vmatpush.msra.mxu0 %v49
  %1119 = vmatpush.msra.mxu0 %v47
  %1120 = vmatpush.msra.mxu0 %v45
  %1121 = vmatpush.msra.mxu0 %v43
  %1122 = vmatpush.msra.mxu0 %v41
  %1123 = vmatpush.msra.mxu0 %v39
  %1124 = vmatmul.f32.gmra.mxu0 %v318
  %v1125 = vpop.f32.mrf.mxu0
  %v1126 = vadd.f32 0.0, %v1125
  %1127 = vmatmul.f32.gmra.mxu0 %v322
  %v1128 = vpop.f32.mrf.mxu0
  %v1129 = vadd.f32 0.0, %v1128
  %1130 = vmatmul.f32.gmra.mxu0 %v326
  %v1131 = vpop.f32.mrf.mxu0
  %v1132 = vadd.f32 0.0, %v1131
  %1133 = vmatmul.f32.gmra.mxu0 %v330
  %v1134 = vpop.f32.mrf.mxu0
  %v1135 = vadd.f32 0.0, %v1134
  %1136 = vmatmul.f32.gmra.mxu0 %v334
  %v1137 = vpop.f32.mrf.mxu0
  %v1138 = vadd.f32 0.0, %v1137
  %1139 = vmatmul.f32.gmra.mxu0 %v338
  %v1140 = vpop.f32.mrf.mxu0
  %v1141 = vadd.f32 0.0, %v1140
  %1142 = vmatmul.f32.gmra.mxu0 %v342
  %v1143 = vpop.f32.mrf.mxu0
  %v1144 = vadd.f32 0.0, %v1143
  %1145 = vmatmul.f32.gmra.mxu0 %v346
  %v1146 = vpop.f32.mrf.mxu0
  %v1147 = vadd.f32 0.0, %v1146
  %1148 = vmatmul.f32.gmra.mxu0 %v350
  %v1149 = vpop.f32.mrf.mxu0
  %v1150 = vadd.f32 0.0, %v1149
  %1151 = vmatmul.f32.gmra.mxu0 %v354
  %v1152 = vpop.f32.mrf.mxu0
  %v1153 = vadd.f32 0.0, %v1152
  %1154 = vmatmul.f32.gmra.mxu0 %v358
  %v1155 = vpop.f32.mrf.mxu0
  %v1156 = vadd.f32 0.0, %v1155
  %1157 = vmatmul.f32.gmra.mxu0 %v362
  %v1158 = vpop.f32.mrf.mxu0
  %v1159 = vadd.f32 0.0, %v1158
  %1160 = vmatmul.f32.gmra.mxu0 %v366
  %v1161 = vpop.f32.mrf.mxu0
  %v1162 = vadd.f32 0.0, %v1161
  %1163 = vmatmul.f32.gmra.mxu0 %v370
  %v1164 = vpop.f32.mrf.mxu0
  %v1165 = vadd.f32 0.0, %v1164
  %1166 = vmatmul.f32.gmra.mxu0 %v374
  %v1167 = vpop.f32.mrf.mxu0
  %1168 = vmatmul.f32.gmra.mxu0 %v378
  %v1169 = vpop.f32.mrf.mxu0
  %1170 = vmatmul.f32.gmra.mxu0 %v382
  %v1171 = vpop.f32.mrf.mxu0
  %v1172 = vadd.f32 0.0, %v1171
  %1173 = vmatmul.f32.gmra.mxu0 %v386
  %v1174 = vpop.f32.mrf.mxu0
  %v1175 = vadd.f32 0.0, %v1174
  %1176 = vmatmul.f32.gmra.mxu0 %v390
  %v1177 = vpop.f32.mrf.mxu0
  %v1178 = vadd.f32 0.0, %v1177
  %1179 = vmatmul.f32.gmra.mxu0 %v394
  %v1180 = vpop.f32.mrf.mxu0
  %v1181 = vadd.f32 0.0, %v1180
  %1182 = vmatmul.f32.gmra.mxu0 %v398
  %v1183 = vpop.f32.mrf.mxu0
  %v1184 = vadd.f32 0.0, %v1183
  %1185 = vmatmul.f32.gmra.mxu0 %v402
  %v1186 = vpop.f32.mrf.mxu0
  %v1187 = vadd.f32 0.0, %v1186
  %1188 = vmatmul.f32.gmra.mxu0 %v406
  %v1189 = vpop.f32.mrf.mxu0
  %v1190 = vadd.f32 0.0, %v1189
  %1191 = vmatmul.f32.gmra.mxu0 %v410
  %v1192 = vpop.f32.mrf.mxu0
  %v1193 = vadd.f32 0.0, %v1192
  %1194 = vmatmul.f32.gmra.mxu0 %v414
  %v1195 = vpop.f32.mrf.mxu0
  %v1196 = vadd.f32 0.0, %v1195
  %1197 = vmatmul.f32.gmra.mxu0 %v418
  %v1198 = vpop.f32.mrf.mxu0
  %v1199 = vadd.f32 0.0, %v1198
  %1200 = vmatmul.f32.gmra.mxu0 %v422
  %v1201 = vpop.f32.mrf.mxu0
  %v1202 = vadd.f32 0.0, %v1201
  %1203 = vmatmul.f32.gmra.mxu0 %v426
  %v1204 = vpop.f32.mrf.mxu0
  %v1205 = vadd.f32 0.0, %v1204
  %1206 = vmatmul.f32.gmra.mxu0 %v430
  %v1207 = vpop.f32.mrf.mxu0
  %v1208 = vadd.f32 0.0, %v1207
  %1209 = vmatmul.f32.gmra.mxu0 %v434
  %v1210 = vpop.f32.mrf.mxu0
  %v1211 = vadd.f32 0.0, %v1210
  %1212 = vmatmul.f32.gmra.mxu0 %v438
  %v1213 = vpop.f32.mrf.mxu0
  %1214 = vmatmul.f32.gmra.mxu0 %v442
  %v1215 = vpop.f32.mrf.mxu0
  %1216 = vdwg.mxu0
  %1217 = vmatpush.msra.mxu0 %v101
  %1218 = vmatpush.msra.mxu0 %v99
  %1219 = vmatpush.msra.mxu0 %v97
  %1220 = vmatpush.msra.mxu0 %v95
  %1221 = vmatpush.msra.mxu0 %v93
  %1222 = vmatpush.msra.mxu0 %v91
  %1223 = vmatpush.msra.mxu0 %v89
  %1224 = vmatpush.msra.mxu0 %v87
  %1225 = vmatpush.msra.mxu0 %v85
  %1226 = vmatpush.msra.mxu0 %v83
  %1227 = vmatpush.msra.mxu0 %v81
  %1228 = vmatpush.msra.mxu0 %v79
  %1229 = vmatpush.msra.mxu0 %v77
  %1230 = vmatpush.msra.mxu0 %v75
  %1231 = vmatpush.msra.mxu0 %v73
  %1232 = vmatpush.msra.mxu0 %v71
  %1233 = vmatmul.f32.gmra.mxu0 %v319
  %v1234 = vpop.f32.mrf.mxu0
  %v1235 = vadd.f32 %v1126, %v1234
  %1236 = vmatmul.f32.gmra.mxu0 %v323
  %v1237 = vpop.f32.mrf.mxu0
  %v1238 = vadd.f32 %v1129, %v1237
  %1239 = vmatmul.f32.gmra.mxu0 %v327
  %v1240 = vpop.f32.mrf.mxu0
  %v1241 = vadd.f32 %v1132, %v1240
  %1242 = vmatmul.f32.gmra.mxu0 %v331
  %v1243 = vpop.f32.mrf.mxu0
  %v1244 = vadd.f32 %v1135, %v1243
  %1245 = vmatmul.f32.gmra.mxu0 %v335
  %v1246 = vpop.f32.mrf.mxu0
  %v1247 = vadd.f32 %v1138, %v1246
  %1248 = vmatmul.f32.gmra.mxu0 %v339
  %v1249 = vpop.f32.mrf.mxu0
  %v1250 = vadd.f32 %v1141, %v1249
  %1251 = vmatmul.f32.gmra.mxu0 %v343
  %v1252 = vpop.f32.mrf.mxu0
  %v1253 = vadd.f32 %v1144, %v1252
  %1254 = vmatmul.f32.gmra.mxu0 %v347
  %v1255 = vpop.f32.mrf.mxu0
  %v1256 = vadd.f32 %v1147, %v1255
  %1257 = vmatmul.f32.gmra.mxu0 %v351
  %v1258 = vpop.f32.mrf.mxu0
  %v1259 = vadd.f32 %v1150, %v1258
  %1260 = vmatmul.f32.gmra.mxu0 %v355
  %v1261 = vpop.f32.mrf.mxu0
  %v1262 = vadd.f32 %v1153, %v1261
  %1263 = vmatmul.f32.gmra.mxu0 %v359
  %v1264 = vpop.f32.mrf.mxu0
  %v1265 = vadd.f32 %v1156, %v1264
  %1266 = vmatmul.f32.gmra.mxu0 %v363
  %v1267 = vpop.f32.mrf.mxu0
  %v1268 = vadd.f32 %v1159, %v1267
  %1269 = vmatmul.f32.gmra.mxu0 %v367
  %v1270 = vpop.f32.mrf.mxu0
  %v1271 = vadd.f32 %v1162, %v1270
  %1272 = vmatmul.f32.gmra.mxu0 %v371
  %v1273 = vpop.f32.mrf.mxu0
  %v1274 = vadd.f32 %v1165, %v1273
  %1275 = vmatmul.f32.gmra.mxu0 %v375
  %v1276 = vpop.f32.mrf.mxu0
  %1277 = vmatmul.f32.gmra.mxu0 %v379
  %v1278 = vpop.f32.mrf.mxu0
  %1279 = vmatmul.f32.gmra.mxu0 %v383
  %v1280 = vpop.f32.mrf.mxu0
  %v1281 = vadd.f32 %v1172, %v1280
  %1282 = vmatmul.f32.gmra.mxu0 %v387
  %v1283 = vpop.f32.mrf.mxu0
  %v1284 = vadd.f32 %v1175, %v1283
  %1285 = vmatmul.f32.gmra.mxu0 %v391
  %v1286 = vpop.f32.mrf.mxu0
  %v1287 = vadd.f32 %v1178, %v1286
  %1288 = vmatmul.f32.gmra.mxu0 %v395
  %v1289 = vpop.f32.mrf.mxu0
  %v1290 = vadd.f32 %v1181, %v1289
  %1291 = vmatmul.f32.gmra.mxu0 %v399
  %v1292 = vpop.f32.mrf.mxu0
  %v1293 = vadd.f32 %v1184, %v1292
  %1294 = vmatmul.f32.gmra.mxu0 %v403
  %v1295 = vpop.f32.mrf.mxu0
  %v1296 = vadd.f32 %v1187, %v1295
  %1297 = vmatmul.f32.gmra.mxu0 %v407
  %v1298 = vpop.f32.mrf.mxu0
  %v1299 = vadd.f32 %v1190, %v1298
  %1300 = vmatmul.f32.gmra.mxu0 %v411
  %v1301 = vpop.f32.mrf.mxu0
  %v1302 = vadd.f32 %v1193, %v1301
  %1303 = vmatmul.f32.gmra.mxu0 %v415
  %v1304 = vpop.f32.mrf.mxu0
  %v1305 = vadd.f32 %v1196, %v1304
  %1306 = vmatmul.f32.gmra.mxu0 %v419
  %v1307 = vpop.f32.mrf.mxu0
  %v1308 = vadd.f32 %v1199, %v1307
  %1309 = vmatmul.f32.gmra.mxu0 %v423
  %v1310 = vpop.f32.mrf.mxu0
  %v1311 = vadd.f32 %v1202, %v1310
  %1312 = vmatmul.f32.gmra.mxu0 %v427
  %v1313 = vpop.f32.mrf.mxu0
  %v1314 = vadd.f32 %v1205, %v1313
  %1315 = vmatmul.f32.gmra.mxu0 %v431
  %v1316 = vpop.f32.mrf.mxu0
  %v1317 = vadd.f32 %v1208, %v1316
  %1318 = vmatmul.f32.gmra.mxu0 %v435
  %v1319 = vpop.f32.mrf.mxu0
  %v1320 = vadd.f32 %v1211, %v1319
  %1321 = vmatmul.f32.gmra.mxu0 %v439
  %v1322 = vpop.f32.mrf.mxu0
  %1323 = vmatmul.f32.gmra.mxu0 %v443
  %v1324 = vpop.f32.mrf.mxu0
  %1325 = vdwg.mxu0
  %1326 = vmatpush.msra.mxu0 %v133
  %1327 = vmatpush.msra.mxu0 %v131
  %1328 = vmatpush.msra.mxu0 %v129
  %1329 = vmatpush.msra.mxu0 %v127
  %1330 = vmatpush.msra.mxu0 %v125
  %1331 = vmatpush.msra.mxu0 %v123
  %1332 = vmatpush.msra.mxu0 %v121
  %1333 = vmatpush.msra.mxu0 %v119
  %1334 = vmatpush.msra.mxu0 %v117
  %1335 = vmatpush.msra.mxu0 %v115
  %1336 = vmatpush.msra.mxu0 %v113
  %1337 = vmatpush.msra.mxu0 %v111
  %1338 = vmatpush.msra.mxu0 %v109
  %1339 = vmatpush.msra.mxu0 %v107
  %1340 = vmatpush.msra.mxu0 %v105
  %1341 = vmatpush.msra.mxu0 %v103
  %1342 = vmatmul.f32.gmra.mxu0 %v320
  %v1343 = vpop.f32.mrf.mxu0
  %v1344 = vadd.f32 %v1235, %v1343
  %1345 = vmatmul.f32.gmra.mxu0 %v324
  %v1346 = vpop.f32.mrf.mxu0
  %v1347 = vadd.f32 %v1238, %v1346
  %1348 = vmatmul.f32.gmra.mxu0 %v328
  %v1349 = vpop.f32.mrf.mxu0
  %v1350 = vadd.f32 %v1241, %v1349
  %1351 = vmatmul.f32.gmra.mxu0 %v332
  %v1352 = vpop.f32.mrf.mxu0
  %v1353 = vadd.f32 %v1244, %v1352
  %1354 = vmatmul.f32.gmra.mxu0 %v336
  %v1355 = vpop.f32.mrf.mxu0
  %v1356 = vadd.f32 %v1247, %v1355
  %1357 = vmatmul.f32.gmra.mxu0 %v340
  %v1358 = vpop.f32.mrf.mxu0
  %v1359 = vadd.f32 %v1250, %v1358
  %1360 = vmatmul.f32.gmra.mxu0 %v344
  %v1361 = vpop.f32.mrf.mxu0
  %v1362 = vadd.f32 %v1253, %v1361
  %1363 = vmatmul.f32.gmra.mxu0 %v348
  %v1364 = vpop.f32.mrf.mxu0
  %v1365 = vadd.f32 %v1256, %v1364
  %1366 = vmatmul.f32.gmra.mxu0 %v352
  %v1367 = vpop.f32.mrf.mxu0
  %v1368 = vadd.f32 %v1259, %v1367
  %1369 = vmatmul.f32.gmra.mxu0 %v356
  %v1370 = vpop.f32.mrf.mxu0
  %v1371 = vadd.f32 %v1262, %v1370
  %1372 = vmatmul.f32.gmra.mxu0 %v360
  %v1373 = vpop.f32.mrf.mxu0
  %v1374 = vadd.f32 %v1265, %v1373
  %1375 = vmatmul.f32.gmra.mxu0 %v364
  %v1376 = vpop.f32.mrf.mxu0
  %v1377 = vadd.f32 %v1268, %v1376
  %1378 = vmatmul.f32.gmra.mxu0 %v368
  %v1379 = vpop.f32.mrf.mxu0
  %v1380 = vadd.f32 %v1271, %v1379
  %1381 = vmatmul.f32.gmra.mxu0 %v372
  %v1382 = vpop.f32.mrf.mxu0
  %v1383 = vadd.f32 %v1274, %v1382
  %1384 = vmatmul.f32.gmra.mxu0 %v376
  %v1385 = vpop.f32.mrf.mxu0
  %1386 = vmatmul.f32.gmra.mxu0 %v380
  %v1387 = vpop.f32.mrf.mxu0
  %1388 = vmatmul.f32.gmra.mxu0 %v384
  %v1389 = vpop.f32.mrf.mxu0
  %v1390 = vadd.f32 %v1281, %v1389
  %1391 = vmatmul.f32.gmra.mxu0 %v388
  %v1392 = vpop.f32.mrf.mxu0
  %v1393 = vadd.f32 %v1284, %v1392
  %1394 = vmatmul.f32.gmra.mxu0 %v392
  %v1395 = vpop.f32.mrf.mxu0
  %v1396 = vadd.f32 %v1287, %v1395
  %1397 = vmatmul.f32.gmra.mxu0 %v396
  %v1398 = vpop.f32.mrf.mxu0
  %v1399 = vadd.f32 %v1290, %v1398
  %1400 = vmatmul.f32.gmra.mxu0 %v400
  %v1401 = vpop.f32.mrf.mxu0
  %v1402 = vadd.f32 %v1293, %v1401
  %1403 = vmatmul.f32.gmra.mxu0 %v404
  %v1404 = vpop.f32.mrf.mxu0
  %v1405 = vadd.f32 %v1296, %v1404
  %1406 = vmatmul.f32.gmra.mxu0 %v408
  %v1407 = vpop.f32.mrf.mxu0
  %v1408 = vadd.f32 %v1299, %v1407
  %1409 = vmatmul.f32.gmra.mxu0 %v412
  %v1410 = vpop.f32.mrf.mxu0
  %v1411 = vadd.f32 %v1302, %v1410
  %1412 = vmatmul.f32.gmra.mxu0 %v416
  %v1413 = vpop.f32.mrf.mxu0
  %v1414 = vadd.f32 %v1305, %v1413
  %1415 = vmatmul.f32.gmra.mxu0 %v420
  %v1416 = vpop.f32.mrf.mxu0
  %v1417 = vadd.f32 %v1308, %v1416
  %1418 = vmatmul.f32.gmra.mxu0 %v424
  %v1419 = vpop.f32.mrf.mxu0
  %v1420 = vadd.f32 %v1311, %v1419
  %1421 = vmatmul.f32.gmra.mxu0 %v428
  %v1422 = vpop.f32.mrf.mxu0
  %v1423 = vadd.f32 %v1314, %v1422
  %1424 = vmatmul.f32.gmra.mxu0 %v432
  %v1425 = vpop.f32.mrf.mxu0
  %v1426 = vadd.f32 %v1317, %v1425
  %1427 = vmatmul.f32.gmra.mxu0 %v436
  %v1428 = vpop.f32.mrf.mxu0
  %v1429 = vadd.f32 %v1320, %v1428
  %1430 = vmatmul.f32.gmra.mxu0 %v440
  %v1431 = vpop.f32.mrf.mxu0
  %1432 = vmatmul.f32.gmra.mxu0 %v444
  %v1433 = vpop.f32.mrf.mxu0
  %1434 = vdwg.mxu0
  %1435 = vmatpush.msra.mxu0 0.0
  %1436 = vmatpush.msra.mxu0 0.0
  %1437 = vmatpush.msra.mxu0 0.0
  %1438 = vmatpush.msra.mxu0 0.0
  %1439 = vmatpush.msra.mxu0 %v157
  %1440 = vmatpush.msra.mxu0 %v155
  %1441 = vmatpush.msra.mxu0 %v153
  %1442 = vmatpush.msra.mxu0 %v151
  %1443 = vmatpush.msra.mxu0 %v149
  %1444 = vmatpush.msra.mxu0 %v147
  %1445 = vmatpush.msra.mxu0 %v145
  %1446 = vmatpush.msra.mxu0 %v143
  %1447 = vmatpush.msra.mxu0 %v141
  %1448 = vmatpush.msra.mxu0 %v139
  %1449 = vmatpush.msra.mxu0 %v137
  %1450 = vmatpush.msra.mxu0 %v135
  %1451 = vmatmul.f32.gmra.mxu0 %v577
  %v1452 = vpop.f32.mrf.mxu0
  %v1453 = vadd.f32 %v1344, %v1452
  %1454 = vmatmul.f32.gmra.mxu0 %v580
  %v1455 = vpop.f32.mrf.mxu0
  %v1456 = vadd.f32 %v1347, %v1455
  %1457 = vmatmul.f32.gmra.mxu0 %v583
  %v1458 = vpop.f32.mrf.mxu0
  %v1459 = vadd.f32 %v1350, %v1458
  %1460 = vmatmul.f32.gmra.mxu0 %v586
  %v1461 = vpop.f32.mrf.mxu0
  %v1462 = vadd.f32 %v1353, %v1461
  %1463 = vmatmul.f32.gmra.mxu0 %v589
  %v1464 = vpop.f32.mrf.mxu0
  %v1465 = vadd.f32 %v1356, %v1464
  %1466 = vmatmul.f32.gmra.mxu0 %v592
  %v1467 = vpop.f32.mrf.mxu0
  %v1468 = vadd.f32 %v1359, %v1467
  %1469 = vmatmul.f32.gmra.mxu0 %v595
  %v1470 = vpop.f32.mrf.mxu0
  %v1471 = vadd.f32 %v1362, %v1470
  %1472 = vmatmul.f32.gmra.mxu0 %v598
  %v1473 = vpop.f32.mrf.mxu0
  %v1474 = vadd.f32 %v1365, %v1473
  %1475 = vmatmul.f32.gmra.mxu0 %v601
  %v1476 = vpop.f32.mrf.mxu0
  %v1477 = vadd.f32 %v1368, %v1476
  %1478 = vmatmul.f32.gmra.mxu0 %v604
  %v1479 = vpop.f32.mrf.mxu0
  %v1480 = vadd.f32 %v1371, %v1479
  %1481 = vmatmul.f32.gmra.mxu0 %v607
  %v1482 = vpop.f32.mrf.mxu0
  %v1483 = vadd.f32 %v1374, %v1482
  %1484 = vmatmul.f32.gmra.mxu0 %v610
  %v1485 = vpop.f32.mrf.mxu0
  %v1486 = vadd.f32 %v1377, %v1485
  %1487 = vmatmul.f32.gmra.mxu0 %v613
  %v1488 = vpop.f32.mrf.mxu0
  %v1489 = vadd.f32 %v1380, %v1488
  %1490 = vmatmul.f32.gmra.mxu0 %v616
  %v1491 = vpop.f32.mrf.mxu0
  %v1492 = vadd.f32 %v1383, %v1491
  %1493 = vmatmul.f32.gmra.mxu0 %v619
  %v1494 = vpop.f32.mrf.mxu0
  %1495 = vmatmul.f32.gmra.mxu0 %v622
  %v1496 = vpop.f32.mrf.mxu0
  %1497 = vmatmul.f32.gmra.mxu0 %v625
  %v1498 = vpop.f32.mrf.mxu0
  %v1499 = vadd.f32 %v1390, %v1498
  %1500 = vmatmul.f32.gmra.mxu0 %v628
  %v1501 = vpop.f32.mrf.mxu0
  %v1502 = vadd.f32 %v1393, %v1501
  %1503 = vmatmul.f32.gmra.mxu0 %v631
  %v1504 = vpop.f32.mrf.mxu0
  %v1505 = vadd.f32 %v1396, %v1504
  %1506 = vmatmul.f32.gmra.mxu0 %v634
  %v1507 = vpop.f32.mrf.mxu0
  %v1508 = vadd.f32 %v1399, %v1507
  %1509 = vmatmul.f32.gmra.mxu0 %v637
  %v1510 = vpop.f32.mrf.mxu0
  %v1511 = vadd.f32 %v1402, %v1510
  %1512 = vmatmul.f32.gmra.mxu0 %v640
  %v1513 = vpop.f32.mrf.mxu0
  %v1514 = vadd.f32 %v1405, %v1513
  %1515 = vmatmul.f32.gmra.mxu0 %v643
  %v1516 = vpop.f32.mrf.mxu0
  %v1517 = vadd.f32 %v1408, %v1516
  %1518 = vmatmul.f32.gmra.mxu0 %v646
  %v1519 = vpop.f32.mrf.mxu0
  %v1520 = vadd.f32 %v1411, %v1519
  %1521 = vmatmul.f32.gmra.mxu0 %v649
  %v1522 = vpop.f32.mrf.mxu0
  %v1523 = vadd.f32 %v1414, %v1522
  %1524 = vmatmul.f32.gmra.mxu0 %v652
  %v1525 = vpop.f32.mrf.mxu0
  %v1526 = vadd.f32 %v1417, %v1525
  %1527 = vmatmul.f32.gmra.mxu0 %v655
  %v1528 = vpop.f32.mrf.mxu0
  %v1529 = vadd.f32 %v1420, %v1528
  %1530 = vmatmul.f32.gmra.mxu0 %v658
  %v1531 = vpop.f32.mrf.mxu0
  %v1532 = vadd.f32 %v1423, %v1531
  %1533 = vmatmul.f32.gmra.mxu0 %v661
  %v1534 = vpop.f32.mrf.mxu0
  %v1535 = vadd.f32 %v1426, %v1534
  %1536 = vmatmul.f32.gmra.mxu0 %v664
  %v1537 = vpop.f32.mrf.mxu0
  %v1538 = vadd.f32 %v1429, %v1537
  %1539 = vmatmul.f32.gmra.mxu0 %v667
  %v1540 = vpop.f32.mrf.mxu0
  %1541 = vmatmul.f32.gmra.mxu0 %v670
  %v1542 = vpop.f32.mrf.mxu0
  %1543 = vdwg.mxu0
  %v1545 = vsel %vm575, %v450, 0
  %v1548 = vsel %vm575, %v454, 0
  %v1551 = vsel %vm575, %v458, 0
  %v1554 = vsel %vm575, %v462, 0
  %v1557 = vsel %vm575, %v466, 0
  %v1560 = vsel %vm575, %v470, 0
  %v1563 = vsel %vm575, %v474, 0
  %v1566 = vsel %vm575, %v478, 0
  %v1569 = vsel %vm575, %v482, 0
  %v1572 = vsel %vm575, %v486, 0
  %v1575 = vsel %vm575, %v490, 0
  %v1578 = vsel %vm575, %v494, 0
  %v1581 = vsel %vm575, %v498, 0
  %v1584 = vsel %vm575, %v502, 0
  %v1587 = vsel %vm575, %v506, 0
  %v1590 = vsel %vm575, %v510, 0
  %v1593 = vsel %vm575, %v514, 0
  %v1596 = vsel %vm575, %v518, 0
  %v1599 = vsel %vm575, %v522, 0
  %v1602 = vsel %vm575, %v526, 0
  %v1605 = vsel %vm575, %v530, 0
  %v1608 = vsel %vm575, %v534, 0
  %v1611 = vsel %vm575, %v538, 0
  %v1614 = vsel %vm575, %v542, 0
  %v1617 = vsel %vm575, %v546, 0
  %v1620 = vsel %vm575, %v550, 0
  %v1623 = vsel %vm575, %v554, 0
  %v1626 = vsel %vm575, %v558, 0
  %v1629 = vsel %vm575, %v562, 0
  %v1632 = vsel %vm575, %v566, 0
  %v1635 = vsel %vm575, %v570, 0
  %v1638 = vsel %vm575, %v574, 0
  %1640 = vmatpush.msra.mxu0 %v68
  %1641 = vmatpush.msra.mxu0 %v66
  %1642 = vmatpush.msra.mxu0 %v64
  %1643 = vmatpush.msra.mxu0 %v62
  %1644 = vmatpush.msra.mxu0 %v60
  %1645 = vmatpush.msra.mxu0 %v58
  %1646 = vmatpush.msra.mxu0 %v56
  %1647 = vmatpush.msra.mxu0 %v54
  %1648 = vmatpush.msra.mxu0 %v52
  %1649 = vmatpush.msra.mxu0 %v50
  %1650 = vmatpush.msra.mxu0 %v48
  %1651 = vmatpush.msra.mxu0 %v46
  %1652 = vmatpush.msra.mxu0 %v44
  %1653 = vmatpush.msra.mxu0 %v42
  %1654 = vmatpush.msra.mxu0 %v40
  %1655 = vmatpush.msra.mxu0 %v38
  %1656 = vmatmul.f32.gmra.mxu0 %v447
  %v1657 = vpop.f32.mrf.mxu0
  %v1658 = vadd.f32 0.0, %v1657
  %1659 = vmatmul.f32.gmra.mxu0 %v451
  %v1660 = vpop.f32.mrf.mxu0
  %v1661 = vadd.f32 0.0, %v1660
  %1662 = vmatmul.f32.gmra.mxu0 %v455
  %v1663 = vpop.f32.mrf.mxu0
  %v1664 = vadd.f32 0.0, %v1663
  %1665 = vmatmul.f32.gmra.mxu0 %v459
  %v1666 = vpop.f32.mrf.mxu0
  %v1667 = vadd.f32 0.0, %v1666
  %1668 = vmatmul.f32.gmra.mxu0 %v463
  %v1669 = vpop.f32.mrf.mxu0
  %v1670 = vadd.f32 0.0, %v1669
  %1671 = vmatmul.f32.gmra.mxu0 %v467
  %v1672 = vpop.f32.mrf.mxu0
  %v1673 = vadd.f32 0.0, %v1672
  %1674 = vmatmul.f32.gmra.mxu0 %v471
  %v1675 = vpop.f32.mrf.mxu0
  %v1676 = vadd.f32 0.0, %v1675
  %1677 = vmatmul.f32.gmra.mxu0 %v475
  %v1678 = vpop.f32.mrf.mxu0
  %v1679 = vadd.f32 0.0, %v1678
  %1680 = vmatmul.f32.gmra.mxu0 %v479
  %v1681 = vpop.f32.mrf.mxu0
  %v1682 = vadd.f32 0.0, %v1681
  %1683 = vmatmul.f32.gmra.mxu0 %v483
  %v1684 = vpop.f32.mrf.mxu0
  %v1685 = vadd.f32 0.0, %v1684
  %1686 = vmatmul.f32.gmra.mxu0 %v487
  %v1687 = vpop.f32.mrf.mxu0
  %v1688 = vadd.f32 0.0, %v1687
  %1689 = vmatmul.f32.gmra.mxu0 %v491
  %v1690 = vpop.f32.mrf.mxu0
  %v1691 = vadd.f32 0.0, %v1690
  %1692 = vmatmul.f32.gmra.mxu0 %v495
  %v1693 = vpop.f32.mrf.mxu0
  %v1694 = vadd.f32 0.0, %v1693
  %1695 = vmatmul.f32.gmra.mxu0 %v499
  %v1696 = vpop.f32.mrf.mxu0
  %v1697 = vadd.f32 0.0, %v1696
  %1698 = vmatmul.f32.gmra.mxu0 %v503
  %v1699 = vpop.f32.mrf.mxu0
  %1700 = vmatmul.f32.gmra.mxu0 %v507
  %v1701 = vpop.f32.mrf.mxu0
  %1702 = vmatmul.f32.gmra.mxu0 %v511
  %v1703 = vpop.f32.mrf.mxu0
  %v1704 = vadd.f32 0.0, %v1703
  %1705 = vmatmul.f32.gmra.mxu0 %v515
  %v1706 = vpop.f32.mrf.mxu0
  %v1707 = vadd.f32 0.0, %v1706
  %1708 = vmatmul.f32.gmra.mxu0 %v519
  %v1709 = vpop.f32.mrf.mxu0
  %v1710 = vadd.f32 0.0, %v1709
  %1711 = vmatmul.f32.gmra.mxu0 %v523
  %v1712 = vpop.f32.mrf.mxu0
  %v1713 = vadd.f32 0.0, %v1712
  %1714 = vmatmul.f32.gmra.mxu0 %v527
  %v1715 = vpop.f32.mrf.mxu0
  %v1716 = vadd.f32 0.0, %v1715
  %1717 = vmatmul.f32.gmra.mxu0 %v531
  %v1718 = vpop.f32.mrf.mxu0
  %v1719 = vadd.f32 0.0, %v1718
  %1720 = vmatmul.f32.gmra.mxu0 %v535
  %v1721 = vpop.f32.mrf.mxu0
  %v1722 = vadd.f32 0.0, %v1721
  %1723 = vmatmul.f32.gmra.mxu0 %v539
  %v1724 = vpop.f32.mrf.mxu0
  %v1725 = vadd.f32 0.0, %v1724
  %1726 = vmatmul.f32.gmra.mxu0 %v543
  %v1727 = vpop.f32.mrf.mxu0
  %v1728 = vadd.f32 0.0, %v1727
  %1729 = vmatmul.f32.gmra.mxu0 %v547
  %v1730 = vpop.f32.mrf.mxu0
  %v1731 = vadd.f32 0.0, %v1730
  %1732 = vmatmul.f32.gmra.mxu0 %v551
  %v1733 = vpop.f32.mrf.mxu0
  %v1734 = vadd.f32 0.0, %v1733
  %1735 = vmatmul.f32.gmra.mxu0 %v555
  %v1736 = vpop.f32.mrf.mxu0
  %v1737 = vadd.f32 0.0, %v1736
  %1738 = vmatmul.f32.gmra.mxu0 %v559
  %v1739 = vpop.f32.mrf.mxu0
  %v1740 = vadd.f32 0.0, %v1739
  %1741 = vmatmul.f32.gmra.mxu0 %v563
  %v1742 = vpop.f32.mrf.mxu0
  %v1743 = vadd.f32 0.0, %v1742
  %1744 = vmatmul.f32.gmra.mxu0 %v567
  %v1745 = vpop.f32.mrf.mxu0
  %1746 = vmatmul.f32.gmra.mxu0 %v571
  %v1747 = vpop.f32.mrf.mxu0
  %1748 = vdwg.mxu0
  %1749 = vmatpush.msra.mxu0 %v100
  %1750 = vmatpush.msra.mxu0 %v98
  %1751 = vmatpush.msra.mxu0 %v96
  %1752 = vmatpush.msra.mxu0 %v94
  %1753 = vmatpush.msra.mxu0 %v92
  %1754 = vmatpush.msra.mxu0 %v90
  %1755 = vmatpush.msra.mxu0 %v88
  %1756 = vmatpush.msra.mxu0 %v86
  %1757 = vmatpush.msra.mxu0 %v84
  %1758 = vmatpush.msra.mxu0 %v82
  %1759 = vmatpush.msra.mxu0 %v80
  %1760 = vmatpush.msra.mxu0 %v78
  %1761 = vmatpush.msra.mxu0 %v76
  %1762 = vmatpush.msra.mxu0 %v74
  %1763 = vmatpush.msra.mxu0 %v72
  %1764 = vmatpush.msra.mxu0 %v70
  %1765 = vmatmul.f32.gmra.mxu0 %v448
  %v1766 = vpop.f32.mrf.mxu0
  %v1767 = vadd.f32 %v1658, %v1766
  %1768 = vmatmul.f32.gmra.mxu0 %v452
  %v1769 = vpop.f32.mrf.mxu0
  %v1770 = vadd.f32 %v1661, %v1769
  %1771 = vmatmul.f32.gmra.mxu0 %v456
  %v1772 = vpop.f32.mrf.mxu0
  %v1773 = vadd.f32 %v1664, %v1772
  %1774 = vmatmul.f32.gmra.mxu0 %v460
  %v1775 = vpop.f32.mrf.mxu0
  %v1776 = vadd.f32 %v1667, %v1775
  %1777 = vmatmul.f32.gmra.mxu0 %v464
  %v1778 = vpop.f32.mrf.mxu0
  %v1779 = vadd.f32 %v1670, %v1778
  %1780 = vmatmul.f32.gmra.mxu0 %v468
  %v1781 = vpop.f32.mrf.mxu0
  %v1782 = vadd.f32 %v1673, %v1781
  %1783 = vmatmul.f32.gmra.mxu0 %v472
  %v1784 = vpop.f32.mrf.mxu0
  %v1785 = vadd.f32 %v1676, %v1784
  %1786 = vmatmul.f32.gmra.mxu0 %v476
  %v1787 = vpop.f32.mrf.mxu0
  %v1788 = vadd.f32 %v1679, %v1787
  %1789 = vmatmul.f32.gmra.mxu0 %v480
  %v1790 = vpop.f32.mrf.mxu0
  %v1791 = vadd.f32 %v1682, %v1790
  %1792 = vmatmul.f32.gmra.mxu0 %v484
  %v1793 = vpop.f32.mrf.mxu0
  %v1794 = vadd.f32 %v1685, %v1793
  %1795 = vmatmul.f32.gmra.mxu0 %v488
  %v1796 = vpop.f32.mrf.mxu0
  %v1797 = vadd.f32 %v1688, %v1796
  %1798 = vmatmul.f32.gmra.mxu0 %v492
  %v1799 = vpop.f32.mrf.mxu0
  %v1800 = vadd.f32 %v1691, %v1799
  %1801 = vmatmul.f32.gmra.mxu0 %v496
  %v1802 = vpop.f32.mrf.mxu0
  %v1803 = vadd.f32 %v1694, %v1802
  %1804 = vmatmul.f32.gmra.mxu0 %v500
  %v1805 = vpop.f32.mrf.mxu0
  %v1806 = vadd.f32 %v1697, %v1805
  %1807 = vmatmul.f32.gmra.mxu0 %v504
  %v1808 = vpop.f32.mrf.mxu0
  %1809 = vmatmul.f32.gmra.mxu0 %v508
  %v1810 = vpop.f32.mrf.mxu0
  %1811 = vmatmul.f32.gmra.mxu0 %v512
  %v1812 = vpop.f32.mrf.mxu0
  %v1813 = vadd.f32 %v1704, %v1812
  %1814 = vmatmul.f32.gmra.mxu0 %v516
  %v1815 = vpop.f32.mrf.mxu0
  %v1816 = vadd.f32 %v1707, %v1815
  %1817 = vmatmul.f32.gmra.mxu0 %v520
  %v1818 = vpop.f32.mrf.mxu0
  %v1819 = vadd.f32 %v1710, %v1818
  %1820 = vmatmul.f32.gmra.mxu0 %v524
  %v1821 = vpop.f32.mrf.mxu0
  %v1822 = vadd.f32 %v1713, %v1821
  %1823 = vmatmul.f32.gmra.mxu0 %v528
  %v1824 = vpop.f32.mrf.mxu0
  %v1825 = vadd.f32 %v1716, %v1824
  %1826 = vmatmul.f32.gmra.mxu0 %v532
  %v1827 = vpop.f32.mrf.mxu0
  %v1828 = vadd.f32 %v1719, %v1827
  %1829 = vmatmul.f32.gmra.mxu0 %v536
  %v1830 = vpop.f32.mrf.mxu0
  %v1831 = vadd.f32 %v1722, %v1830
  %1832 = vmatmul.f32.gmra.mxu0 %v540
  %v1833 = vpop.f32.mrf.mxu0
  %v1834 = vadd.f32 %v1725, %v1833
  %1835 = vmatmul.f32.gmra.mxu0 %v544
  %v1836 = vpop.f32.mrf.mxu0
  %v1837 = vadd.f32 %v1728, %v1836
  %1838 = vmatmul.f32.gmra.mxu0 %v548
  %v1839 = vpop.f32.mrf.mxu0
  %v1840 = vadd.f32 %v1731, %v1839
  %1841 = vmatmul.f32.gmra.mxu0 %v552
  %v1842 = vpop.f32.mrf.mxu0
  %v1843 = vadd.f32 %v1734, %v1842
  %1844 = vmatmul.f32.gmra.mxu0 %v556
  %v1845 = vpop.f32.mrf.mxu0
  %v1846 = vadd.f32 %v1737, %v1845
  %1847 = vmatmul.f32.gmra.mxu0 %v560
  %v1848 = vpop.f32.mrf.mxu0
  %v1849 = vadd.f32 %v1740, %v1848
  %1850 = vmatmul.f32.gmra.mxu0 %v564
  %v1851 = vpop.f32.mrf.mxu0
  %v1852 = vadd.f32 %v1743, %v1851
  %1853 = vmatmul.f32.gmra.mxu0 %v568
  %v1854 = vpop.f32.mrf.mxu0
  %1855 = vmatmul.f32.gmra.mxu0 %v572
  %v1856 = vpop.f32.mrf.mxu0
  %1857 = vdwg.mxu0
  %1858 = vmatpush.msra.mxu0 %v132
  %1859 = vmatpush.msra.mxu0 %v130
  %1860 = vmatpush.msra.mxu0 %v128
  %1861 = vmatpush.msra.mxu0 %v126
  %1862 = vmatpush.msra.mxu0 %v124
  %1863 = vmatpush.msra.mxu0 %v122
  %1864 = vmatpush.msra.mxu0 %v120
  %1865 = vmatpush.msra.mxu0 %v118
  %1866 = vmatpush.msra.mxu0 %v116
  %1867 = vmatpush.msra.mxu0 %v114
  %1868 = vmatpush.msra.mxu0 %v112
  %1869 = vmatpush.msra.mxu0 %v110
  %1870 = vmatpush.msra.mxu0 %v108
  %1871 = vmatpush.msra.mxu0 %v106
  %1872 = vmatpush.msra.mxu0 %v104
  %1873 = vmatpush.msra.mxu0 %v102
  %1874 = vmatmul.f32.gmra.mxu0 %v449
  %v1875 = vpop.f32.mrf.mxu0
  %v1876 = vadd.f32 %v1767, %v1875
  %1877 = vmatmul.f32.gmra.mxu0 %v453
  %v1878 = vpop.f32.mrf.mxu0
  %v1879 = vadd.f32 %v1770, %v1878
  %1880 = vmatmul.f32.gmra.mxu0 %v457
  %v1881 = vpop.f32.mrf.mxu0
  %v1882 = vadd.f32 %v1773, %v1881
  %1883 = vmatmul.f32.gmra.mxu0 %v461
  %v1884 = vpop.f32.mrf.mxu0
  %v1885 = vadd.f32 %v1776, %v1884
  %1886 = vmatmul.f32.gmra.mxu0 %v465
  %v1887 = vpop.f32.mrf.mxu0
  %v1888 = vadd.f32 %v1779, %v1887
  %1889 = vmatmul.f32.gmra.mxu0 %v469
  %v1890 = vpop.f32.mrf.mxu0
  %v1891 = vadd.f32 %v1782, %v1890
  %1892 = vmatmul.f32.gmra.mxu0 %v473
  %v1893 = vpop.f32.mrf.mxu0
  %v1894 = vadd.f32 %v1785, %v1893
  %1895 = vmatmul.f32.gmra.mxu0 %v477
  %v1896 = vpop.f32.mrf.mxu0
  %v1897 = vadd.f32 %v1788, %v1896
  %1898 = vmatmul.f32.gmra.mxu0 %v481
  %v1899 = vpop.f32.mrf.mxu0
  %v1900 = vadd.f32 %v1791, %v1899
  %1901 = vmatmul.f32.gmra.mxu0 %v485
  %v1902 = vpop.f32.mrf.mxu0
  %v1903 = vadd.f32 %v1794, %v1902
  %1904 = vmatmul.f32.gmra.mxu0 %v489
  %v1905 = vpop.f32.mrf.mxu0
  %v1906 = vadd.f32 %v1797, %v1905
  %1907 = vmatmul.f32.gmra.mxu0 %v493
  %v1908 = vpop.f32.mrf.mxu0
  %v1909 = vadd.f32 %v1800, %v1908
  %1910 = vmatmul.f32.gmra.mxu0 %v497
  %v1911 = vpop.f32.mrf.mxu0
  %v1912 = vadd.f32 %v1803, %v1911
  %1913 = vmatmul.f32.gmra.mxu0 %v501
  %v1914 = vpop.f32.mrf.mxu0
  %v1915 = vadd.f32 %v1806, %v1914
  %1916 = vmatmul.f32.gmra.mxu0 %v505
  %v1917 = vpop.f32.mrf.mxu0
  %1918 = vmatmul.f32.gmra.mxu0 %v509
  %v1919 = vpop.f32.mrf.mxu0
  %1920 = vmatmul.f32.gmra.mxu0 %v513
  %v1921 = vpop.f32.mrf.mxu0
  %v1922 = vadd.f32 %v1813, %v1921
  %1923 = vmatmul.f32.gmra.mxu0 %v517
  %v1924 = vpop.f32.mrf.mxu0
  %v1925 = vadd.f32 %v1816, %v1924
  %1926 = vmatmul.f32.gmra.mxu0 %v521
  %v1927 = vpop.f32.mrf.mxu0
  %v1928 = vadd.f32 %v1819, %v1927
  %1929 = vmatmul.f32.gmra.mxu0 %v525
  %v1930 = vpop.f32.mrf.mxu0
  %v1931 = vadd.f32 %v1822, %v1930
  %1932 = vmatmul.f32.gmra.mxu0 %v529
  %v1933 = vpop.f32.mrf.mxu0
  %v1934 = vadd.f32 %v1825, %v1933
  %1935 = vmatmul.f32.gmra.mxu0 %v533
  %v1936 = vpop.f32.mrf.mxu0
  %v1937 = vadd.f32 %v1828, %v1936
  %1938 = vmatmul.f32.gmra.mxu0 %v537
  %v1939 = vpop.f32.mrf.mxu0
  %v1940 = vadd.f32 %v1831, %v1939
  %1941 = vmatmul.f32.gmra.mxu0 %v541
  %v1942 = vpop.f32.mrf.mxu0
  %v1943 = vadd.f32 %v1834, %v1942
  %1944 = vmatmul.f32.gmra.mxu0 %v545
  %v1945 = vpop.f32.mrf.mxu0
  %v1946 = vadd.f32 %v1837, %v1945
  %1947 = vmatmul.f32.gmra.mxu0 %v549
  %v1948 = vpop.f32.mrf.mxu0
  %v1949 = vadd.f32 %v1840, %v1948
  %1950 = vmatmul.f32.gmra.mxu0 %v553
  %v1951 = vpop.f32.mrf.mxu0
  %v1952 = vadd.f32 %v1843, %v1951
  %1953 = vmatmul.f32.gmra.mxu0 %v557
  %v1954 = vpop.f32.mrf.mxu0
  %v1955 = vadd.f32 %v1846, %v1954
  %1956 = vmatmul.f32.gmra.mxu0 %v561
  %v1957 = vpop.f32.mrf.mxu0
  %v1958 = vadd.f32 %v1849, %v1957
  %1959 = vmatmul.f32.gmra.mxu0 %v565
  %v1960 = vpop.f32.mrf.mxu0
  %v1961 = vadd.f32 %v1852, %v1960
  %1962 = vmatmul.f32.gmra.mxu0 %v569
  %v1963 = vpop.f32.mrf.mxu0
  %1964 = vmatmul.f32.gmra.mxu0 %v573
  %v1965 = vpop.f32.mrf.mxu0
  %1966 = vdwg.mxu0
  %1967 = vmatpush.msra.mxu0 0.0
  %1968 = vmatpush.msra.mxu0 0.0
  %1969 = vmatpush.msra.mxu0 0.0
  %1970 = vmatpush.msra.mxu0 0.0
  %1971 = vmatpush.msra.mxu0 %v156
  %1972 = vmatpush.msra.mxu0 %v154
  %1973 = vmatpush.msra.mxu0 %v152
  %1974 = vmatpush.msra.mxu0 %v150
  %1975 = vmatpush.msra.mxu0 %v148
  %1976 = vmatpush.msra.mxu0 %v146
  %1977 = vmatpush.msra.mxu0 %v144
  %1978 = vmatpush.msra.mxu0 %v142
  %1979 = vmatpush.msra.mxu0 %v140
  %1980 = vmatpush.msra.mxu0 %v138
  %1981 = vmatpush.msra.mxu0 %v136
  %1982 = vmatpush.msra.mxu0 %v134
  %1983 = vmatmul.f32.gmra.mxu0 %v1545
  %v1984 = vpop.f32.mrf.mxu0
  %v1985 = vadd.f32 %v1876, %v1984
  %1986 = vmatmul.f32.gmra.mxu0 %v1548
  %v1987 = vpop.f32.mrf.mxu0
  %v1988 = vadd.f32 %v1879, %v1987
  %1989 = vmatmul.f32.gmra.mxu0 %v1551
  %v1990 = vpop.f32.mrf.mxu0
  %v1991 = vadd.f32 %v1882, %v1990
  %1992 = vmatmul.f32.gmra.mxu0 %v1554
  %v1993 = vpop.f32.mrf.mxu0
  %v1994 = vadd.f32 %v1885, %v1993
  %1995 = vmatmul.f32.gmra.mxu0 %v1557
  %v1996 = vpop.f32.mrf.mxu0
  %v1997 = vadd.f32 %v1888, %v1996
  %1998 = vmatmul.f32.gmra.mxu0 %v1560
  %v1999 = vpop.f32.mrf.mxu0
  %v2000 = vadd.f32 %v1891, %v1999
  %2001 = vmatmul.f32.gmra.mxu0 %v1563
  %v2002 = vpop.f32.mrf.mxu0
  %v2003 = vadd.f32 %v1894, %v2002
  %2004 = vmatmul.f32.gmra.mxu0 %v1566
  %v2005 = vpop.f32.mrf.mxu0
  %v2006 = vadd.f32 %v1897, %v2005
  %2007 = vmatmul.f32.gmra.mxu0 %v1569
  %v2008 = vpop.f32.mrf.mxu0
  %v2009 = vadd.f32 %v1900, %v2008
  %2010 = vmatmul.f32.gmra.mxu0 %v1572
  %v2011 = vpop.f32.mrf.mxu0
  %v2012 = vadd.f32 %v1903, %v2011
  %2013 = vmatmul.f32.gmra.mxu0 %v1575
  %v2014 = vpop.f32.mrf.mxu0
  %v2015 = vadd.f32 %v1906, %v2014
  %2016 = vmatmul.f32.gmra.mxu0 %v1578
  %v2017 = vpop.f32.mrf.mxu0
  %v2018 = vadd.f32 %v1909, %v2017
  %2019 = vmatmul.f32.gmra.mxu0 %v1581
  %v2020 = vpop.f32.mrf.mxu0
  %v2021 = vadd.f32 %v1912, %v2020
  %2022 = vmatmul.f32.gmra.mxu0 %v1584
  %v2023 = vpop.f32.mrf.mxu0
  %v2024 = vadd.f32 %v1915, %v2023
  %2025 = vmatmul.f32.gmra.mxu0 %v1587
  %v2026 = vpop.f32.mrf.mxu0
  %2027 = vmatmul.f32.gmra.mxu0 %v1590
  %v2028 = vpop.f32.mrf.mxu0
  %2029 = vmatmul.f32.gmra.mxu0 %v1593
  %v2030 = vpop.f32.mrf.mxu0
  %v2031 = vadd.f32 %v1922, %v2030
  %2032 = vmatmul.f32.gmra.mxu0 %v1596
  %v2033 = vpop.f32.mrf.mxu0
  %v2034 = vadd.f32 %v1925, %v2033
  %2035 = vmatmul.f32.gmra.mxu0 %v1599
  %v2036 = vpop.f32.mrf.mxu0
  %v2037 = vadd.f32 %v1928, %v2036
  %2038 = vmatmul.f32.gmra.mxu0 %v1602
  %v2039 = vpop.f32.mrf.mxu0
  %v2040 = vadd.f32 %v1931, %v2039
  %2041 = vmatmul.f32.gmra.mxu0 %v1605
  %v2042 = vpop.f32.mrf.mxu0
  %v2043 = vadd.f32 %v1934, %v2042
  %2044 = vmatmul.f32.gmra.mxu0 %v1608
  %v2045 = vpop.f32.mrf.mxu0
  %v2046 = vadd.f32 %v1937, %v2045
  %2047 = vmatmul.f32.gmra.mxu0 %v1611
  %v2048 = vpop.f32.mrf.mxu0
  %v2049 = vadd.f32 %v1940, %v2048
  %2050 = vmatmul.f32.gmra.mxu0 %v1614
  %v2051 = vpop.f32.mrf.mxu0
  %v2052 = vadd.f32 %v1943, %v2051
  %2053 = vmatmul.f32.gmra.mxu0 %v1617
  %v2054 = vpop.f32.mrf.mxu0
  %v2055 = vadd.f32 %v1946, %v2054
  %2056 = vmatmul.f32.gmra.mxu0 %v1620
  %v2057 = vpop.f32.mrf.mxu0
  %v2058 = vadd.f32 %v1949, %v2057
  %2059 = vmatmul.f32.gmra.mxu0 %v1623
  %v2060 = vpop.f32.mrf.mxu0
  %v2061 = vadd.f32 %v1952, %v2060
  %2062 = vmatmul.f32.gmra.mxu0 %v1626
  %v2063 = vpop.f32.mrf.mxu0
  %v2064 = vadd.f32 %v1955, %v2063
  %2065 = vmatmul.f32.gmra.mxu0 %v1629
  %v2066 = vpop.f32.mrf.mxu0
  %v2067 = vadd.f32 %v1958, %v2066
  %2068 = vmatmul.f32.gmra.mxu0 %v1632
  %v2069 = vpop.f32.mrf.mxu0
  %v2070 = vadd.f32 %v1961, %v2069
  %2071 = vmatmul.f32.gmra.mxu0 %v1635
  %v2072 = vpop.f32.mrf.mxu0
  %2073 = vmatmul.f32.gmra.mxu0 %v1638
  %v2074 = vpop.f32.mrf.mxu0
  %2075 = vdwg.mxu0
  %2076 = vmatpush.msra.mxu0 %v69
  %2077 = vmatpush.msra.mxu0 %v67
  %2078 = vmatpush.msra.mxu0 %v65
  %2079 = vmatpush.msra.mxu0 %v63
  %2080 = vmatpush.msra.mxu0 %v61
  %2081 = vmatpush.msra.mxu0 %v59
  %2082 = vmatpush.msra.mxu0 %v57
  %2083 = vmatpush.msra.mxu0 %v55
  %2084 = vmatpush.msra.mxu0 %v53
  %2085 = vmatpush.msra.mxu0 %v51
  %2086 = vmatpush.msra.mxu0 %v49
  %2087 = vmatpush.msra.mxu0 %v47
  %2088 = vmatpush.msra.mxu0 %v45
  %2089 = vmatpush.msra.mxu0 %v43
  %2090 = vmatpush.msra.mxu0 %v41
  %2091 = vmatpush.msra.mxu0 %v39
  %2092 = vmatmul.f32.gmra.mxu0 %v447
  %v2093 = vpop.f32.mrf.mxu0
  %v2094 = vadd.f32 0.0, %v2093
  %2095 = vmatmul.f32.gmra.mxu0 %v451
  %v2096 = vpop.f32.mrf.mxu0
  %v2097 = vadd.f32 0.0, %v2096
  %2098 = vmatmul.f32.gmra.mxu0 %v455
  %v2099 = vpop.f32.mrf.mxu0
  %v2100 = vadd.f32 0.0, %v2099
  %2101 = vmatmul.f32.gmra.mxu0 %v459
  %v2102 = vpop.f32.mrf.mxu0
  %v2103 = vadd.f32 0.0, %v2102
  %2104 = vmatmul.f32.gmra.mxu0 %v463
  %v2105 = vpop.f32.mrf.mxu0
  %v2106 = vadd.f32 0.0, %v2105
  %2107 = vmatmul.f32.gmra.mxu0 %v467
  %v2108 = vpop.f32.mrf.mxu0
  %v2109 = vadd.f32 0.0, %v2108
  %2110 = vmatmul.f32.gmra.mxu0 %v471
  %v2111 = vpop.f32.mrf.mxu0
  %v2112 = vadd.f32 0.0, %v2111
  %2113 = vmatmul.f32.gmra.mxu0 %v475
  %v2114 = vpop.f32.mrf.mxu0
  %v2115 = vadd.f32 0.0, %v2114
  %2116 = vmatmul.f32.gmra.mxu0 %v479
  %v2117 = vpop.f32.mrf.mxu0
  %v2118 = vadd.f32 0.0, %v2117
  %2119 = vmatmul.f32.gmra.mxu0 %v483
  %v2120 = vpop.f32.mrf.mxu0
  %v2121 = vadd.f32 0.0, %v2120
  %2122 = vmatmul.f32.gmra.mxu0 %v487
  %v2123 = vpop.f32.mrf.mxu0
  %v2124 = vadd.f32 0.0, %v2123
  %2125 = vmatmul.f32.gmra.mxu0 %v491
  %v2126 = vpop.f32.mrf.mxu0
  %v2127 = vadd.f32 0.0, %v2126
  %2128 = vmatmul.f32.gmra.mxu0 %v495
  %v2129 = vpop.f32.mrf.mxu0
  %v2130 = vadd.f32 0.0, %v2129
  %2131 = vmatmul.f32.gmra.mxu0 %v499
  %v2132 = vpop.f32.mrf.mxu0
  %v2133 = vadd.f32 0.0, %v2132
  %2134 = vmatmul.f32.gmra.mxu0 %v503
  %v2135 = vpop.f32.mrf.mxu0
  %2136 = vmatmul.f32.gmra.mxu0 %v507
  %v2137 = vpop.f32.mrf.mxu0
  %2138 = vmatmul.f32.gmra.mxu0 %v511
  %v2139 = vpop.f32.mrf.mxu0
  %v2140 = vadd.f32 0.0, %v2139
  %2141 = vmatmul.f32.gmra.mxu0 %v515
  %v2142 = vpop.f32.mrf.mxu0
  %v2143 = vadd.f32 0.0, %v2142
  %2144 = vmatmul.f32.gmra.mxu0 %v519
  %v2145 = vpop.f32.mrf.mxu0
  %v2146 = vadd.f32 0.0, %v2145
  %2147 = vmatmul.f32.gmra.mxu0 %v523
  %v2148 = vpop.f32.mrf.mxu0
  %v2149 = vadd.f32 0.0, %v2148
  %2150 = vmatmul.f32.gmra.mxu0 %v527
  %v2151 = vpop.f32.mrf.mxu0
  %v2152 = vadd.f32 0.0, %v2151
  %2153 = vmatmul.f32.gmra.mxu0 %v531
  %v2154 = vpop.f32.mrf.mxu0
  %v2155 = vadd.f32 0.0, %v2154
  %2156 = vmatmul.f32.gmra.mxu0 %v535
  %v2157 = vpop.f32.mrf.mxu0
  %v2158 = vadd.f32 0.0, %v2157
  %2159 = vmatmul.f32.gmra.mxu0 %v539
  %v2160 = vpop.f32.mrf.mxu0
  %v2161 = vadd.f32 0.0, %v2160
  %2162 = vmatmul.f32.gmra.mxu0 %v543
  %v2163 = vpop.f32.mrf.mxu0
  %v2164 = vadd.f32 0.0, %v2163
  %2165 = vmatmul.f32.gmra.mxu0 %v547
  %v2166 = vpop.f32.mrf.mxu0
  %v2167 = vadd.f32 0.0, %v2166
  %2168 = vmatmul.f32.gmra.mxu0 %v551
  %v2169 = vpop.f32.mrf.mxu0
  %v2170 = vadd.f32 0.0, %v2169
  %2171 = vmatmul.f32.gmra.mxu0 %v555
  %v2172 = vpop.f32.mrf.mxu0
  %v2173 = vadd.f32 0.0, %v2172
  %2174 = vmatmul.f32.gmra.mxu0 %v559
  %v2175 = vpop.f32.mrf.mxu0
  %v2176 = vadd.f32 0.0, %v2175
  %2177 = vmatmul.f32.gmra.mxu0 %v563
  %v2178 = vpop.f32.mrf.mxu0
  %v2179 = vadd.f32 0.0, %v2178
  %2180 = vmatmul.f32.gmra.mxu0 %v567
  %v2181 = vpop.f32.mrf.mxu0
  %2182 = vmatmul.f32.gmra.mxu0 %v571
  %v2183 = vpop.f32.mrf.mxu0
  %2184 = vdwg.mxu0
  %2185 = vmatpush.msra.mxu0 %v101
  %2186 = vmatpush.msra.mxu0 %v99
  %2187 = vmatpush.msra.mxu0 %v97
  %2188 = vmatpush.msra.mxu0 %v95
  %2189 = vmatpush.msra.mxu0 %v93
  %2190 = vmatpush.msra.mxu0 %v91
  %2191 = vmatpush.msra.mxu0 %v89
  %2192 = vmatpush.msra.mxu0 %v87
  %2193 = vmatpush.msra.mxu0 %v85
  %2194 = vmatpush.msra.mxu0 %v83
  %2195 = vmatpush.msra.mxu0 %v81
  %2196 = vmatpush.msra.mxu0 %v79
  %2197 = vmatpush.msra.mxu0 %v77
  %2198 = vmatpush.msra.mxu0 %v75
  %2199 = vmatpush.msra.mxu0 %v73
  %2200 = vmatpush.msra.mxu0 %v71
  %2201 = vmatmul.f32.gmra.mxu0 %v448
  %v2202 = vpop.f32.mrf.mxu0
  %v2203 = vadd.f32 %v2094, %v2202
  %2204 = vmatmul.f32.gmra.mxu0 %v452
  %v2205 = vpop.f32.mrf.mxu0
  %v2206 = vadd.f32 %v2097, %v2205
  %2207 = vmatmul.f32.gmra.mxu0 %v456
  %v2208 = vpop.f32.mrf.mxu0
  %v2209 = vadd.f32 %v2100, %v2208
  %2210 = vmatmul.f32.gmra.mxu0 %v460
  %v2211 = vpop.f32.mrf.mxu0
  %v2212 = vadd.f32 %v2103, %v2211
  %2213 = vmatmul.f32.gmra.mxu0 %v464
  %v2214 = vpop.f32.mrf.mxu0
  %v2215 = vadd.f32 %v2106, %v2214
  %2216 = vmatmul.f32.gmra.mxu0 %v468
  %v2217 = vpop.f32.mrf.mxu0
  %v2218 = vadd.f32 %v2109, %v2217
  %2219 = vmatmul.f32.gmra.mxu0 %v472
  %v2220 = vpop.f32.mrf.mxu0
  %v2221 = vadd.f32 %v2112, %v2220
  %2222 = vmatmul.f32.gmra.mxu0 %v476
  %v2223 = vpop.f32.mrf.mxu0
  %v2224 = vadd.f32 %v2115, %v2223
  %2225 = vmatmul.f32.gmra.mxu0 %v480
  %v2226 = vpop.f32.mrf.mxu0
  %v2227 = vadd.f32 %v2118, %v2226
  %2228 = vmatmul.f32.gmra.mxu0 %v484
  %v2229 = vpop.f32.mrf.mxu0
  %v2230 = vadd.f32 %v2121, %v2229
  %2231 = vmatmul.f32.gmra.mxu0 %v488
  %v2232 = vpop.f32.mrf.mxu0
  %v2233 = vadd.f32 %v2124, %v2232
  %2234 = vmatmul.f32.gmra.mxu0 %v492
  %v2235 = vpop.f32.mrf.mxu0
  %v2236 = vadd.f32 %v2127, %v2235
  %2237 = vmatmul.f32.gmra.mxu0 %v496
  %v2238 = vpop.f32.mrf.mxu0
  %v2239 = vadd.f32 %v2130, %v2238
  %2240 = vmatmul.f32.gmra.mxu0 %v500
  %v2241 = vpop.f32.mrf.mxu0
  %v2242 = vadd.f32 %v2133, %v2241
  %2243 = vmatmul.f32.gmra.mxu0 %v504
  %v2244 = vpop.f32.mrf.mxu0
  %2245 = vmatmul.f32.gmra.mxu0 %v508
  %v2246 = vpop.f32.mrf.mxu0
  %2247 = vmatmul.f32.gmra.mxu0 %v512
  %v2248 = vpop.f32.mrf.mxu0
  %v2249 = vadd.f32 %v2140, %v2248
  %2250 = vmatmul.f32.gmra.mxu0 %v516
  %v2251 = vpop.f32.mrf.mxu0
  %v2252 = vadd.f32 %v2143, %v2251
  %2253 = vmatmul.f32.gmra.mxu0 %v520
  %v2254 = vpop.f32.mrf.mxu0
  %v2255 = vadd.f32 %v2146, %v2254
  %2256 = vmatmul.f32.gmra.mxu0 %v524
  %v2257 = vpop.f32.mrf.mxu0
  %v2258 = vadd.f32 %v2149, %v2257
  %2259 = vmatmul.f32.gmra.mxu0 %v528
  %v2260 = vpop.f32.mrf.mxu0
  %v2261 = vadd.f32 %v2152, %v2260
  %2262 = vmatmul.f32.gmra.mxu0 %v532
  %v2263 = vpop.f32.mrf.mxu0
  %v2264 = vadd.f32 %v2155, %v2263
  %2265 = vmatmul.f32.gmra.mxu0 %v536
  %v2266 = vpop.f32.mrf.mxu0
  %v2267 = vadd.f32 %v2158, %v2266
  %2268 = vmatmul.f32.gmra.mxu0 %v540
  %v2269 = vpop.f32.mrf.mxu0
  %v2270 = vadd.f32 %v2161, %v2269
  %2271 = vmatmul.f32.gmra.mxu0 %v544
  %v2272 = vpop.f32.mrf.mxu0
  %v2273 = vadd.f32 %v2164, %v2272
  %2274 = vmatmul.f32.gmra.mxu0 %v548
  %v2275 = vpop.f32.mrf.mxu0
  %v2276 = vadd.f32 %v2167, %v2275
  %2277 = vmatmul.f32.gmra.mxu0 %v552
  %v2278 = vpop.f32.mrf.mxu0
  %v2279 = vadd.f32 %v2170, %v2278
  %2280 = vmatmul.f32.gmra.mxu0 %v556
  %v2281 = vpop.f32.mrf.mxu0
  %v2282 = vadd.f32 %v2173, %v2281
  %2283 = vmatmul.f32.gmra.mxu0 %v560
  %v2284 = vpop.f32.mrf.mxu0
  %v2285 = vadd.f32 %v2176, %v2284
  %2286 = vmatmul.f32.gmra.mxu0 %v564
  %v2287 = vpop.f32.mrf.mxu0
  %v2288 = vadd.f32 %v2179, %v2287
  %2289 = vmatmul.f32.gmra.mxu0 %v568
  %v2290 = vpop.f32.mrf.mxu0
  %2291 = vmatmul.f32.gmra.mxu0 %v572
  %v2292 = vpop.f32.mrf.mxu0
  %2293 = vdwg.mxu0
  %2294 = vmatpush.msra.mxu0 %v133
  %2295 = vmatpush.msra.mxu0 %v131
  %2296 = vmatpush.msra.mxu0 %v129
  %2297 = vmatpush.msra.mxu0 %v127
  %2298 = vmatpush.msra.mxu0 %v125
  %2299 = vmatpush.msra.mxu0 %v123
  %2300 = vmatpush.msra.mxu0 %v121
  %2301 = vmatpush.msra.mxu0 %v119
  %2302 = vmatpush.msra.mxu0 %v117
  %2303 = vmatpush.msra.mxu0 %v115
  %2304 = vmatpush.msra.mxu0 %v113
  %2305 = vmatpush.msra.mxu0 %v111
  %2306 = vmatpush.msra.mxu0 %v109
  %2307 = vmatpush.msra.mxu0 %v107
  %2308 = vmatpush.msra.mxu0 %v105
  %2309 = vmatpush.msra.mxu0 %v103
  %2310 = vmatmul.f32.gmra.mxu0 %v449
  %v2311 = vpop.f32.mrf.mxu0
  %v2312 = vadd.f32 %v2203, %v2311
  %2313 = vmatmul.f32.gmra.mxu0 %v453
  %v2314 = vpop.f32.mrf.mxu0
  %v2315 = vadd.f32 %v2206, %v2314
  %2316 = vmatmul.f32.gmra.mxu0 %v457
  %v2317 = vpop.f32.mrf.mxu0
  %v2318 = vadd.f32 %v2209, %v2317
  %2319 = vmatmul.f32.gmra.mxu0 %v461
  %v2320 = vpop.f32.mrf.mxu0
  %v2321 = vadd.f32 %v2212, %v2320
  %2322 = vmatmul.f32.gmra.mxu0 %v465
  %v2323 = vpop.f32.mrf.mxu0
  %v2324 = vadd.f32 %v2215, %v2323
  %2325 = vmatmul.f32.gmra.mxu0 %v469
  %v2326 = vpop.f32.mrf.mxu0
  %v2327 = vadd.f32 %v2218, %v2326
  %2328 = vmatmul.f32.gmra.mxu0 %v473
  %v2329 = vpop.f32.mrf.mxu0
  %v2330 = vadd.f32 %v2221, %v2329
  %2331 = vmatmul.f32.gmra.mxu0 %v477
  %v2332 = vpop.f32.mrf.mxu0
  %v2333 = vadd.f32 %v2224, %v2332
  %2334 = vmatmul.f32.gmra.mxu0 %v481
  %v2335 = vpop.f32.mrf.mxu0
  %v2336 = vadd.f32 %v2227, %v2335
  %2337 = vmatmul.f32.gmra.mxu0 %v485
  %v2338 = vpop.f32.mrf.mxu0
  %v2339 = vadd.f32 %v2230, %v2338
  %2340 = vmatmul.f32.gmra.mxu0 %v489
  %v2341 = vpop.f32.mrf.mxu0
  %v2342 = vadd.f32 %v2233, %v2341
  %2343 = vmatmul.f32.gmra.mxu0 %v493
  %v2344 = vpop.f32.mrf.mxu0
  %v2345 = vadd.f32 %v2236, %v2344
  %2346 = vmatmul.f32.gmra.mxu0 %v497
  %v2347 = vpop.f32.mrf.mxu0
  %v2348 = vadd.f32 %v2239, %v2347
  %2349 = vmatmul.f32.gmra.mxu0 %v501
  %v2350 = vpop.f32.mrf.mxu0
  %v2351 = vadd.f32 %v2242, %v2350
  %2352 = vmatmul.f32.gmra.mxu0 %v505
  %v2353 = vpop.f32.mrf.mxu0
  %2354 = vmatmul.f32.gmra.mxu0 %v509
  %v2355 = vpop.f32.mrf.mxu0
  %2356 = vmatmul.f32.gmra.mxu0 %v513
  %v2357 = vpop.f32.mrf.mxu0
  %v2358 = vadd.f32 %v2249, %v2357
  %2359 = vmatmul.f32.gmra.mxu0 %v517
  %v2360 = vpop.f32.mrf.mxu0
  %v2361 = vadd.f32 %v2252, %v2360
  %2362 = vmatmul.f32.gmra.mxu0 %v521
  %v2363 = vpop.f32.mrf.mxu0
  %v2364 = vadd.f32 %v2255, %v2363
  %2365 = vmatmul.f32.gmra.mxu0 %v525
  %v2366 = vpop.f32.mrf.mxu0
  %v2367 = vadd.f32 %v2258, %v2366
  %2368 = vmatmul.f32.gmra.mxu0 %v529
  %v2369 = vpop.f32.mrf.mxu0
  %v2370 = vadd.f32 %v2261, %v2369
  %2371 = vmatmul.f32.gmra.mxu0 %v533
  %v2372 = vpop.f32.mrf.mxu0
  %v2373 = vadd.f32 %v2264, %v2372
  %2374 = vmatmul.f32.gmra.mxu0 %v537
  %v2375 = vpop.f32.mrf.mxu0
  %v2376 = vadd.f32 %v2267, %v2375
  %2377 = vmatmul.f32.gmra.mxu0 %v541
  %v2378 = vpop.f32.mrf.mxu0
  %v2379 = vadd.f32 %v2270, %v2378
  %2380 = vmatmul.f32.gmra.mxu0 %v545
  %v2381 = vpop.f32.mrf.mxu0
  %v2382 = vadd.f32 %v2273, %v2381
  %2383 = vmatmul.f32.gmra.mxu0 %v549
  %v2384 = vpop.f32.mrf.mxu0
  %v2385 = vadd.f32 %v2276, %v2384
  %2386 = vmatmul.f32.gmra.mxu0 %v553
  %v2387 = vpop.f32.mrf.mxu0
  %v2388 = vadd.f32 %v2279, %v2387
  %2389 = vmatmul.f32.gmra.mxu0 %v557
  %v2390 = vpop.f32.mrf.mxu0
  %v2391 = vadd.f32 %v2282, %v2390
  %2392 = vmatmul.f32.gmra.mxu0 %v561
  %v2393 = vpop.f32.mrf.mxu0
  %v2394 = vadd.f32 %v2285, %v2393
  %2395 = vmatmul.f32.gmra.mxu0 %v565
  %v2396 = vpop.f32.mrf.mxu0
  %v2397 = vadd.f32 %v2288, %v2396
  %2398 = vmatmul.f32.gmra.mxu0 %v569
  %v2399 = vpop.f32.mrf.mxu0
  %2400 = vmatmul.f32.gmra.mxu0 %v573
  %v2401 = vpop.f32.mrf.mxu0
  %2402 = vdwg.mxu0
  %2403 = vmatpush.msra.mxu0 0.0
  %2404 = vmatpush.msra.mxu0 0.0
  %2405 = vmatpush.msra.mxu0 0.0
  %2406 = vmatpush.msra.mxu0 0.0
  %2407 = vmatpush.msra.mxu0 %v157
  %2408 = vmatpush.msra.mxu0 %v155
  %2409 = vmatpush.msra.mxu0 %v153
  %2410 = vmatpush.msra.mxu0 %v151
  %2411 = vmatpush.msra.mxu0 %v149
  %2412 = vmatpush.msra.mxu0 %v147
  %2413 = vmatpush.msra.mxu0 %v145
  %2414 = vmatpush.msra.mxu0 %v143
  %2415 = vmatpush.msra.mxu0 %v141
  %2416 = vmatpush.msra.mxu0 %v139
  %2417 = vmatpush.msra.mxu0 %v137
  %2418 = vmatpush.msra.mxu0 %v135
  %2419 = vmatmul.f32.gmra.mxu0 %v1545
  %v2420 = vpop.f32.mrf.mxu0
  %v2421 = vadd.f32 %v2312, %v2420
  %2422 = vmatmul.f32.gmra.mxu0 %v1548
  %v2423 = vpop.f32.mrf.mxu0
  %v2424 = vadd.f32 %v2315, %v2423
  %2425 = vmatmul.f32.gmra.mxu0 %v1551
  %v2426 = vpop.f32.mrf.mxu0
  %v2427 = vadd.f32 %v2318, %v2426
  %2428 = vmatmul.f32.gmra.mxu0 %v1554
  %v2429 = vpop.f32.mrf.mxu0
  %v2430 = vadd.f32 %v2321, %v2429
  %2431 = vmatmul.f32.gmra.mxu0 %v1557
  %v2432 = vpop.f32.mrf.mxu0
  %v2433 = vadd.f32 %v2324, %v2432
  %2434 = vmatmul.f32.gmra.mxu0 %v1560
  %v2435 = vpop.f32.mrf.mxu0
  %v2436 = vadd.f32 %v2327, %v2435
  %2437 = vmatmul.f32.gmra.mxu0 %v1563
  %v2438 = vpop.f32.mrf.mxu0
  %v2439 = vadd.f32 %v2330, %v2438
  %2440 = vmatmul.f32.gmra.mxu0 %v1566
  %v2441 = vpop.f32.mrf.mxu0
  %v2442 = vadd.f32 %v2333, %v2441
  %2443 = vmatmul.f32.gmra.mxu0 %v1569
  %v2444 = vpop.f32.mrf.mxu0
  %v2445 = vadd.f32 %v2336, %v2444
  %2446 = vmatmul.f32.gmra.mxu0 %v1572
  %v2447 = vpop.f32.mrf.mxu0
  %v2448 = vadd.f32 %v2339, %v2447
  %2449 = vmatmul.f32.gmra.mxu0 %v1575
  %v2450 = vpop.f32.mrf.mxu0
  %v2451 = vadd.f32 %v2342, %v2450
  %2452 = vmatmul.f32.gmra.mxu0 %v1578
  %v2453 = vpop.f32.mrf.mxu0
  %v2454 = vadd.f32 %v2345, %v2453
  %2455 = vmatmul.f32.gmra.mxu0 %v1581
  %v2456 = vpop.f32.mrf.mxu0
  %v2457 = vadd.f32 %v2348, %v2456
  %2458 = vmatmul.f32.gmra.mxu0 %v1584
  %v2459 = vpop.f32.mrf.mxu0
  %v2460 = vadd.f32 %v2351, %v2459
  %2461 = vmatmul.f32.gmra.mxu0 %v1587
  %v2462 = vpop.f32.mrf.mxu0
  %2463 = vmatmul.f32.gmra.mxu0 %v1590
  %v2464 = vpop.f32.mrf.mxu0
  %2465 = vmatmul.f32.gmra.mxu0 %v1593
  %v2466 = vpop.f32.mrf.mxu0
  %v2467 = vadd.f32 %v2358, %v2466
  %2468 = vmatmul.f32.gmra.mxu0 %v1596
  %v2469 = vpop.f32.mrf.mxu0
  %v2470 = vadd.f32 %v2361, %v2469
  %2471 = vmatmul.f32.gmra.mxu0 %v1599
  %v2472 = vpop.f32.mrf.mxu0
  %v2473 = vadd.f32 %v2364, %v2472
  %2474 = vmatmul.f32.gmra.mxu0 %v1602
  %v2475 = vpop.f32.mrf.mxu0
  %v2476 = vadd.f32 %v2367, %v2475
  %2477 = vmatmul.f32.gmra.mxu0 %v1605
  %v2478 = vpop.f32.mrf.mxu0
  %v2479 = vadd.f32 %v2370, %v2478
  %2480 = vmatmul.f32.gmra.mxu0 %v1608
  %v2481 = vpop.f32.mrf.mxu0
  %v2482 = vadd.f32 %v2373, %v2481
  %2483 = vmatmul.f32.gmra.mxu0 %v1611
  %v2484 = vpop.f32.mrf.mxu0
  %v2485 = vadd.f32 %v2376, %v2484
  %2486 = vmatmul.f32.gmra.mxu0 %v1614
  %v2487 = vpop.f32.mrf.mxu0
  %v2488 = vadd.f32 %v2379, %v2487
  %2489 = vmatmul.f32.gmra.mxu0 %v1617
  %v2490 = vpop.f32.mrf.mxu0
  %v2491 = vadd.f32 %v2382, %v2490
  %2492 = vmatmul.f32.gmra.mxu0 %v1620
  %v2493 = vpop.f32.mrf.mxu0
  %v2494 = vadd.f32 %v2385, %v2493
  %2495 = vmatmul.f32.gmra.mxu0 %v1623
  %v2496 = vpop.f32.mrf.mxu0
  %v2497 = vadd.f32 %v2388, %v2496
  %2498 = vmatmul.f32.gmra.mxu0 %v1626
  %v2499 = vpop.f32.mrf.mxu0
  %v2500 = vadd.f32 %v2391, %v2499
  %2501 = vmatmul.f32.gmra.mxu0 %v1629
  %v2502 = vpop.f32.mrf.mxu0
  %v2503 = vadd.f32 %v2394, %v2502
  %2504 = vmatmul.f32.gmra.mxu0 %v1632
  %v2505 = vpop.f32.mrf.mxu0
  %v2506 = vadd.f32 %v2397, %v2505
  %2507 = vmatmul.f32.gmra.mxu0 %v1635
  %v2508 = vpop.f32.mrf.mxu0
  %2509 = vmatmul.f32.gmra.mxu0 %v1638
  %v2510 = vpop.f32.mrf.mxu0
  %2511 = vdwg.mxu0
  %v2512 = vmax.f32 %v1017, %v1985
  %v2513 = vmax.f32 %v1453, %v2421
  %v2514 = vmax.f32 %v1020, %v1988
  %v2515 = vmax.f32 %v1456, %v2424
  %v2516 = vmax.f32 %v1023, %v1991
  %v2517 = vmax.f32 %v1459, %v2427
  %v2518 = vmax.f32 %v1026, %v1994
  %v2519 = vmax.f32 %v1462, %v2430
  %v2520 = vmax.f32 %v1029, %v1997
  %v2521 = vmax.f32 %v1465, %v2433
  %v2522 = vmax.f32 %v1032, %v2000
  %v2523 = vmax.f32 %v1468, %v2436
  %v2524 = vmax.f32 %v1035, %v2003
  %v2525 = vmax.f32 %v1471, %v2439
  %v2526 = vmax.f32 %v1038, %v2006
  %v2527 = vmax.f32 %v1474, %v2442
  %v2528 = vmax.f32 %v1041, %v2009
  %v2529 = vmax.f32 %v1477, %v2445
  %v2530 = vmax.f32 %v1044, %v2012
  %v2531 = vmax.f32 %v1480, %v2448
  %v2532 = vmax.f32 %v1047, %v2015
  %v2533 = vmax.f32 %v1483, %v2451
  %v2534 = vmax.f32 %v1050, %v2018
  %v2535 = vmax.f32 %v1486, %v2454
  %v2536 = vmax.f32 %v1053, %v2021
  %v2537 = vmax.f32 %v1489, %v2457
  %v2538 = vmax.f32 %v1056, %v2024
  %v2539 = vmax.f32 %v1492, %v2460
  %v2540 = vmax.f32 %v1063, %v2031
  %v2541 = vmax.f32 %v1499, %v2467
  %v2542 = vmax.f32 %v1066, %v2034
  %v2543 = vmax.f32 %v1502, %v2470
  %v2544 = vmax.f32 %v1069, %v2037
  %v2545 = vmax.f32 %v1505, %v2473
  %v2546 = vmax.f32 %v1072, %v2040
  %v2547 = vmax.f32 %v1508, %v2476
  %v2548 = vmax.f32 %v1075, %v2043
  %v2549 = vmax.f32 %v1511, %v2479
  %v2550 = vmax.f32 %v1078, %v2046
  %v2551 = vmax.f32 %v1514, %v2482
  %v2552 = vmax.f32 %v1081, %v2049
  %v2553 = vmax.f32 %v1517, %v2485
  %v2554 = vmax.f32 %v1084, %v2052
  %v2555 = vmax.f32 %v1520, %v2488
  %v2556 = vmax.f32 %v1087, %v2055
  %v2557 = vmax.f32 %v1523, %v2491
  %v2558 = vmax.f32 %v1090, %v2058
  %v2559 = vmax.f32 %v1526, %v2494
  %v2560 = vmax.f32 %v1093, %v2061
  %v2561 = vmax.f32 %v1529, %v2497
  %v2562 = vmax.f32 %v1096, %v2064
  %v2563 = vmax.f32 %v1532, %v2500
  %v2564 = vmax.f32 %v1099, %v2067
  %v2565 = vmax.f32 %v1535, %v2503
  %v2566 = vmax.f32 %v1102, %v2070
  %v2567 = vmax.f32 %v1538, %v2506
  %v2568 = vld [vmem:[%s2] sm:$0x3]
  %v2570 = vperm.slane %v2568, 0
  %v2571 = vperm.slane %v2568, 1
  %v2574 = vadd.f32 %v2512, %v2570
  %v2575 = vadd.f32 %v2513, %v2571
  %v2576 = vadd.f32 %v2514, %v2570
  %v2577 = vadd.f32 %v2515, %v2571
  %v2578 = vadd.f32 %v2516, %v2570
  %v2579 = vadd.f32 %v2517, %v2571
  %v2580 = vadd.f32 %v2518, %v2570
  %v2581 = vadd.f32 %v2519, %v2571
  %v2582 = vadd.f32 %v2520, %v2570
  %v2583 = vadd.f32 %v2521, %v2571
  %v2584 = vadd.f32 %v2522, %v2570
  %v2585 = vadd.f32 %v2523, %v2571
  %v2586 = vadd.f32 %v2524, %v2570
  %v2587 = vadd.f32 %v2525, %v2571
  %v2588 = vadd.f32 %v2526, %v2570
  %v2589 = vadd.f32 %v2527, %v2571
  %v2590 = vadd.f32 %v2528, %v2570
  %v2591 = vadd.f32 %v2529, %v2571
  %v2592 = vadd.f32 %v2530, %v2570
  %v2593 = vadd.f32 %v2531, %v2571
  %v2594 = vadd.f32 %v2532, %v2570
  %v2595 = vadd.f32 %v2533, %v2571
  %v2596 = vadd.f32 %v2534, %v2570
  %v2597 = vadd.f32 %v2535, %v2571
  %v2598 = vadd.f32 %v2536, %v2570
  %v2599 = vadd.f32 %v2537, %v2571
  %v2600 = vadd.f32 %v2538, %v2570
  %v2601 = vadd.f32 %v2539, %v2571
  %v2602 = vadd.f32 %v2540, %v2570
  %v2603 = vadd.f32 %v2541, %v2571
  %v2604 = vadd.f32 %v2542, %v2570
  %v2605 = vadd.f32 %v2543, %v2571
  %v2606 = vadd.f32 %v2544, %v2570
  %v2607 = vadd.f32 %v2545, %v2571
  %v2608 = vadd.f32 %v2546, %v2570
  %v2609 = vadd.f32 %v2547, %v2571
  %v2610 = vadd.f32 %v2548, %v2570
  %v2611 = vadd.f32 %v2549, %v2571
  %v2612 = vadd.f32 %v2550, %v2570
  %v2613 = vadd.f32 %v2551, %v2571
  %v2614 = vadd.f32 %v2552, %v2570
  %v2615 = vadd.f32 %v2553, %v2571
  %v2616 = vadd.f32 %v2554, %v2570
  %v2617 = vadd.f32 %v2555, %v2571
  %v2618 = vadd.f32 %v2556, %v2570
  %v2619 = vadd.f32 %v2557, %v2571
  %v2620 = vadd.f32 %v2558, %v2570
  %v2621 = vadd.f32 %v2559, %v2571
  %v2622 = vadd.f32 %v2560, %v2570
  %v2623 = vadd.f32 %v2561, %v2571
  %v2624 = vadd.f32 %v2562, %v2570
  %v2625 = vadd.f32 %v2563, %v2571
  %v2626 = vadd.f32 %v2564, %v2570
  %v2627 = vadd.f32 %v2565, %v2571
  %v2628 = vadd.f32 %v2566, %v2570
  %v2629 = vadd.f32 %v2567, %v2571
  %v2630 = vmax.f32 %v2574, 0.0
  %v2631 = vmax.f32 %v2575, 0.0
  %v2632 = vmax.f32 %v2576, 0.0
  %v2633 = vmax.f32 %v2577, 0.0
  %v2634 = vmax.f32 %v2578, 0.0
  %v2635 = vmax.f32 %v2579, 0.0
  %v2636 = vmax.f32 %v2580, 0.0
  %v2637 = vmax.f32 %v2581, 0.0
  %v2638 = vmax.f32 %v2582, 0.0
  %v2639 = vmax.f32 %v2583, 0.0
  %v2640 = vmax.f32 %v2584, 0.0
  %v2641 = vmax.f32 %v2585, 0.0
  %v2642 = vmax.f32 %v2586, 0.0
  %v2643 = vmax.f32 %v2587, 0.0
  %v2644 = vmax.f32 %v2588, 0.0
  %v2645 = vmax.f32 %v2589, 0.0
  %v2646 = vmax.f32 %v2590, 0.0
  %v2647 = vmax.f32 %v2591, 0.0
  %v2648 = vmax.f32 %v2592, 0.0
  %v2649 = vmax.f32 %v2593, 0.0
  %v2650 = vmax.f32 %v2594, 0.0
  %v2651 = vmax.f32 %v2595, 0.0
  %v2652 = vmax.f32 %v2596, 0.0
  %v2653 = vmax.f32 %v2597, 0.0
  %v2654 = vmax.f32 %v2598, 0.0
  %v2655 = vmax.f32 %v2599, 0.0
  %v2656 = vmax.f32 %v2600, 0.0
  %v2657 = vmax.f32 %v2601, 0.0
  %v2658 = vmax.f32 %v2602, 0.0
  %v2659 = vmax.f32 %v2603, 0.0
  %v2660 = vmax.f32 %v2604, 0.0
  %v2661 = vmax.f32 %v2605, 0.0
  %v2662 = vmax.f32 %v2606, 0.0
  %v2663 = vmax.f32 %v2607, 0.0
  %v2664 = vmax.f32 %v2608, 0.0
  %v2665 = vmax.f32 %v2609, 0.0
  %v2666 = vmax.f32 %v2610, 0.0
  %v2667 = vmax.f32 %v2611, 0.0
  %v2668 = vmax.f32 %v2612, 0.0
  %v2669 = vmax.f32 %v2613, 0.0
  %v2670 = vmax.f32 %v2614, 0.0
  %v2671 = vmax.f32 %v2615, 0.0
  %v2672 = vmax.f32 %v2616, 0.0
  %v2673 = vmax.f32 %v2617, 0.0
  %v2674 = vmax.f32 %v2618, 0.0
  %v2675 = vmax.f32 %v2619, 0.0
  %v2676 = vmax.f32 %v2620, 0.0
  %v2677 = vmax.f32 %v2621, 0.0
  %v2678 = vmax.f32 %v2622, 0.0
  %v2679 = vmax.f32 %v2623, 0.0
  %v2680 = vmax.f32 %v2624, 0.0
  %v2681 = vmax.f32 %v2625, 0.0
  %v2682 = vmax.f32 %v2626, 0.0
  %v2683 = vmax.f32 %v2627, 0.0
  %v2684 = vmax.f32 %v2628, 0.0
  %v2685 = vmax.f32 %v2629, 0.0
  %v2686 = vmax.f32 %v2630, %v2631
  %v2687 = vmax.f32 %v2632, %v2633
  %v2688 = vmax.f32 %v2634, %v2635
  %v2689 = vmax.f32 %v2636, %v2637
  %v2690 = vmax.f32 %v2638, %v2639
  %v2691 = vmax.f32 %v2640, %v2641
  %v2692 = vmax.f32 %v2642, %v2643
  %v2693 = vmax.f32 %v2644, %v2645
  %v2694 = vmax.f32 %v2646, %v2647
  %v2695 = vmax.f32 %v2648, %v2649
  %v2696 = vmax.f32 %v2650, %v2651
  %v2697 = vmax.f32 %v2652, %v2653
  %v2698 = vmax.f32 %v2654, %v2655
  %v2699 = vmax.f32 %v2656, %v2657
  %v2700 = vmax.f32 %v2658, %v2659
  %v2701 = vmax.f32 %v2660, %v2661
  %v2702 = vmax.f32 %v2662, %v2663
  %v2703 = vmax.f32 %v2664, %v2665
  %v2704 = vmax.f32 %v2666, %v2667
  %v2705 = vmax.f32 %v2668, %v2669
  %v2706 = vmax.f32 %v2670, %v2671
  %v2707 = vmax.f32 %v2672, %v2673
  %v2708 = vmax.f32 %v2674, %v2675
  %v2709 = vmax.f32 %v2676, %v2677
  %v2710 = vmax.f32 %v2678, %v2679
  %v2711 = vmax.f32 %v2680, %v2681
  %v2712 = vmax.f32 %v2682, %v2683
  %v2713 = vmax.f32 %v2684, %v2685
  %v2714 = vld [vmem:[%s4] sm:$0x3]
  %v2716 = vperm.slane %v2714, 0
  %v2717 = vperm.slane %v2714, 1
  %2720 = vmatpush.msra.mxu0 %v188
  %2721 = vmatpush.msra.mxu0 %v186
  %2722 = vmatpush.msra.mxu0 %v184
  %2723 = vmatpush.msra.mxu0 %v182
  %2724 = vmatpush.msra.mxu0 %v180
  %2725 = vmatpush.msra.mxu0 %v178
  %2726 = vmatpush.msra.mxu0 %v176
  %2727 = vmatpush.msra.mxu0 %v174
  %2728 = vmatpush.msra.mxu0 %v172
  %2729 = vmatpush.msra.mxu0 %v170
  %2730 = vmatpush.msra.mxu0 %v168
  %2731 = vmatpush.msra.mxu0 %v166
  %2732 = vmatpush.msra.mxu0 %v164
  %2733 = vmatpush.msra.mxu0 %v162
  %2734 = vmatpush.msra.mxu0 %v160
  %2735 = vmatpush.msra.mxu0 %v158
  %2736 = vmatmul.f32.gmra.mxu0 %v2686
  %v2737 = vpop.f32.mrf.mxu0
  %v2738 = vadd.f32 %v2716, %v2737
  %2739 = vmatmul.f32.gmra.mxu0 %v2687
  %v2740 = vpop.f32.mrf.mxu0
  %v2741 = vadd.f32 %v2716, %v2740
  %2742 = vmatmul.f32.gmra.mxu0 %v2688
  %v2743 = vpop.f32.mrf.mxu0
  %v2744 = vadd.f32 %v2716, %v2743
  %2745 = vmatmul.f32.gmra.mxu0 %v2689
  %v2746 = vpop.f32.mrf.mxu0
  %v2747 = vadd.f32 %v2716, %v2746
  %2748 = vmatmul.f32.gmra.mxu0 %v2690
  %v2749 = vpop.f32.mrf.mxu0
  %v2750 = vadd.f32 %v2716, %v2749
  %2751 = vmatmul.f32.gmra.mxu0 %v2691
  %v2752 = vpop.f32.mrf.mxu0
  %v2753 = vadd.f32 %v2716, %v2752
  %2754 = vmatmul.f32.gmra.mxu0 %v2692
  %v2755 = vpop.f32.mrf.mxu0
  %v2756 = vadd.f32 %v2716, %v2755
  %2757 = vmatmul.f32.gmra.mxu0 %v2693
  %v2758 = vpop.f32.mrf.mxu0
  %v2759 = vadd.f32 %v2716, %v2758
  %2760 = vmatmul.f32.gmra.mxu0 %v2694
  %v2761 = vpop.f32.mrf.mxu0
  %v2762 = vadd.f32 %v2716, %v2761
  %2763 = vmatmul.f32.gmra.mxu0 %v2695
  %v2764 = vpop.f32.mrf.mxu0
  %v2765 = vadd.f32 %v2716, %v2764
  %2766 = vmatmul.f32.gmra.mxu0 %v2700
  %v2767 = vpop.f32.mrf.mxu0
  %v2768 = vadd.f32 %v2716, %v2767
  %2769 = vmatmul.f32.gmra.mxu0 %v2701
  %v2770 = vpop.f32.mrf.mxu0
  %v2771 = vadd.f32 %v2716, %v2770
  %2772 = vmatmul.f32.gmra.mxu0 %v2702
  %v2773 = vpop.f32.mrf.mxu0
  %v2774 = vadd.f32 %v2716, %v2773
  %2775 = vmatmul.f32.gmra.mxu0 %v2703
  %v2776 = vpop.f32.mrf.mxu0
  %v2777 = vadd.f32 %v2716, %v2776
  %2778 = vmatmul.f32.gmra.mxu0 %v2704
  %v2779 = vpop.f32.mrf.mxu0
  %v2780 = vadd.f32 %v2716, %v2779
  %2781 = vmatmul.f32.gmra.mxu0 %v2705
  %v2782 = vpop.f32.mrf.mxu0
  %v2783 = vadd.f32 %v2716, %v2782
  %2784 = vmatmul.f32.gmra.mxu0 %v2706
  %v2785 = vpop.f32.mrf.mxu0
  %v2786 = vadd.f32 %v2716, %v2785
  %2787 = vmatmul.f32.gmra.mxu0 %v2707
  %v2788 = vpop.f32.mrf.mxu0
  %v2789 = vadd.f32 %v2716, %v2788
  %2790 = vmatmul.f32.gmra.mxu0 %v2708
  %v2791 = vpop.f32.mrf.mxu0
  %v2792 = vadd.f32 %v2716, %v2791
  %2793 = vmatmul.f32.gmra.mxu0 %v2709
  %v2794 = vpop.f32.mrf.mxu0
  %v2795 = vadd.f32 %v2716, %v2794
  %2796 = vdwg.mxu0
  %2797 = vmatpush.msra.mxu0 %v220
  %2798 = vmatpush.msra.mxu0 %v218
  %2799 = vmatpush.msra.mxu0 %v216
  %2800 = vmatpush.msra.mxu0 %v214
  %2801 = vmatpush.msra.mxu0 %v212
  %2802 = vmatpush.msra.mxu0 %v210
  %2803 = vmatpush.msra.mxu0 %v208
  %2804 = vmatpush.msra.mxu0 %v206
  %2805 = vmatpush.msra.mxu0 %v204
  %2806 = vmatpush.msra.mxu0 %v202
  %2807 = vmatpush.msra.mxu0 %v200
  %2808 = vmatpush.msra.mxu0 %v198
  %2809 = vmatpush.msra.mxu0 %v196
  %2810 = vmatpush.msra.mxu0 %v194
  %2811 = vmatpush.msra.mxu0 %v192
  %2812 = vmatpush.msra.mxu0 %v190
  %2813 = vmatmul.f32.gmra.mxu0 %v2700
  %v2814 = vpop.f32.mrf.mxu0
  %v2815 = vadd.f32 %v2738, %v2814
  %2816 = vmatmul.f32.gmra.mxu0 %v2701
  %v2817 = vpop.f32.mrf.mxu0
  %v2818 = vadd.f32 %v2741, %v2817
  %2819 = vmatmul.f32.gmra.mxu0 %v2702
  %v2820 = vpop.f32.mrf.mxu0
  %v2821 = vadd.f32 %v2744, %v2820
  %2822 = vmatmul.f32.gmra.mxu0 %v2703
  %v2823 = vpop.f32.mrf.mxu0
  %v2824 = vadd.f32 %v2747, %v2823
  %2825 = vmatmul.f32.gmra.mxu0 %v2704
  %v2826 = vpop.f32.mrf.mxu0
  %v2827 = vadd.f32 %v2750, %v2826
  %2828 = vmatmul.f32.gmra.mxu0 %v2705
  %v2829 = vpop.f32.mrf.mxu0
  %v2830 = vadd.f32 %v2753, %v2829
  %2831 = vmatmul.f32.gmra.mxu0 %v2706
  %v2832 = vpop.f32.mrf.mxu0
  %v2833 = vadd.f32 %v2756, %v2832
  %2834 = vmatmul.f32.gmra.mxu0 %v2707
  %v2835 = vpop.f32.mrf.mxu0
  %v2836 = vadd.f32 %v2759, %v2835
  %2837 = vmatmul.f32.gmra.mxu0 %v2708
  %v2838 = vpop.f32.mrf.mxu0
  %v2839 = vadd.f32 %v2762, %v2838
  %2840 = vmatmul.f32.gmra.mxu0 %v2709
  %v2841 = vpop.f32.mrf.mxu0
  %v2842 = vadd.f32 %v2765, %v2841
  %2843 = vmatmul.f32.gmra.mxu0 %v2688
  %v2844 = vpop.f32.mrf.mxu0
  %v2845 = vadd.f32 %v2768, %v2844
  %2846 = vmatmul.f32.gmra.mxu0 %v2689
  %v2847 = vpop.f32.mrf.mxu0
  %v2848 = vadd.f32 %v2771, %v2847
  %2849 = vmatmul.f32.gmra.mxu0 %v2690
  %v2850 = vpop.f32.mrf.mxu0
  %v2851 = vadd.f32 %v2774, %v2850
  %2852 = vmatmul.f32.gmra.mxu0 %v2691
  %v2853 = vpop.f32.mrf.mxu0
  %v2854 = vadd.f32 %v2777, %v2853
  %2855 = vmatmul.f32.gmra.mxu0 %v2692
  %v2856 = vpop.f32.mrf.mxu0
  %v2857 = vadd.f32 %v2780, %v2856
  %2858 = vmatmul.f32.gmra.mxu0 %v2693
  %v2859 = vpop.f32.mrf.mxu0
  %v2860 = vadd.f32 %v2783, %v2859
  %2861 = vmatmul.f32.gmra.mxu0 %v2694
  %v2862 = vpop.f32.mrf.mxu0
  %v2863 = vadd.f32 %v2786, %v2862
  %2864 = vmatmul.f32.gmra.mxu0 %v2695
  %v2865 = vpop.f32.mrf.mxu0
  %v2866 = vadd.f32 %v2789, %v2865
  %2867 = vmatmul.f32.gmra.mxu0 %v2696
  %v2868 = vpop.f32.mrf.mxu0
  %v2869 = vadd.f32 %v2792, %v2868
  %2870 = vmatmul.f32.gmra.mxu0 %v2697
  %v2871 = vpop.f32.mrf.mxu0
  %v2872 = vadd.f32 %v2795, %v2871
  %2873 = vdwg.mxu0
  %2874 = vmatpush.msra.mxu0 %v252
  %2875 = vmatpush.msra.mxu0 %v250
  %2876 = vmatpush.msra.mxu0 %v248
  %2877 = vmatpush.msra.mxu0 %v246
  %2878 = vmatpush.msra.mxu0 %v244
  %2879 = vmatpush.msra.mxu0 %v242
  %2880 = vmatpush.msra.mxu0 %v240
  %2881 = vmatpush.msra.mxu0 %v238
  %2882 = vmatpush.msra.mxu0 %v236
  %2883 = vmatpush.msra.mxu0 %v234
  %2884 = vmatpush.msra.mxu0 %v232
  %2885 = vmatpush.msra.mxu0 %v230
  %2886 = vmatpush.msra.mxu0 %v228
  %2887 = vmatpush.msra.mxu0 %v226
  %2888 = vmatpush.msra.mxu0 %v224
  %2889 = vmatpush.msra.mxu0 %v222
  %2890 = vmatmul.f32.gmra.mxu0 %v2688
  %v2891 = vpop.f32.mrf.mxu0
  %v2892 = vadd.f32 %v2815, %v2891
  %2893 = vmatmul.f32.gmra.mxu0 %v2689
  %v2894 = vpop.f32.mrf.mxu0
  %v2895 = vadd.f32 %v2818, %v2894
  %2896 = vmatmul.f32.gmra.mxu0 %v2690
  %v2897 = vpop.f32.mrf.mxu0
  %v2898 = vadd.f32 %v2821, %v2897
  %2899 = vmatmul.f32.gmra.mxu0 %v2691
  %v2900 = vpop.f32.mrf.mxu0
  %v2901 = vadd.f32 %v2824, %v2900
  %2902 = vmatmul.f32.gmra.mxu0 %v2692
  %v2903 = vpop.f32.mrf.mxu0
  %v2904 = vadd.f32 %v2827, %v2903
  %2905 = vmatmul.f32.gmra.mxu0 %v2693
  %v2906 = vpop.f32.mrf.mxu0
  %v2907 = vadd.f32 %v2830, %v2906
  %2908 = vmatmul.f32.gmra.mxu0 %v2694
  %v2909 = vpop.f32.mrf.mxu0
  %v2910 = vadd.f32 %v2833, %v2909
  %2911 = vmatmul.f32.gmra.mxu0 %v2695
  %v2912 = vpop.f32.mrf.mxu0
  %v2913 = vadd.f32 %v2836, %v2912
  %2914 = vmatmul.f32.gmra.mxu0 %v2696
  %v2915 = vpop.f32.mrf.mxu0
  %v2916 = vadd.f32 %v2839, %v2915
  %2917 = vmatmul.f32.gmra.mxu0 %v2697
  %v2918 = vpop.f32.mrf.mxu0
  %v2919 = vadd.f32 %v2842, %v2918
  %2920 = vmatmul.f32.gmra.mxu0 %v2702
  %v2921 = vpop.f32.mrf.mxu0
  %v2922 = vadd.f32 %v2845, %v2921
  %2923 = vmatmul.f32.gmra.mxu0 %v2703
  %v2924 = vpop.f32.mrf.mxu0
  %v2925 = vadd.f32 %v2848, %v2924
  %2926 = vmatmul.f32.gmra.mxu0 %v2704
  %v2927 = vpop.f32.mrf.mxu0
  %v2928 = vadd.f32 %v2851, %v2927
  %2929 = vmatmul.f32.gmra.mxu0 %v2705
  %v2930 = vpop.f32.mrf.mxu0
  %v2931 = vadd.f32 %v2854, %v2930
  %2932 = vmatmul.f32.gmra.mxu0 %v2706
  %v2933 = vpop.f32.mrf.mxu0
  %v2934 = vadd.f32 %v2857, %v2933
  %2935 = vmatmul.f32.gmra.mxu0 %v2707
  %v2936 = vpop.f32.mrf.mxu0
  %v2937 = vadd.f32 %v2860, %v2936
  %2938 = vmatmul.f32.gmra.mxu0 %v2708
  %v2939 = vpop.f32.mrf.mxu0
  %v2940 = vadd.f32 %v2863, %v2939
  %2941 = vmatmul.f32.gmra.mxu0 %v2709
  %v2942 = vpop.f32.mrf.mxu0
  %v2943 = vadd.f32 %v2866, %v2942
  %2944 = vmatmul.f32.gmra.mxu0 %v2710
  %v2945 = vpop.f32.mrf.mxu0
  %v2946 = vadd.f32 %v2869, %v2945
  %2947 = vmatmul.f32.gmra.mxu0 %v2711
  %v2948 = vpop.f32.mrf.mxu0
  %v2949 = vadd.f32 %v2872, %v2948
  %2950 = vdwg.mxu0
  %2951 = vmatpush.msra.mxu0 %v284
  %2952 = vmatpush.msra.mxu0 %v282
  %2953 = vmatpush.msra.mxu0 %v280
  %2954 = vmatpush.msra.mxu0 %v278
  %2955 = vmatpush.msra.mxu0 %v276
  %2956 = vmatpush.msra.mxu0 %v274
  %2957 = vmatpush.msra.mxu0 %v272
  %2958 = vmatpush.msra.mxu0 %v270
  %2959 = vmatpush.msra.mxu0 %v268
  %2960 = vmatpush.msra.mxu0 %v266
  %2961 = vmatpush.msra.mxu0 %v264
  %2962 = vmatpush.msra.mxu0 %v262
  %2963 = vmatpush.msra.mxu0 %v260
  %2964 = vmatpush.msra.mxu0 %v258
  %2965 = vmatpush.msra.mxu0 %v256
  %2966 = vmatpush.msra.mxu0 %v254
  %2967 = vmatmul.f32.gmra.mxu0 %v2702
  %v2968 = vpop.f32.mrf.mxu0
  %v2969 = vadd.f32 %v2892, %v2968
  %2970 = vmatmul.f32.gmra.mxu0 %v2703
  %v2971 = vpop.f32.mrf.mxu0
  %v2972 = vadd.f32 %v2895, %v2971
  %2973 = vmatmul.f32.gmra.mxu0 %v2704
  %v2974 = vpop.f32.mrf.mxu0
  %v2975 = vadd.f32 %v2898, %v2974
  %2976 = vmatmul.f32.gmra.mxu0 %v2705
  %v2977 = vpop.f32.mrf.mxu0
  %v2978 = vadd.f32 %v2901, %v2977
  %2979 = vmatmul.f32.gmra.mxu0 %v2706
  %v2980 = vpop.f32.mrf.mxu0
  %v2981 = vadd.f32 %v2904, %v2980
  %2982 = vmatmul.f32.gmra.mxu0 %v2707
  %v2983 = vpop.f32.mrf.mxu0
  %v2984 = vadd.f32 %v2907, %v2983
  %2985 = vmatmul.f32.gmra.mxu0 %v2708
  %v2986 = vpop.f32.mrf.mxu0
  %v2987 = vadd.f32 %v2910, %v2986
  %2988 = vmatmul.f32.gmra.mxu0 %v2709
  %v2989 = vpop.f32.mrf.mxu0
  %v2990 = vadd.f32 %v2913, %v2989
  %2991 = vmatmul.f32.gmra.mxu0 %v2710
  %v2992 = vpop.f32.mrf.mxu0
  %v2993 = vadd.f32 %v2916, %v2992
  %2994 = vmatmul.f32.gmra.mxu0 %v2711
  %v2995 = vpop.f32.mrf.mxu0
  %v2996 = vadd.f32 %v2919, %v2995
  %2997 = vmatmul.f32.gmra.mxu0 %v2690
  %v2998 = vpop.f32.mrf.mxu0
  %v2999 = vadd.f32 %v2922, %v2998
  %3000 = vmatmul.f32.gmra.mxu0 %v2691
  %v3001 = vpop.f32.mrf.mxu0
  %v3002 = vadd.f32 %v2925, %v3001
  %3003 = vmatmul.f32.gmra.mxu0 %v2692
  %v3004 = vpop.f32.mrf.mxu0
  %v3005 = vadd.f32 %v2928, %v3004
  %3006 = vmatmul.f32.gmra.mxu0 %v2693
  %v3007 = vpop.f32.mrf.mxu0
  %v3008 = vadd.f32 %v2931, %v3007
  %3009 = vmatmul.f32.gmra.mxu0 %v2694
  %v3010 = vpop.f32.mrf.mxu0
  %v3011 = vadd.f32 %v2934, %v3010
  %3012 = vmatmul.f32.gmra.mxu0 %v2695
  %v3013 = vpop.f32.mrf.mxu0
  %v3014 = vadd.f32 %v2937, %v3013
  %3015 = vmatmul.f32.gmra.mxu0 %v2696
  %v3016 = vpop.f32.mrf.mxu0
  %v3017 = vadd.f32 %v2940, %v3016
  %3018 = vmatmul.f32.gmra.mxu0 %v2697
  %v3019 = vpop.f32.mrf.mxu0
  %v3020 = vadd.f32 %v2943, %v3019
  %3021 = vmatmul.f32.gmra.mxu0 %v2698
  %v3022 = vpop.f32.mrf.mxu0
  %v3023 = vadd.f32 %v2946, %v3022
  %3024 = vmatmul.f32.gmra.mxu0 %v2699
  %v3025 = vpop.f32.mrf.mxu0
  %v3026 = vadd.f32 %v2949, %v3025
  %3027 = vdwg.mxu0
  %3028 = vmatpush.msra.mxu0 %v316
  %3029 = vmatpush.msra.mxu0 %v314
  %3030 = vmatpush.msra.mxu0 %v312
  %3031 = vmatpush.msra.mxu0 %v310
  %3032 = vmatpush.msra.mxu0 %v308
  %3033 = vmatpush.msra.mxu0 %v306
  %3034 = vmatpush.msra.mxu0 %v304
  %3035 = vmatpush.msra.mxu0 %v302
  %3036 = vmatpush.msra.mxu0 %v300
  %3037 = vmatpush.msra.mxu0 %v298
  %3038 = vmatpush.msra.mxu0 %v296
  %3039 = vmatpush.msra.mxu0 %v294
  %3040 = vmatpush.msra.mxu0 %v292
  %3041 = vmatpush.msra.mxu0 %v290
  %3042 = vmatpush.msra.mxu0 %v288
  %3043 = vmatpush.msra.mxu0 %v286
  %3044 = vmatmul.f32.gmra.mxu0 %v2690
  %v3045 = vpop.f32.mrf.mxu0
  %v3046 = vadd.f32 %v2969, %v3045
  %3047 = vmatmul.f32.gmra.mxu0 %v2691
  %v3048 = vpop.f32.mrf.mxu0
  %v3049 = vadd.f32 %v2972, %v3048
  %3050 = vmatmul.f32.gmra.mxu0 %v2692
  %v3051 = vpop.f32.mrf.mxu0
  %v3052 = vadd.f32 %v2975, %v3051
  %3053 = vmatmul.f32.gmra.mxu0 %v2693
  %v3054 = vpop.f32.mrf.mxu0
  %v3055 = vadd.f32 %v2978, %v3054
  %3056 = vmatmul.f32.gmra.mxu0 %v2694
  %v3057 = vpop.f32.mrf.mxu0
  %v3058 = vadd.f32 %v2981, %v3057
  %3059 = vmatmul.f32.gmra.mxu0 %v2695
  %v3060 = vpop.f32.mrf.mxu0
  %v3061 = vadd.f32 %v2984, %v3060
  %3062 = vmatmul.f32.gmra.mxu0 %v2696
  %v3063 = vpop.f32.mrf.mxu0
  %v3064 = vadd.f32 %v2987, %v3063
  %3065 = vmatmul.f32.gmra.mxu0 %v2697
  %v3066 = vpop.f32.mrf.mxu0
  %v3067 = vadd.f32 %v2990, %v3066
  %3068 = vmatmul.f32.gmra.mxu0 %v2698
  %v3069 = vpop.f32.mrf.mxu0
  %v3070 = vadd.f32 %v2993, %v3069
  %3071 = vmatmul.f32.gmra.mxu0 %v2699
  %v3072 = vpop.f32.mrf.mxu0
  %v3073 = vadd.f32 %v2996, %v3072
  %3074 = vmatmul.f32.gmra.mxu0 %v2704
  %v3075 = vpop.f32.mrf.mxu0
  %v3076 = vadd.f32 %v2999, %v3075
  %3077 = vmatmul.f32.gmra.mxu0 %v2705
  %v3078 = vpop.f32.mrf.mxu0
  %v3079 = vadd.f32 %v3002, %v3078
  %3080 = vmatmul.f32.gmra.mxu0 %v2706
  %v3081 = vpop.f32.mrf.mxu0
  %v3082 = vadd.f32 %v3005, %v3081
  %3083 = vmatmul.f32.gmra.mxu0 %v2707
  %v3084 = vpop.f32.mrf.mxu0
  %v3085 = vadd.f32 %v3008, %v3084
  %3086 = vmatmul.f32.gmra.mxu0 %v2708
  %v3087 = vpop.f32.mrf.mxu0
  %v3088 = vadd.f32 %v3011, %v3087
  %3089 = vmatmul.f32.gmra.mxu0 %v2709
  %v3090 = vpop.f32.mrf.mxu0
  %v3091 = vadd.f32 %v3014, %v3090
  %3092 = vmatmul.f32.gmra.mxu0 %v2710
  %v3093 = vpop.f32.mrf.mxu0
  %v3094 = vadd.f32 %v3017, %v3093
  %3095 = vmatmul.f32.gmra.mxu0 %v2711
  %v3096 = vpop.f32.mrf.mxu0
  %v3097 = vadd.f32 %v3020, %v3096
  %3098 = vmatmul.f32.gmra.mxu0 %v2712
  %v3099 = vpop.f32.mrf.mxu0
  %v3100 = vadd.f32 %v3023, %v3099
  %3101 = vmatmul.f32.gmra.mxu0 %v2713
  %v3102 = vpop.f32.mrf.mxu0
  %v3103 = vadd.f32 %v3026, %v3102
  %3104 = vdwg.mxu0
  %3105 = vmatpush.msra.mxu0 %v189
  %3106 = vmatpush.msra.mxu0 %v187
  %3107 = vmatpush.msra.mxu0 %v185
  %3108 = vmatpush.msra.mxu0 %v183
  %3109 = vmatpush.msra.mxu0 %v181
  %3110 = vmatpush.msra.mxu0 %v179
  %3111 = vmatpush.msra.mxu0 %v177
  %3112 = vmatpush.msra.mxu0 %v175
  %3113 = vmatpush.msra.mxu0 %v173
  %3114 = vmatpush.msra.mxu0 %v171
  %3115 = vmatpush.msra.mxu0 %v169
  %3116 = vmatpush.msra.mxu0 %v167
  %3117 = vmatpush.msra.mxu0 %v165
  %3118 = vmatpush.msra.mxu0 %v163
  %3119 = vmatpush.msra.mxu0 %v161
  %3120 = vmatpush.msra.mxu0 %v159
  %3121 = vmatmul.f32.gmra.mxu0 %v2686
  %v3122 = vpop.f32.mrf.mxu0
  %v3123 = vadd.f32 %v2717, %v3122
  %3124 = vmatmul.f32.gmra.mxu0 %v2687
  %v3125 = vpop.f32.mrf.mxu0
  %v3126 = vadd.f32 %v2717, %v3125
  %3127 = vmatmul.f32.gmra.mxu0 %v2688
  %v3128 = vpop.f32.mrf.mxu0
  %v3129 = vadd.f32 %v2717, %v3128
  %3130 = vmatmul.f32.gmra.mxu0 %v2689
  %v3131 = vpop.f32.mrf.mxu0
  %v3132 = vadd.f32 %v2717, %v3131
  %3133 = vmatmul.f32.gmra.mxu0 %v2690
  %v3134 = vpop.f32.mrf.mxu0
  %v3135 = vadd.f32 %v2717, %v3134
  %3136 = vmatmul.f32.gmra.mxu0 %v2691
  %v3137 = vpop.f32.mrf.mxu0
  %v3138 = vadd.f32 %v2717, %v3137
  %3139 = vmatmul.f32.gmra.mxu0 %v2692
  %v3140 = vpop.f32.mrf.mxu0
  %v3141 = vadd.f32 %v2717, %v3140
  %3142 = vmatmul.f32.gmra.mxu0 %v2693
  %v3143 = vpop.f32.mrf.mxu0
  %v3144 = vadd.f32 %v2717, %v3143
  %3145 = vmatmul.f32.gmra.mxu0 %v2694
  %v3146 = vpop.f32.mrf.mxu0
  %v3147 = vadd.f32 %v2717, %v3146
  %3148 = vmatmul.f32.gmra.mxu0 %v2695
  %v3149 = vpop.f32.mrf.mxu0
  %v3150 = vadd.f32 %v2717, %v3149
  %3151 = vmatmul.f32.gmra.mxu0 %v2700
  %v3152 = vpop.f32.mrf.mxu0
  %v3153 = vadd.f32 %v2717, %v3152
  %3154 = vmatmul.f32.gmra.mxu0 %v2701
  %v3155 = vpop.f32.mrf.mxu0
  %v3156 = vadd.f32 %v2717, %v3155
  %3157 = vmatmul.f32.gmra.mxu0 %v2702
  %v3158 = vpop.f32.mrf.mxu0
  %v3159 = vadd.f32 %v2717, %v3158
  %3160 = vmatmul.f32.gmra.mxu0 %v2703
  %v3161 = vpop.f32.mrf.mxu0
  %v3162 = vadd.f32 %v2717, %v3161
  %3163 = vmatmul.f32.gmra.mxu0 %v2704
  %v3164 = vpop.f32.mrf.mxu0
  %v3165 = vadd.f32 %v2717, %v3164
  %3166 = vmatmul.f32.gmra.mxu0 %v2705
  %v3167 = vpop.f32.mrf.mxu0
  %v3168 = vadd.f32 %v2717, %v3167
  %3169 = vmatmul.f32.gmra.mxu0 %v2706
  %v3170 = vpop.f32.mrf.mxu0
  %v3171 = vadd.f32 %v2717, %v3170
  %3172 = vmatmul.f32.gmra.mxu0 %v2707
  %v3173 = vpop.f32.mrf.mxu0
  %v3174 = vadd.f32 %v2717, %v3173
  %3175 = vmatmul.f32.gmra.mxu0 %v2708
  %v3176 = vpop.f32.mrf.mxu0
  %v3177 = vadd.f32 %v2717, %v3176
  %3178 = vmatmul.f32.gmra.mxu0 %v2709
  %v3179 = vpop.f32.mrf.mxu0
  %v3180 = vadd.f32 %v2717, %v3179
  %3181 = vdwg.mxu0
  %3182 = vmatpush.msra.mxu0 %v221
  %3183 = vmatpush.msra.mxu0 %v219
  %3184 = vmatpush.msra.mxu0 %v217
  %3185 = vmatpush.msra.mxu0 %v215
  %3186 = vmatpush.msra.mxu0 %v213
  %3187 = vmatpush.msra.mxu0 %v211
  %3188 = vmatpush.msra.mxu0 %v209
  %3189 = vmatpush.msra.mxu0 %v207
  %3190 = vmatpush.msra.mxu0 %v205
  %3191 = vmatpush.msra.mxu0 %v203
  %3192 = vmatpush.msra.mxu0 %v201
  %3193 = vmatpush.msra.mxu0 %v199
  %3194 = vmatpush.msra.mxu0 %v197
  %3195 = vmatpush.msra.mxu0 %v195
  %3196 = vmatpush.msra.mxu0 %v193
  %3197 = vmatpush.msra.mxu0 %v191
  %3198 = vmatmul.f32.gmra.mxu0 %v2700
  %v3199 = vpop.f32.mrf.mxu0
  %v3200 = vadd.f32 %v3123, %v3199
  %3201 = vmatmul.f32.gmra.mxu0 %v2701
  %v3202 = vpop.f32.mrf.mxu0
  %v3203 = vadd.f32 %v3126, %v3202
  %3204 = vmatmul.f32.gmra.mxu0 %v2702
  %v3205 = vpop.f32.mrf.mxu0
  %v3206 = vadd.f32 %v3129, %v3205
  %3207 = vmatmul.f32.gmra.mxu0 %v2703
  %v3208 = vpop.f32.mrf.mxu0
  %v3209 = vadd.f32 %v3132, %v3208
  %3210 = vmatmul.f32.gmra.mxu0 %v2704
  %v3211 = vpop.f32.mrf.mxu0
  %v3212 = vadd.f32 %v3135, %v3211
  %3213 = vmatmul.f32.gmra.mxu0 %v2705
  %v3214 = vpop.f32.mrf.mxu0
  %v3215 = vadd.f32 %v3138, %v3214
  %3216 = vmatmul.f32.gmra.mxu0 %v2706
  %v3217 = vpop.f32.mrf.mxu0
  %v3218 = vadd.f32 %v3141, %v3217
  %3219 = vmatmul.f32.gmra.mxu0 %v2707
  %v3220 = vpop.f32.mrf.mxu0
  %v3221 = vadd.f32 %v3144, %v3220
  %3222 = vmatmul.f32.gmra.mxu0 %v2708
  %v3223 = vpop.f32.mrf.mxu0
  %v3224 = vadd.f32 %v3147, %v3223
  %3225 = vmatmul.f32.gmra.mxu0 %v2709
  %v3226 = vpop.f32.mrf.mxu0
  %v3227 = vadd.f32 %v3150, %v3226
  %3228 = vmatmul.f32.gmra.mxu0 %v2688
  %v3229 = vpop.f32.mrf.mxu0
  %v3230 = vadd.f32 %v3153, %v3229
  %3231 = vmatmul.f32.gmra.mxu0 %v2689
  %v3232 = vpop.f32.mrf.mxu0
  %v3233 = vadd.f32 %v3156, %v3232
  %3234 = vmatmul.f32.gmra.mxu0 %v2690
  %v3235 = vpop.f32.mrf.mxu0
  %v3236 = vadd.f32 %v3159, %v3235
  %3237 = vmatmul.f32.gmra.mxu0 %v2691
  %v3238 = vpop.f32.mrf.mxu0
  %v3239 = vadd.f32 %v3162, %v3238
  %3240 = vmatmul.f32.gmra.mxu0 %v2692
  %v3241 = vpop.f32.mrf.mxu0
  %v3242 = vadd.f32 %v3165, %v3241
  %3243 = vmatmul.f32.gmra.mxu0 %v2693
  %v3244 = vpop.f32.mrf.mxu0
  %v3245 = vadd.f32 %v3168, %v3244
  %3246 = vmatmul.f32.gmra.mxu0 %v2694
  %v3247 = vpop.f32.mrf.mxu0
  %v3248 = vadd.f32 %v3171, %v3247
  %3249 = vmatmul.f32.gmra.mxu0 %v2695
  %v3250 = vpop.f32.mrf.mxu0
  %v3251 = vadd.f32 %v3174, %v3250
  %3252 = vmatmul.f32.gmra.mxu0 %v2696
  %v3253 = vpop.f32.mrf.mxu0
  %v3254 = vadd.f32 %v3177, %v3253
  %3255 = vmatmul.f32.gmra.mxu0 %v2697
  %v3256 = vpop.f32.mrf.mxu0
  %v3257 = vadd.f32 %v3180, %v3256
  %3258 = vdwg.mxu0
  %3259 = vmatpush.msra.mxu0 %v253
  %3260 = vmatpush.msra.mxu0 %v251
  %3261 = vmatpush.msra.mxu0 %v249
  %3262 = vmatpush.msra.mxu0 %v247
  %3263 = vmatpush.msra.mxu0 %v245
  %3264 = vmatpush.msra.mxu0 %v243
  %3265 = vmatpush.msra.mxu0 %v241
  %3266 = vmatpush.msra.mxu0 %v239
  %3267 = vmatpush.msra.mxu0 %v237
  %3268 = vmatpush.msra.mxu0 %v235
  %3269 = vmatpush.msra.mxu0 %v233
  %3270 = vmatpush.msra.mxu0 %v231
  %3271 = vmatpush.msra.mxu0 %v229
  %3272 = vmatpush.msra.mxu0 %v227
  %3273 = vmatpush.msra.mxu0 %v225
  %3274 = vmatpush.msra.mxu0 %v223
  %3275 = vmatmul.f32.gmra.mxu0 %v2688
  %v3276 = vpop.f32.mrf.mxu0
  %v3277 = vadd.f32 %v3200, %v3276
  %3278 = vmatmul.f32.gmra.mxu0 %v2689
  %v3279 = vpop.f32.mrf.mxu0
  %v3280 = vadd.f32 %v3203, %v3279
  %3281 = vmatmul.f32.gmra.mxu0 %v2690
  %v3282 = vpop.f32.mrf.mxu0
  %v3283 = vadd.f32 %v3206, %v3282
  %3284 = vmatmul.f32.gmra.mxu0 %v2691
  %v3285 = vpop.f32.mrf.mxu0
  %v3286 = vadd.f32 %v3209, %v3285
  %3287 = vmatmul.f32.gmra.mxu0 %v2692
  %v3288 = vpop.f32.mrf.mxu0
  %v3289 = vadd.f32 %v3212, %v3288
  %3290 = vmatmul.f32.gmra.mxu0 %v2693
  %v3291 = vpop.f32.mrf.mxu0
  %v3292 = vadd.f32 %v3215, %v3291
  %3293 = vmatmul.f32.gmra.mxu0 %v2694
  %v3294 = vpop.f32.mrf.mxu0
  %v3295 = vadd.f32 %v3218, %v3294
  %3296 = vmatmul.f32.gmra.mxu0 %v2695
  %v3297 = vpop.f32.mrf.mxu0
  %v3298 = vadd.f32 %v3221, %v3297
  %3299 = vmatmul.f32.gmra.mxu0 %v2696
  %v3300 = vpop.f32.mrf.mxu0
  %v3301 = vadd.f32 %v3224, %v3300
  %3302 = vmatmul.f32.gmra.mxu0 %v2697
  %v3303 = vpop.f32.mrf.mxu0
  %v3304 = vadd.f32 %v3227, %v3303
  %3305 = vmatmul.f32.gmra.mxu0 %v2702
  %v3306 = vpop.f32.mrf.mxu0
  %v3307 = vadd.f32 %v3230, %v3306
  %3308 = vmatmul.f32.gmra.mxu0 %v2703
  %v3309 = vpop.f32.mrf.mxu0
  %v3310 = vadd.f32 %v3233, %v3309
  %3311 = vmatmul.f32.gmra.mxu0 %v2704
  %v3312 = vpop.f32.mrf.mxu0
  %v3313 = vadd.f32 %v3236, %v3312
  %3314 = vmatmul.f32.gmra.mxu0 %v2705
  %v3315 = vpop.f32.mrf.mxu0
  %v3316 = vadd.f32 %v3239, %v3315
  %3317 = vmatmul.f32.gmra.mxu0 %v2706
  %v3318 = vpop.f32.mrf.mxu0
  %v3319 = vadd.f32 %v3242, %v3318
  %3320 = vmatmul.f32.gmra.mxu0 %v2707
  %v3321 = vpop.f32.mrf.mxu0
  %v3322 = vadd.f32 %v3245, %v3321
  %3323 = vmatmul.f32.gmra.mxu0 %v2708
  %v3324 = vpop.f32.mrf.mxu0
  %v3325 = vadd.f32 %v3248, %v3324
  %3326 = vmatmul.f32.gmra.mxu0 %v2709
  %v3327 = vpop.f32.mrf.mxu0
  %v3328 = vadd.f32 %v3251, %v3327
  %3329 = vmatmul.f32.gmra.mxu0 %v2710
  %v3330 = vpop.f32.mrf.mxu0
  %v3331 = vadd.f32 %v3254, %v3330
  %3332 = vmatmul.f32.gmra.mxu0 %v2711
  %v3333 = vpop.f32.mrf.mxu0
  %v3334 = vadd.f32 %v3257, %v3333
  %3335 = vdwg.mxu0
  %3336 = vmatpush.msra.mxu0 %v285
  %3337 = vmatpush.msra.mxu0 %v283
  %3338 = vmatpush.msra.mxu0 %v281
  %3339 = vmatpush.msra.mxu0 %v279
  %3340 = vmatpush.msra.mxu0 %v277
  %3341 = vmatpush.msra.mxu0 %v275
  %3342 = vmatpush.msra.mxu0 %v273
  %3343 = vmatpush.msra.mxu0 %v271
  %3344 = vmatpush.msra.mxu0 %v269
  %3345 = vmatpush.msra.mxu0 %v267
  %3346 = vmatpush.msra.mxu0 %v265
  %3347 = vmatpush.msra.mxu0 %v263
  %3348 = vmatpush.msra.mxu0 %v261
  %3349 = vmatpush.msra.mxu0 %v259
  %3350 = vmatpush.msra.mxu0 %v257
  %3351 = vmatpush.msra.mxu0 %v255
  %3352 = vmatmul.f32.gmra.mxu0 %v2702
  %v3353 = vpop.f32.mrf.mxu0
  %v3354 = vadd.f32 %v3277, %v3353
  %3355 = vmatmul.f32.gmra.mxu0 %v2703
  %v3356 = vpop.f32.mrf.mxu0
  %v3357 = vadd.f32 %v3280, %v3356
  %3358 = vmatmul.f32.gmra.mxu0 %v2704
  %v3359 = vpop.f32.mrf.mxu0
  %v3360 = vadd.f32 %v3283, %v3359
  %3361 = vmatmul.f32.gmra.mxu0 %v2705
  %v3362 = vpop.f32.mrf.mxu0
  %v3363 = vadd.f32 %v3286, %v3362
  %3364 = vmatmul.f32.gmra.mxu0 %v2706
  %v3365 = vpop.f32.mrf.mxu0
  %v3366 = vadd.f32 %v3289, %v3365
  %3367 = vmatmul.f32.gmra.mxu0 %v2707
  %v3368 = vpop.f32.mrf.mxu0
  %v3369 = vadd.f32 %v3292, %v3368
  %3370 = vmatmul.f32.gmra.mxu0 %v2708
  %v3371 = vpop.f32.mrf.mxu0
  %v3372 = vadd.f32 %v3295, %v3371
  %3373 = vmatmul.f32.gmra.mxu0 %v2709
  %v3374 = vpop.f32.mrf.mxu0
  %v3375 = vadd.f32 %v3298, %v3374
  %3376 = vmatmul.f32.gmra.mxu0 %v2710
  %v3377 = vpop.f32.mrf.mxu0
  %v3378 = vadd.f32 %v3301, %v3377
  %3379 = vmatmul.f32.gmra.mxu0 %v2711
  %v3380 = vpop.f32.mrf.mxu0
  %v3381 = vadd.f32 %v3304, %v3380
  %3382 = vmatmul.f32.gmra.mxu0 %v2690
  %v3383 = vpop.f32.mrf.mxu0
  %v3384 = vadd.f32 %v3307, %v3383
  %3385 = vmatmul.f32.gmra.mxu0 %v2691
  %v3386 = vpop.f32.mrf.mxu0
  %v3387 = vadd.f32 %v3310, %v3386
  %3388 = vmatmul.f32.gmra.mxu0 %v2692
  %v3389 = vpop.f32.mrf.mxu0
  %v3390 = vadd.f32 %v3313, %v3389
  %3391 = vmatmul.f32.gmra.mxu0 %v2693
  %v3392 = vpop.f32.mrf.mxu0
  %v3393 = vadd.f32 %v3316, %v3392
  %3394 = vmatmul.f32.gmra.mxu0 %v2694
  %v3395 = vpop.f32.mrf.mxu0
  %v3396 = vadd.f32 %v3319, %v3395
  %3397 = vmatmul.f32.gmra.mxu0 %v2695
  %v3398 = vpop.f32.mrf.mxu0
  %v3399 = vadd.f32 %v3322, %v3398
  %3400 = vmatmul.f32.gmra.mxu0 %v2696
  %v3401 = vpop.f32.mrf.mxu0
  %v3402 = vadd.f32 %v3325, %v3401
  %3403 = vmatmul.f32.gmra.mxu0 %v2697
  %v3404 = vpop.f32.mrf.mxu0
  %v3405 = vadd.f32 %v3328, %v3404
  %3406 = vmatmul.f32.gmra.mxu0 %v2698
  %v3407 = vpop.f32.mrf.mxu0
  %v3408 = vadd.f32 %v3331, %v3407
  %3409 = vmatmul.f32.gmra.mxu0 %v2699
  %v3410 = vpop.f32.mrf.mxu0
  %v3411 = vadd.f32 %v3334, %v3410
  %3412 = vdwg.mxu0
  %3413 = vmatpush.msra.mxu0 %v317
  %3414 = vmatpush.msra.mxu0 %v315
  %3415 = vmatpush.msra.mxu0 %v313
  %3416 = vmatpush.msra.mxu0 %v311
  %3417 = vmatpush.msra.mxu0 %v309
  %3418 = vmatpush.msra.mxu0 %v307
  %3419 = vmatpush.msra.mxu0 %v305
  %3420 = vmatpush.msra.mxu0 %v303
  %3421 = vmatpush.msra.mxu0 %v301
  %3422 = vmatpush.msra.mxu0 %v299
  %3423 = vmatpush.msra.mxu0 %v297
  %3424 = vmatpush.msra.mxu0 %v295
  %3425 = vmatpush.msra.mxu0 %v293
  %3426 = vmatpush.msra.mxu0 %v291
  %3427 = vmatpush.msra.mxu0 %v289
  %3428 = vmatpush.msra.mxu0 %v287
  %3429 = vmatmul.f32.gmra.mxu0 %v2690
  %v3430 = vpop.f32.mrf.mxu0
  %v3431 = vadd.f32 %v3354, %v3430
  %3432 = vmatmul.f32.gmra.mxu0 %v2691
  %v3433 = vpop.f32.mrf.mxu0
  %v3434 = vadd.f32 %v3357, %v3433
  %3435 = vmatmul.f32.gmra.mxu0 %v2692
  %v3436 = vpop.f32.mrf.mxu0
  %v3437 = vadd.f32 %v3360, %v3436
  %3438 = vmatmul.f32.gmra.mxu0 %v2693
  %v3439 = vpop.f32.mrf.mxu0
  %v3440 = vadd.f32 %v3363, %v3439
  %3441 = vmatmul.f32.gmra.mxu0 %v2694
  %v3442 = vpop.f32.mrf.mxu0
  %v3443 = vadd.f32 %v3366, %v3442
  %3444 = vmatmul.f32.gmra.mxu0 %v2695
  %v3445 = vpop.f32.mrf.mxu0
  %v3446 = vadd.f32 %v3369, %v3445
  %3447 = vmatmul.f32.gmra.mxu0 %v2696
  %v3448 = vpop.f32.mrf.mxu0
  %v3449 = vadd.f32 %v3372, %v3448
  %3450 = vmatmul.f32.gmra.mxu0 %v2697
  %v3451 = vpop.f32.mrf.mxu0
  %v3452 = vadd.f32 %v3375, %v3451
  %3453 = vmatmul.f32.gmra.mxu0 %v2698
  %v3454 = vpop.f32.mrf.mxu0
  %v3455 = vadd.f32 %v3378, %v3454
  %3456 = vmatmul.f32.gmra.mxu0 %v2699
  %v3457 = vpop.f32.mrf.mxu0
  %v3458 = vadd.f32 %v3381, %v3457
  %3459 = vmatmul.f32.gmra.mxu0 %v2704
  %v3460 = vpop.f32.mrf.mxu0
  %v3461 = vadd.f32 %v3384, %v3460
  %3462 = vmatmul.f32.gmra.mxu0 %v2705
  %v3463 = vpop.f32.mrf.mxu0
  %v3464 = vadd.f32 %v3387, %v3463
  %3465 = vmatmul.f32.gmra.mxu0 %v2706
  %v3466 = vpop.f32.mrf.mxu0
  %v3467 = vadd.f32 %v3390, %v3466
  %3468 = vmatmul.f32.gmra.mxu0 %v2707
  %v3469 = vpop.f32.mrf.mxu0
  %v3470 = vadd.f32 %v3393, %v3469
  %3471 = vmatmul.f32.gmra.mxu0 %v2708
  %v3472 = vpop.f32.mrf.mxu0
  %v3473 = vadd.f32 %v3396, %v3472
  %3474 = vmatmul.f32.gmra.mxu0 %v2709
  %v3475 = vpop.f32.mrf.mxu0
  %v3476 = vadd.f32 %v3399, %v3475
  %3477 = vmatmul.f32.gmra.mxu0 %v2710
  %v3478 = vpop.f32.mrf.mxu0
  %v3479 = vadd.f32 %v3402, %v3478
  %3480 = vmatmul.f32.gmra.mxu0 %v2711
  %v3481 = vpop.f32.mrf.mxu0
  %v3482 = vadd.f32 %v3405, %v3481
  %3483 = vmatmul.f32.gmra.mxu0 %v2712
  %v3484 = vpop.f32.mrf.mxu0
  %v3485 = vadd.f32 %v3408, %v3484
  %3486 = vmatmul.f32.gmra.mxu0 %v2713
  %v3487 = vpop.f32.mrf.mxu0
  %v3488 = vadd.f32 %v3411, %v3487
  %3489 = vdwg.mxu0
  %v3490 = vmax.f32 %v3046, 0.0
  %v3491 = vmax.f32 %v3431, 0.0
  %v3492 = vmax.f32 %v3049, 0.0
  %v3493 = vmax.f32 %v3434, 0.0
  %v3494 = vmax.f32 %v3052, 0.0
  %v3495 = vmax.f32 %v3437, 0.0
  %v3496 = vmax.f32 %v3055, 0.0
  %v3497 = vmax.f32 %v3440, 0.0
  %v3498 = vmax.f32 %v3058, 0.0
  %v3499 = vmax.f32 %v3443, 0.0
  %v3500 = vmax.f32 %v3061, 0.0
  %v3501 = vmax.f32 %v3446, 0.0
  %v3502 = vmax.f32 %v3064, 0.0
  %v3503 = vmax.f32 %v3449, 0.0
  %v3504 = vmax.f32 %v3067, 0.0
  %v3505 = vmax.f32 %v3452, 0.0
  %v3506 = vmax.f32 %v3070, 0.0
  %v3507 = vmax.f32 %v3455, 0.0
  %v3508 = vmax.f32 %v3073, 0.0
  %v3509 = vmax.f32 %v3458, 0.0
  %v3510 = vmax.f32 %v3076, 0.0
  %v3511 = vmax.f32 %v3461, 0.0
  %v3512 = vmax.f32 %v3079, 0.0
  %v3513 = vmax.f32 %v3464, 0.0
  %v3514 = vmax.f32 %v3082, 0.0
  %v3515 = vmax.f32 %v3467, 0.0
  %v3516 = vmax.f32 %v3085, 0.0
  %v3517 = vmax.f32 %v3470, 0.0
  %v3518 = vmax.f32 %v3088, 0.0
  %v3519 = vmax.f32 %v3473, 0.0
  %v3520 = vmax.f32 %v3091, 0.0
  %v3521 = vmax.f32 %v3476, 0.0
  %v3522 = vmax.f32 %v3094, 0.0
  %v3523 = vmax.f32 %v3479, 0.0
  %v3524 = vmax.f32 %v3097, 0.0
  %v3525 = vmax.f32 %v3482, 0.0
  %v3526 = vmax.f32 %v3100, 0.0
  %v3527 = vmax.f32 %v3485, 0.0
  %v3528 = vmax.f32 %v3103, 0.0
  %v3529 = vmax.f32 %v3488, 0.0
  %v3530 = vmax.f32 %v3490, %v3491
  %v3531 = vmax.f32 %v3492, %v3493
  %v3532 = vmax.f32 %v3494, %v3495
  %v3533 = vmax.f32 %v3496, %v3497
  %v3534 = vmax.f32 %v3498, %v3499
  %v3535 = vmax.f32 %v3500, %v3501
  %v3536 = vmax.f32 %v3502, %v3503
  %v3537 = vmax.f32 %v3504, %v3505
  %v3538 = vmax.f32 %v3506, %v3507
  %v3539 = vmax.f32 %v3508, %v3509
  %v3540 = vmax.f32 %v3510, %v3511
  %v3541 = vmax.f32 %v3512, %v3513
  %v3542 = vmax.f32 %v3514, %v3515
  %v3543 = vmax.f32 %v3516, %v3517
  %v3544 = vmax.f32 %v3518, %v3519
  %v3545 = vmax.f32 %v3520, %v3521
  %v3546 = vmax.f32 %v3522, %v3523
  %v3547 = vmax.f32 %v3524, %v3525
  %v3548 = vmax.f32 %v3526, %v3527
  %v3549 = vmax.f32 %v3528, %v3529
  %v3550 = vmax.f32 %v3530, %v3540
  %v3551 = vmax.f32 %v3531, %v3541
  %v3552 = vmax.f32 %v3532, %v3542
  %v3553 = vmax.f32 %v3533, %v3543
  %v3554 = vmax.f32 %v3534, %v3544
  %v3555 = vmax.f32 %v3535, %v3545
  %v3556 = vmax.f32 %v3536, %v3546
  %v3557 = vmax.f32 %v3537, %v3547
  %v3558 = vmax.f32 %v3538, %v3548
  %v3559 = vmax.f32 %v3539, %v3549
  %v3560 = vld [vmem:[%s5] sm:$0xff]
  %v3561 = vld [vmem:[%s5 + $0x8] sm:$0xff]
  %v3562 = vld [vmem:[%s5 + $0x10] sm:$0xff]
  %v3563 = vld [vmem:[%s5 + $0x18] sm:$0xff]
  %v3564 = vld [vmem:[%s5 + $0x20] sm:$0xff]
  %v3565 = vld [vmem:[%s5 + $0x28] sm:$0xff]
  %v3566 = vld [vmem:[%s5 + $0x30] sm:$0xff]
  %v3567 = vld [vmem:[%s5 + $0x38] sm:$0xff]
  %v3568 = vld [vmem:[%s5 + $0x40] sm:$0xff]
  %v3569 = vld [vmem:[%s5 + $0x48] sm:$0xff]
  %v3570 = vld [vmem:[%s5 + $0x50] sm:$0xff]
  %v3571 = vld [vmem:[%s5 + $0x58] sm:$0xff]
  %v3572 = vld [vmem:[%s5 + $0x60] sm:$0xff]
  %v3573 = vld [vmem:[%s5 + $0x68] sm:$0xff]
  %v3574 = vld [vmem:[%s5 + $0x70] sm:$0xff]
  %v3575 = vld [vmem:[%s5 + $0x78] sm:$0xff]
  %s3576 = scalar_lea.vmem %s5, 128
  %v3577 = vld [vmem:[%s3576] sm:$0xff]
  %v3578 = vld [vmem:[%s3576 + $0x8] sm:$0xff]
  %v3579 = vld [vmem:[%s3576 + $0x10] sm:$0xff]
  %v3580 = vld [vmem:[%s3576 + $0x18] sm:$0xff]
  %v3581 = vld [vmem:[%s3576 + $0x20] sm:$0xff]
  %v3582 = vld [vmem:[%s3576 + $0x28] sm:$0xff]
  %v3583 = vld [vmem:[%s3576 + $0x30] sm:$0xff]
  %v3584 = vld [vmem:[%s3576 + $0x38] sm:$0xff]
  %v3585 = vld [vmem:[%s3576 + $0x40] sm:$0xff]
  %v3586 = vld [vmem:[%s3576 + $0x48] sm:$0xff]
  %v3587 = vld [vmem:[%s3576 + $0x50] sm:$0xff]
  %v3588 = vld [vmem:[%s3576 + $0x58] sm:$0xff]
  %v3589 = vld [vmem:[%s3576 + $0x60] sm:$0xff]
  %v3590 = vld [vmem:[%s3576 + $0x68] sm:$0xff]
  %v3591 = vld [vmem:[%s3576 + $0x70] sm:$0xff]
  %v3592 = vld [vmem:[%s3576 + $0x78] sm:$0xff]
  %3593 = vmatpush.msra.mxu0 %v3592
  %3594 = vmatpush.msra.mxu0 %v3591
  %3595 = vmatpush.msra.mxu0 %v3590
  %3596 = vmatpush.msra.mxu0 %v3589
  %3597 = vmatpush.msra.mxu0 %v3588
  %3598 = vmatpush.msra.mxu0 %v3587
  %3599 = vmatpush.msra.mxu0 %v3586
  %3600 = vmatpush.msra.mxu0 %v3585
  %3601 = vmatpush.msra.mxu0 %v3584
  %3602 = vmatpush.msra.mxu0 %v3583
  %3603 = vmatpush.msra.mxu0 %v3582
  %3604 = vmatpush.msra.mxu0 %v3581
  %3605 = vmatpush.msra.mxu0 %v3580
  %3606 = vmatpush.msra.mxu0 %v3579
  %3607 = vmatpush.msra.mxu0 %v3578
  %3608 = vmatpush.msra.mxu0 %v3577
  %3609 = vmatmul.f32.gmra.mxu0 %v3552
  %v3610 = vpop.f32.mrf.mxu0
  %v3611 = vadd.f32 0.0, %v3610
  %3612 = vmatmul.f32.gmra.mxu0 %v3553
  %v3613 = vpop.f32.mrf.mxu0
  %v3614 = vadd.f32 0.0, %v3613
  %3615 = vdwg.mxu0
  %3616 = vmatpush.msra.mxu0 %v3575
  %3617 = vmatpush.msra.mxu0 %v3574
  %3618 = vmatpush.msra.mxu0 %v3573
  %3619 = vmatpush.msra.mxu0 %v3572
  %3620 = vmatpush.msra.mxu0 %v3571
  %3621 = vmatpush.msra.mxu0 %v3570
  %3622 = vmatpush.msra.mxu0 %v3569
  %3623 = vmatpush.msra.mxu0 %v3568
  %3624 = vmatpush.msra.mxu0 %v3567
  %3625 = vmatpush.msra.mxu0 %v3566
  %3626 = vmatpush.msra.mxu0 %v3565
  %3627 = vmatpush.msra.mxu0 %v3564
  %3628 = vmatpush.msra.mxu0 %v3563
  %3629 = vmatpush.msra.mxu0 %v3562
  %3630 = vmatpush.msra.mxu0 %v3561
  %3631 = vmatpush.msra.mxu0 %v3560
  %3632 = vmatmul.f32.gmra.mxu0 %v3550
  %v3633 = vpop.f32.mrf.mxu0
  %v3634 = vadd.f32 %v3611, %v3633
  %3635 = vmatmul.f32.gmra.mxu0 %v3551
  %v3636 = vpop.f32.mrf.mxu0
  %v3637 = vadd.f32 %v3614, %v3636
  %3638 = vdwg.mxu0
  %s3639 = scalar_lea.vmem %s5, 256
  %v3640 = vld [vmem:[%s3639] sm:$0xff]
  %v3641 = vld [vmem:[%s3639 + $0x8] sm:$0xff]
  %v3642 = vld [vmem:[%s3639 + $0x10] sm:$0xff]
  %v3643 = vld [vmem:[%s3639 + $0x18] sm:$0xff]
  %v3644 = vld [vmem:[%s3639 + $0x20] sm:$0xff]
  %v3645 = vld [vmem:[%s3639 + $0x28] sm:$0xff]
  %v3646 = vld [vmem:[%s3639 + $0x30] sm:$0xff]
  %v3647 = vld [vmem:[%s3639 + $0x38] sm:$0xff]
  %v3648 = vld [vmem:[%s3639 + $0x40] sm:$0xff]
  %v3649 = vld [vmem:[%s3639 + $0x48] sm:$0xff]
  %v3650 = vld [vmem:[%s3639 + $0x50] sm:$0xff]
  %v3651 = vld [vmem:[%s3639 + $0x58] sm:$0xff]
  %v3652 = vld [vmem:[%s3639 + $0x60] sm:$0xff]
  %v3653 = vld [vmem:[%s3639 + $0x68] sm:$0xff]
  %v3654 = vld [vmem:[%s3639 + $0x70] sm:$0xff]
  %v3655 = vld [vmem:[%s3639 + $0x78] sm:$0xff]
  %3656 = vmatpush.msra.mxu0 %v3655
  %3657 = vmatpush.msra.mxu0 %v3654
  %3658 = vmatpush.msra.mxu0 %v3653
  %3659 = vmatpush.msra.mxu0 %v3652
  %3660 = vmatpush.msra.mxu0 %v3651
  %3661 = vmatpush.msra.mxu0 %v3650
  %3662 = vmatpush.msra.mxu0 %v3649
  %3663 = vmatpush.msra.mxu0 %v3648
  %3664 = vmatpush.msra.mxu0 %v3647
  %3665 = vmatpush.msra.mxu0 %v3646
  %3666 = vmatpush.msra.mxu0 %v3645
  %3667 = vmatpush.msra.mxu0 %v3644
  %3668 = vmatpush.msra.mxu0 %v3643
  %3669 = vmatpush.msra.mxu0 %v3642
  %3670 = vmatpush.msra.mxu0 %v3641
  %3671 = vmatpush.msra.mxu0 %v3640
  %3672 = vmatmul.f32.gmra.mxu0 %v3554
  %v3673 = vpop.f32.mrf.mxu0
  %v3674 = vadd.f32 0.0, %v3673
  %3675 = vmatmul.f32.gmra.mxu0 %v3555
  %v3676 = vpop.f32.mrf.mxu0
  %v3677 = vadd.f32 0.0, %v3676
  %3678 = vdwg.mxu0
  %v3679 = vadd.f32 %v3634, %v3674
  %v3680 = vadd.f32 %v3637, %v3677
  %s3681 = scalar_lea.vmem %s5, 384
  %v3682 = vld [vmem:[%s3681] sm:$0xff]
  %v3683 = vld [vmem:[%s3681 + $0x8] sm:$0xff]
  %v3684 = vld [vmem:[%s3681 + $0x10] sm:$0xff]
  %v3685 = vld [vmem:[%s3681 + $0x18] sm:$0xff]
  %v3686 = vld [vmem:[%s3681 + $0x20] sm:$0xff]
  %v3687 = vld [vmem:[%s3681 + $0x28] sm:$0xff]
  %v3688 = vld [vmem:[%s3681 + $0x30] sm:$0xff]
  %v3689 = vld [vmem:[%s3681 + $0x38] sm:$0xff]
  %v3690 = vld [vmem:[%s3681 + $0x40] sm:$0xff]
  %v3691 = vld [vmem:[%s3681 + $0x48] sm:$0xff]
  %v3692 = vld [vmem:[%s3681 + $0x50] sm:$0xff]
  %v3693 = vld [vmem:[%s3681 + $0x58] sm:$0xff]
  %v3694 = vld [vmem:[%s3681 + $0x60] sm:$0xff]
  %v3695 = vld [vmem:[%s3681 + $0x68] sm:$0xff]
  %v3696 = vld [vmem:[%s3681 + $0x70] sm:$0xff]
  %v3697 = vld [vmem:[%s3681 + $0x78] sm:$0xff]
  %3698 = vmatpush.msra.mxu0 %v3697
  %3699 = vmatpush.msra.mxu0 %v3696
  %3700 = vmatpush.msra.mxu0 %v3695
  %3701 = vmatpush.msra.mxu0 %v3694
  %3702 = vmatpush.msra.mxu0 %v3693
  %3703 = vmatpush.msra.mxu0 %v3692
  %3704 = vmatpush.msra.mxu0 %v3691
  %3705 = vmatpush.msra.mxu0 %v3690
  %3706 = vmatpush.msra.mxu0 %v3689
  %3707 = vmatpush.msra.mxu0 %v3688
  %3708 = vmatpush.msra.mxu0 %v3687
  %3709 = vmatpush.msra.mxu0 %v3686
  %3710 = vmatpush.msra.mxu0 %v3685
  %3711 = vmatpush.msra.mxu0 %v3684
  %3712 = vmatpush.msra.mxu0 %v3683
  %3713 = vmatpush.msra.mxu0 %v3682
  %3714 = vmatmul.f32.gmra.mxu0 %v3556
  %v3715 = vpop.f32.mrf.mxu0
  %v3716 = vadd.f32 0.0, %v3715
  %3717 = vmatmul.f32.gmra.mxu0 %v3557
  %v3718 = vpop.f32.mrf.mxu0
  %v3719 = vadd.f32 0.0, %v3718
  %3720 = vdwg.mxu0
  %v3721 = vadd.f32 %v3679, %v3716
  %v3722 = vadd.f32 %v3680, %v3719
  %s3723 = scalar_lea.vmem %s5, 512
  %v3724 = vld [vmem:[%s3723] sm:$0xff]
  %v3725 = vld [vmem:[%s3723 + $0x8] sm:$0xff]
  %v3726 = vld [vmem:[%s3723 + $0x10] sm:$0xff]
  %v3727 = vld [vmem:[%s3723 + $0x18] sm:$0xff]
  %v3728 = vld [vmem:[%s3723 + $0x20] sm:$0xff]
  %v3729 = vld [vmem:[%s3723 + $0x28] sm:$0xff]
  %v3730 = vld [vmem:[%s3723 + $0x30] sm:$0xff]
  %v3731 = vld [vmem:[%s3723 + $0x38] sm:$0xff]
  %v3732 = vld [vmem:[%s3723 + $0x40] sm:$0xff]
  %v3733 = vld [vmem:[%s3723 + $0x48] sm:$0xff]
  %v3734 = vld [vmem:[%s3723 + $0x50] sm:$0xff]
  %v3735 = vld [vmem:[%s3723 + $0x58] sm:$0xff]
  %v3736 = vld [vmem:[%s3723 + $0x60] sm:$0xff]
  %v3737 = vld [vmem:[%s3723 + $0x68] sm:$0xff]
  %v3738 = vld [vmem:[%s3723 + $0x70] sm:$0xff]
  %v3739 = vld [vmem:[%s3723 + $0x78] sm:$0xff]
  %3740 = vmatpush.msra.mxu0 %v3739
  %3741 = vmatpush.msra.mxu0 %v3738
  %3742 = vmatpush.msra.mxu0 %v3737
  %3743 = vmatpush.msra.mxu0 %v3736
  %3744 = vmatpush.msra.mxu0 %v3735
  %3745 = vmatpush.msra.mxu0 %v3734
  %3746 = vmatpush.msra.mxu0 %v3733
  %3747 = vmatpush.msra.mxu0 %v3732
  %3748 = vmatpush.msra.mxu0 %v3731
  %3749 = vmatpush.msra.mxu0 %v3730
  %3750 = vmatpush.msra.mxu0 %v3729
  %3751 = vmatpush.msra.mxu0 %v3728
  %3752 = vmatpush.msra.mxu0 %v3727
  %3753 = vmatpush.msra.mxu0 %v3726
  %3754 = vmatpush.msra.mxu0 %v3725
  %3755 = vmatpush.msra.mxu0 %v3724
  %3756 = vmatmul.f32.gmra.mxu0 %v3558
  %v3757 = vpop.f32.mrf.mxu0
  %v3758 = vadd.f32 0.0, %v3757
  %3759 = vmatmul.f32.gmra.mxu0 %v3559
  %v3760 = vpop.f32.mrf.mxu0
  %v3761 = vadd.f32 0.0, %v3760
  %3762 = vdwg.mxu0
  %v3763 = vadd.f32 %v3721, %v3758
  %v3764 = vadd.f32 %v3722, %v3761
  %v3765 = vld [vmem:[%s6] sm:$0x1]
  %v3767 = vperm.slane %v3765, 0
  %v3769 = vadd.f32 %v3763, %v3767
  %v3770 = vadd.f32 %v3764, %v3767
  %v3771 = vmax.f32 %v3769, 0.0
  %v3772 = vmax.f32 %v3770, 0.0
  %v3773 = vld [vmem:[%s7] sm:$0xff]
  %v3774 = vld [vmem:[%s7 + $0x8] sm:$0xff]
  %v3775 = vld [vmem:[%s7 + $0x10] sm:$0xff]
  %v3776 = vld [vmem:[%s7 + $0x18] sm:$0xff]
  %v3777 = vld [vmem:[%s7 + $0x20] sm:$0xff]
  %v3778 = vld [vmem:[%s7 + $0x28] sm:$0xff]
  %v3779 = vld [vmem:[%s7 + $0x30] sm:$0xff]
  %v3780 = vld [vmem:[%s7 + $0x38] sm:$0xff]
  %v3781 = vld [vmem:[%s7 + $0x40] sm:$0xff]
  %v3782 = vld [vmem:[%s7 + $0x48] sm:$0xff]
  %v3783 = vld [vmem:[%s7 + $0x50] sm:$0xff]
  %v3784 = vld [vmem:[%s7 + $0x58] sm:$0xff]
  %v3785 = vld [vmem:[%s7 + $0x60] sm:$0xff]
  %v3786 = vld [vmem:[%s7 + $0x68] sm:$0xff]
  %v3787 = vld [vmem:[%s7 + $0x70] sm:$0xff]
  %v3788 = vld [vmem:[%s7 + $0x78] sm:$0xff]
  %v3789 = vld [vmem:[%s8] sm:$0x1]
  %v3791 = vperm.slane %v3789, 0
  %3793 = vmatpush.msra.mxu0 %v3788
  %3794 = vmatpush.msra.mxu0 %v3787
  %3795 = vmatpush.msra.mxu0 %v3786
  %3796 = vmatpush.msra.mxu0 %v3785
  %3797 = vmatpush.msra.mxu0 %v3784
  %3798 = vmatpush.msra.mxu0 %v3783
  %3799 = vmatpush.msra.mxu0 %v3782
  %3800 = vmatpush.msra.mxu0 %v3781
  %3801 = vmatpush.msra.mxu0 %v3780
  %3802 = vmatpush.msra.mxu0 %v3779
  %3803 = vmatpush.msra.mxu0 %v3778
  %3804 = vmatpush.msra.mxu0 %v3777
  %3805 = vmatpush.msra.mxu0 %v3776
  %3806 = vmatpush.msra.mxu0 %v3775
  %3807 = vmatpush.msra.mxu0 %v3774
  %3808 = vmatpush.msra.mxu0 %v3773
  %3809 = vmatmul.f32.gmra.mxu0 %v3771
  %v3810 = vpop.f32.mrf.mxu0
  %v3811 = vadd.f32 %v3791, %v3810
  %3812 = vmatmul.f32.gmra.mxu0 %v3772
  %v3813 = vpop.f32.mrf.mxu0
  %v3814 = vadd.f32 %v3791, %v3813
  %3815 = vdwg.mxu0
  %v3816 = vmax.f32 %v3811, 0.0
  %v3817 = vmax.f32 %v3814, 0.0
  %v3818 = vld [vmem:[%s9] sm:$0xff]
  %v3819 = vld [vmem:[%s9 + $0x8] sm:$0xff]
  %v3820 = vld [vmem:[%s9 + $0x10] sm:$0xff]
  %v3821 = vld [vmem:[%s9 + $0x18] sm:$0xff]
  %v3822 = vld [vmem:[%s9 + $0x20] sm:$0xff]
  %v3823 = vld [vmem:[%s9 + $0x28] sm:$0xff]
  %v3824 = vld [vmem:[%s9 + $0x30] sm:$0xff]
  %v3825 = vld [vmem:[%s9 + $0x38] sm:$0xff]
  %v3826 = vld [vmem:[%s9 + $0x40] sm:$0xff]
  %v3827 = vld [vmem:[%s9 + $0x48] sm:$0xff]
  %v3828 = vld [vmem:[%s9 + $0x50] sm:$0xff]
  %v3829 = vld [vmem:[%s9 + $0x58] sm:$0xff]
  %v3830 = vld [vmem:[%s9 + $0x60] sm:$0xff]
  %v3831 = vld [vmem:[%s9 + $0x68] sm:$0xff]
  %v3832 = vld [vmem:[%s9 + $0x70] sm:$0xff]
  %v3833 = vld [vmem:[%s9 + $0x78] sm:$0xff]
  %v3834 = vld [vmem:[%s10] sm:$0x1]
  %v3836 = vperm.slane %v3834, 0
  %3838 = vmatpush.msra.mxu0 %v3833
  %3839 = vmatpush.msra.mxu0 %v3832
  %3840 = vmatpush.msra.mxu0 %v3831
  %3841 = vmatpush.msra.mxu0 %v3830
  %3842 = vmatpush.msra.mxu0 %v3829
  %3843 = vmatpush.msra.mxu0 %v3828
  %3844 = vmatpush.msra.mxu0 %v3827
  %3845 = vmatpush.msra.mxu0 %v3826
  %3846 = vmatpush.msra.mxu0 %v3825
  %3847 = vmatpush.msra.mxu0 %v3824
  %3848 = vmatpush.msra.mxu0 %v3823
  %3849 = vmatpush.msra.mxu0 %v3822
  %3850 = vmatpush.msra.mxu0 %v3821
  %3851 = vmatpush.msra.mxu0 %v3820
  %3852 = vmatpush.msra.mxu0 %v3819
  %3853 = vmatpush.msra.mxu0 %v3818
  %3854 = vmatmul.f32.gmra.mxu0 %v3816
  %v3855 = vpop.f32.mrf.mxu0
  %v3856 = vadd.f32 %v3836, %v3855
  %3857 = vmatmul.f32.gmra.mxu0 %v3817
  %v3858 = vpop.f32.mrf.mxu0
  %v3859 = vadd.f32 %v3836, %v3858
  %3860 = vdwg.mxu0
  %vm3861 = vcmask 80896
  %3862 = vst.msk [vmem:[%s11] sm:$0xff] %vm3861, %v3856
  %3863 = vst.msk [vmem:[%s11 + $0x8] sm:$0xff] %vm3861, %v3859
  // Predicated region
  $region46: #{lenet_forward.1} parent=0 // pred_check
    _
  $region47: #{lenet_forward.1} parent=0 // pred_check_branch
    %3865 = sbr.rel (0) target = $region49
  $region48: #{lenet_forward.1} parent=0 // pred_region
    _
  $region49: #{lenet_forward.1} parent=0 // pred_fallthru
    _
  // Predicated region
  $region50: #{lenet_forward.1} parent=0 // pred_check
    _
  $region51: #{lenet_forward.1} parent=0 // pred_check_branch
    %3867 = sbr.rel (0) target = $region53
  $region52: #{lenet_forward.1} parent=0 // pred_region
    _
  $region53: #{lenet_forward.1} parent=0 // pred_fallthru
    _

</llo_original>
